<compile_context>
chip_gen: v5e
topology: v5e:2x2
jax: 0.10.0
libtpu: 0.0.40
codegen_flags: <defaults>
</compile_context>

<pallas_src>
import functools
import math

import jax
import jax.numpy as jnp
import numpy as np
from jax.experimental import pallas as pl
from jax.experimental.pallas import tpu as pltpu

_BN_EPS = 1e-5
_INV_SQRT2 = 0.7071067811865476

_DEFAULT_TL = 512                       # rows per L-tile (stride-1 in-kernel-tap path)
_DEFAULT_TM = 1024                      # rows per M-tile (strided im2col path)
_VMEM_LIMIT_BYTES = 48 * 1024 * 1024
_S1_RESIDENT_BUDGET = 24 * 1024 * 1024  # per-batch resident input budget (bf16, 2 bufs)


def _round_up(x, m):
    return (x + m - 1) // m * m


def _cdiv(a, b):
    return (a + b - 1) // b


def _cparams(sem):
    return pltpu.CompilerParams(dimension_semantics=sem,
                                vmem_limit_bytes=_VMEM_LIMIT_BYTES)


def _gelu_exact(v):
    return 0.5 * v * (1.0 + jax.lax.erf(v * _INV_SQRT2))


def _tile_bn_partials(acc, mask, nvalid):
    """Mean-shifted per-tile BN partials: (sum, sum((x - tile_mean)^2))."""
    vals = acc if mask is None else jnp.where(mask, acc, 0.0)
    psum = jnp.sum(vals, axis=0, keepdims=True)
    tile_mean = psum / nvalid
    d = vals - tile_mean
    if mask is not None:
        d = jnp.where(mask, d, 0.0)
    m2 = jnp.sum(d * d, axis=0, keepdims=True)
    return psum, m2


def _bn_scale_shift(psums, m2s, counts, n_total, gamma, beta, cp):
    """Combine per-tile partials (parallel-variance form) -> fused BN scale & shift."""
    mean = jnp.sum(psums, axis=0) / n_total
    tile_mean = psums / counts[:, None]
    var = (jnp.sum(m2s, axis=0)
           + jnp.sum(counts[:, None] * (tile_mean - mean[None, :]) ** 2, axis=0))
    var = jnp.maximum(var / n_total, 0.0)             # biased (train-mode) variance
    g = jnp.pad(gamma.astype(jnp.float32), (0, cp - gamma.shape[0]))
    b = jnp.pad(beta.astype(jnp.float32), (0, cp - beta.shape[0]))
    scale = g * jax.lax.rsqrt(var + _BN_EPS)
    shift = b - mean * scale
    return scale.reshape(1, cp), shift.reshape(1, cp)


# ---------------------------------------------------------------------------
# Stride-1 path: in-kernel K-tap conv from a per-batch resident window
# ---------------------------------------------------------------------------
def _make_s1_conv_kernel(ksize, tl, l_real, apply_bn, mask_needed, zero_tail):
    win_rows = _round_up(tl + ksize - 1, 8)

    def kernel(x_ref, w_ref, b_ref, *outs):
        if apply_bn:
            y_ref, st_ref = outs
        else:
            (y_ref,) = outs
        base = pl.multiple_of(pl.program_id(1) * tl, tl)
        # One aligned window read; each tap contracts the full Cin depth on the MXU,
        # and the per-tap output shift happens on the f32 result (cheap vreg shift).
        win = x_ref[pl.ds(base, win_rows), :]                 # (win_rows, Cin_p) bf16
        acc = jnp.dot(win, w_ref[0], preferred_element_type=jnp.float32)[0:tl]
        for k in range(1, ksize):
            p = jnp.dot(win, w_ref[k], preferred_element_type=jnp.float32)
            acc = acc + p[k:k + tl]
        acc = acc + b_ref[...]                                # (1, Cout_p) broadcast

        mask = None
        if mask_needed and (apply_bn or zero_tail):
            pos = base + jax.lax.broadcasted_iota(jnp.int32, (tl, 1), 0)
            mask = pos < l_real

        if apply_bn:
            if mask_needed:
                nvalid = jnp.minimum(tl, l_real - base).astype(jnp.float32)
            else:
                nvalid = float(tl)
            psum, m2 = _tile_bn_partials(acc, mask, nvalid)
            st_ref[0:1, :] = psum
            st_ref[1:2, :] = m2

        if zero_tail and mask_needed:
            acc = jnp.where(mask, acc, 0.0)
        y_ref[...] = acc.astype(y_ref.dtype)

    return kernel


def _make_s1_bn_gelu_kernel(tl, l_real, has_res, mask_needed):
    def kernel(y_ref, sc_ref, sh_ref, *rest):
        if has_res:
            r_ref, o_ref = rest
        else:
            (o_ref,) = rest
        v = y_ref[...].astype(jnp.float32) * sc_ref[...] + sh_ref[...]
        v = _gelu_exact(v)
        if has_res:
            v = v + r_ref[...].astype(jnp.float32)
        if mask_needed:
            pos = (pl.program_id(1) * tl
                   + jax.lax.broadcasted_iota(jnp.int32, (tl, 1), 0))
            v = jnp.where(pos < l_real, v, 0.0)   # keep rows >= L_real exactly zero
        o_ref[...] = v.astype(o_ref.dtype)

    return kernel


def _conv_layer_s1(data, l_real, weight, bias, *, gamma=None, beta=None,
                   res_data=None, tl_target=_DEFAULT_TL):
    """Stride-1, odd-K Conv1d (+BN+GELU[+residual]).  `data` is (B, Lbuf, Cin_p) with
    rows >= l_real guaranteed zero (layer invariant)."""
    bsz, lbuf, cin_p = data.shape
    cout, cin, ksize = weight.shape
    assert ksize % 2 == 1 and cin_p >= cin
    pad = ksize // 2
    l_out = l_real                                      # 'same' conv
    apply_bn = gamma is not None
    assert res_data is None or apply_bn

    cout_p = _round_up(cout, 128)
    tl = max(8, min(_round_up(tl_target, 8), _round_up(l_out, 8)))
    nlt = _cdiv(l_out, tl)
    lpad = _round_up(nlt * tl + ksize - 1, 8)
    mask_needed = (l_out % tl) != 0

    # Zero-padded conv input: buffer row r <-> sequence position r - pad.
    keep = min(lbuf, lpad - pad)
    x_pad = jnp.pad(data[:, :keep, :].astype(jnp.bfloat16),
                    ((0, 0), (pad, lpad - pad - keep), (0, 0)))

    w_t = jnp.transpose(weight, (2, 1, 0)).astype(jnp.float32)     # (K, Cin, Cout)
    w_t = jnp.pad(w_t, ((0, 0), (0, cin_p - cin), (0, cout_p - cout)))
    w_t = w_t.astype(jnp.bfloat16)
    b_v = jnp.pad(bias.astype(jnp.float32), (0, cout_p - cout)).reshape(1, cout_p)

    grid = (bsz, nlt)
    x_spec = pl.BlockSpec((None, lpad, cin_p), lambda b, l: (b, 0, 0))  # resident / batch
    w_spec = pl.BlockSpec((ksize, cin_p, cout_p), lambda b, l: (0, 0, 0))
    v_spec = pl.BlockSpec((1, cout_p), lambda b, l: (0, 0))
    y_spec = pl.BlockSpec((None, tl, cout_p), lambda b, l: (b, l, 0))
    st_spec = pl.BlockSpec((8, cout_p), lambda b, l: (b * nlt + l, 0))
    cparams = _cparams(("parallel", "arbitrary"))

    if not apply_bn:
        y = pl.pallas_call(
            _make_s1_conv_kernel(ksize, tl, l_out, False, mask_needed, True),
            grid=grid,
            in_specs=[x_spec, w_spec, v_spec],
            out_specs=y_spec,
            out_shape=jax.ShapeDtypeStruct((bsz, nlt * tl, cout_p), jnp.bfloat16),
            compiler_params=cparams,
        )(x_pad, w_t, b_v)
        return y, l_out

    # Pass 1: conv + bias (bf16 out) + mean-shifted per-tile BN partials.
    y, stats = pl.pallas_call(
        _make_s1_conv_kernel(ksize, tl, l_out, True, mask_needed, False),
        grid=grid,
        in_specs=[x_spec, w_spec, v_spec],
        out_specs=[y_spec, st_spec],
        out_shape=[jax.ShapeDtypeStruct((bsz, nlt * tl, cout_p), jnp.bfloat16),
                   jax.ShapeDtypeStruct((bsz * nlt * 8, cout_p), jnp.float32)],
        compiler_params=cparams,
    )(x_pad, w_t, b_v)

    st = stats.reshape(bsz * nlt, 8, cout_p)
    counts = np.tile(np.minimum(tl, l_out - np.arange(nlt) * tl), bsz)
    scale, shift = _bn_scale_shift(st[:, 0, :], st[:, 1, :],
                                   jnp.asarray(counts, jnp.float32),
                                   float(bsz * l_out), gamma, beta, cout_p)

    # Pass 2: normalize + GELU (+ residual), fully parallel, bf16 out.
    args = [y, scale, shift]
    in_specs = [y_spec, v_spec, v_spec]
    if res_data is not None:
        assert res_data.shape[0] == bsz and res_data.shape[2] == cout_p
        lres = res_data.shape[1]
        if lres < nlt * tl:
            res_data = jnp.pad(res_data, ((0, 0), (0, nlt * tl - lres), (0, 0)))
        elif lres > nlt * tl:
            res_data = res_data[:, :nlt * tl, :]
        args.append(res_data.astype(jnp.bfloat16))
        in_specs.append(y_spec)

    out = pl.pallas_call(
        _make_s1_bn_gelu_kernel(tl, l_out, res_data is not None, mask_needed),
        grid=grid,
        in_specs=in_specs,
        out_specs=y_spec,
        out_shape=jax.ShapeDtypeStruct((bsz, nlt * tl, cout_p), jnp.bfloat16),
        compiler_params=_cparams(("parallel", "parallel")),
    )(*args)
    return out, l_out


# ---------------------------------------------------------------------------
# Strided / fallback path: im2col + one long-contraction matmul per tile
# ---------------------------------------------------------------------------
def _make_flat_conv_kernel(apply_bn, m_real, tm, mask_needed):
    def kernel(xt_ref, w_ref, b_ref, *outs):
        if apply_bn:
            y_ref, st_ref = outs
        else:
            (y_ref,) = outs
        acc = jnp.dot(xt_ref[...], w_ref[...], preferred_element_type=jnp.float32)
        acc = acc + b_ref[...]
        if apply_bn:
            if mask_needed:
                row = (jax.lax.broadcasted_iota(jnp.int32, (tm, 1), 0)
                       + pl.program_id(0) * tm)
                mask = row < m_real
                nvalid = jnp.minimum(
                    tm, m_real - pl.program_id(0) * tm).astype(jnp.float32)
            else:
                mask, nvalid = None, float(tm)
            psum, m2 = _tile_bn_partials(acc, mask, nvalid)
            st_ref[0:1, :] = psum
            st_ref[1:2, :] = m2
        y_ref[...] = acc.astype(y_ref.dtype)

    return kernel


def _flat_bn_gelu_kernel(y_ref, sc_ref, sh_ref, o_ref):
    v = y_ref[...].astype(jnp.float32) * sc_ref[...] + sh_ref[...]
    o_ref[...] = _gelu_exact(v).astype(o_ref.dtype)


def _conv_layer_strided(x_nlc, weight, bias, *, stride, pad, gamma=None, beta=None,
                        tm_target=_DEFAULT_TM):
    bsz, l_in, cx = x_nlc.shape
    cout, cin, ksize = weight.shape
    assert cx >= cin
    apply_bn = gamma is not None
    l_out = (l_in + 2 * pad - ksize) // stride + 1
    m = bsz * l_out

    # im2col (only the strided Encoder_Input / Encoder_Output convs take this path).
    xp = jnp.pad(x_nlc.astype(jnp.bfloat16), ((0, 0), (pad, pad), (0, 0)))
    cols = []
    for k in range(ksize):
        end = k + stride * (l_out - 1) + 1
        cols.append(xp[:, k:end:stride, :])
    xt = jnp.concatenate(cols, axis=-1).reshape(m, ksize * cx)

    kin = ksize * cx
    kin_p = _round_up(kin, 128)
    cout_p = _round_up(cout, 128)
    tm = max(8, min(_round_up(tm_target, 8), _round_up(m, 8)))
    if _cdiv(m, tm) < 2 and m > 8:          # keep >= 2 grid steps (v7x megacore)
        tm = max(8, _round_up(_cdiv(m, 2), 8))
    m_pad = _round_up(m, tm)
    nt = m_pad // tm
    mask_needed = (m % tm) != 0

    xt = jnp.pad(xt, ((0, m_pad - m), (0, kin_p - kin)))
    w_t = jnp.transpose(weight, (2, 1, 0)).astype(jnp.float32)      # (K, Cin, Cout)
    w_t = jnp.pad(w_t, ((0, 0), (0, cx - cin), (0, 0))).reshape(kin, cout)
    w_t = jnp.pad(w_t, ((0, kin_p - kin), (0, cout_p - cout))).astype(jnp.bfloat16)
    b_v = jnp.pad(bias.astype(jnp.float32), (0, cout_p - cout)).reshape(1, cout_p)

    cparams = _cparams(("parallel",))
    xt_spec = pl.BlockSpec((tm, kin_p), lambda i: (i, 0))
    w_spec = pl.BlockSpec((kin_p, cout_p), lambda i: (0, 0))
    v_spec = pl.BlockSpec((1, cout_p), lambda i: (0, 0))
    row_spec = pl.BlockSpec((tm, cout_p), lambda i: (i, 0))
    st_spec = pl.BlockSpec((8, cout_p), lambda i: (i, 0))

    if not apply_bn:
        y = pl.pallas_call(
            _make_flat_conv_kernel(False, m, tm, mask_needed),
            grid=(nt,), in_specs=[xt_spec, w_spec, v_spec], out_specs=row_spec,
            out_shape=jax.ShapeDtypeStruct((m_pad, cout_p), jnp.bfloat16),
            compiler_params=cparams,
        )(xt, w_t, b_v)
        return y[:m].reshape(bsz, l_out, cout_p), l_out

    y, stats = pl.pallas_call(
        _make_flat_conv_kernel(True, m, tm, mask_needed),
        grid=(nt,), in_specs=[xt_spec, w_spec, v_spec],
        out_specs=[row_spec, st_spec],
        out_shape=[jax.ShapeDtypeStruct((m_pad, cout_p), jnp.bfloat16),
                   jax.ShapeDtypeStruct((nt * 8, cout_p), jnp.float32)],
        compiler_params=cparams,
    )(xt, w_t, b_v)

    st = stats.reshape(nt, 8, cout_p)
    counts = np.minimum(tm, m - np.arange(nt) * tm)
    scale, shift = _bn_scale_shift(st[:, 0, :], st[:, 1, :],
                                   jnp.asarray(counts, jnp.float32),
                                   float(m), gamma, beta, cout_p)

    out = pl.pallas_call(
        _flat_bn_gelu_kernel,
        grid=(nt,), in_specs=[row_spec, v_spec, v_spec], out_specs=row_spec,
        out_shape=jax.ShapeDtypeStruct((m_pad, cout_p), jnp.bfloat16),
        compiler_params=cparams,
    )(y, scale, shift)
    return out[:m].reshape(bsz, l_out, cout_p), l_out


# ---------------------------------------------------------------------------
# Layer dispatcher
# ---------------------------------------------------------------------------
def _conv_block(data, l_real, weight, bias, *, stride, gamma=None, beta=None,
                res_data=None, tl=_DEFAULT_TL, tm=_DEFAULT_TM):
    ksize = weight.shape[2]
    pad = ksize // 2
    if stride == 1 and ksize % 2 == 1 and ksize <= 9:
        # per-batch resident input (double-buffered bf16) must fit the VMEM budget
        resident = 2 * 2 * (l_real + 2 * pad + 8) * data.shape[2]
        if resident <= _S1_RESIDENT_BUDGET:
            return _conv_layer_s1(data, l_real, weight, bias, gamma=gamma, beta=beta,
                                  res_data=res_data, tl_target=tl)
    # Strided convs / fallback: exact-length input, flat im2col matmul.
    out, l_out = _conv_layer_strided(data[:, :l_real, :], weight, bias,
                                     stride=stride, pad=pad, gamma=gamma, beta=beta,
                                     tm_target=tm)
    if res_data is not None:
        assert gamma is not None and res_data.shape[2] == out.shape[2]
        out = (out.astype(jnp.float32)
               + res_data[:, :l_out, :].astype(jnp.float32)).astype(jnp.bfloat16)
    return out, l_out


# ---------------------------------------------------------------------------
# Parameter initialization (deterministic, matches the PyTorch module's shapes)
# ---------------------------------------------------------------------------
def _conv_param(key, cout, cin, ksize):
    bound = 1.0 / math.sqrt(cin * ksize)
    kw, kb = jax.random.split(key)
    w = jax.random.uniform(kw, (cout, cin, ksize), jnp.float32, -bound, bound)
    b = jax.random.uniform(kb, (cout,), jnp.float32, -bound, bound)
    return w, b


def init_params(key, in_features, encoder_h, output_h, enc_width, enc_downsample,
                use_output=False):
    n_conv = 2 + sum(len(w) for w in enc_width) + (2 if use_output else 0)
    keys = iter(jax.random.split(key, n_conv))
    p = {}
    k0 = enc_width[0][0]

    p["in0_w"], p["in0_b"] = _conv_param(next(keys), encoder_h, in_features, k0)
    p["in1_w"], p["in1_b"] = _conv_param(next(keys), encoder_h, encoder_h, k0 - 1)
    p["in_bn_g"] = jnp.ones((encoder_h,), jnp.float32)
    p["in_bn_b"] = jnp.zeros((encoder_h,), jnp.float32)

    for i, widths in enumerate(enc_width):
        for j, w in enumerate(widths):
            p[f"res{i}_{j}_w"], p[f"res{i}_{j}_b"] = _conv_param(
                next(keys), encoder_h, encoder_h, w)
            p[f"res{i}_{j}_bn_g"] = jnp.ones((encoder_h,), jnp.float32)
            p[f"res{i}_{j}_bn_b"] = jnp.zeros((encoder_h,), jnp.float32)

    if use_output:
        kk = enc_width[-1][-1]
        p["out0_w"], p["out0_b"] = _conv_param(next(keys), output_h, encoder_h, kk)
        p["out1_w"], p["out1_b"] = _conv_param(next(keys), output_h, output_h, kk)
        p["out_bn_g"] = jnp.ones((output_h,), jnp.float32)
        p["out_bn_b"] = jnp.zeros((output_h,), jnp.float32)
    return p


# ---------------------------------------------------------------------------
# Full forward pass (matches ConvEncoder3ResBN.forward)
# ---------------------------------------------------------------------------
def conv_encoder3_res_bn_forward(x_ncl, params, enc_width, enc_downsample, *,
                                 use_output=False, tl=_DEFAULT_TL, tm=_DEFAULT_TM):
    x = jnp.transpose(x_ncl, (0, 2, 1)).astype(jnp.float32)        # NCL -> NLC
    k0 = enc_width[0][0]

    # Encoder_Input: Conv(k0, stride k0) -> Conv(k0-1, stride k0-1) -> BN -> GELU
    h, l_real = _conv_block(x, x.shape[1], params["in0_w"], params["in0_b"],
                            stride=k0, tl=tl, tm=tm)
    h, l_real = _conv_block(h, l_real, params["in1_w"], params["in1_b"],
                            stride=k0 - 1, gamma=params["in_bn_g"],
                            beta=params["in_bn_b"], tl=tl, tm=tm)

    # Encoder_ResBlock{i}: x + ResBlock_1(x)  (residual added after the last GELU)
    for i, (widths, strides) in enumerate(zip(enc_width, enc_downsample)):
        res_data, res_l = h, l_real
        t, cur_l = h, l_real
        for j, (w, s) in enumerate(zip(widths, strides)):
            last = j == len(widths) - 1
            t, cur_l = _conv_block(
                t, cur_l, params[f"res{i}_{j}_w"], params[f"res{i}_{j}_b"], stride=s,
                gamma=params[f"res{i}_{j}_bn_g"], beta=params[f"res{i}_{j}_bn_b"],
                res_data=res_data if last else None, tl=tl, tm=tm)
        assert cur_l == res_l, "resblock must preserve sequence length"
        h, l_real = t, cur_l

    c_real = params["in1_w"].shape[0]                              # encoder_h
    if use_output:
        kk = enc_width[-1][-1]
        sk = enc_downsample[-1][-1]
        h, l_real = _conv_block(h, l_real, params["out0_w"], params["out0_b"],
                                stride=sk, tl=tl, tm=tm)
        h, l_real = _conv_block(h, l_real, params["out1_w"], params["out1_b"],
                                stride=sk, gamma=params["out_bn_g"],
                                beta=params["out_bn_b"], tl=tl, tm=tm)
        c_real = params["out1_w"].shape[0]                         # output_h

    h = h[:, :l_real, :c_real].astype(jnp.float32)                 # drop all padding
    return jnp.transpose(h, (0, 2, 1))                             # NLC -> NCL


# ---------------------------------------------------------------------------
# Pure-JAX f32 reference (lax.conv) for a correctness sanity check
# ---------------------------------------------------------------------------
def _ref_forward(x_ncl, params, enc_width, enc_downsample, use_output=False):
    def conv(x, w, b, stride, pad):
        y = jax.lax.conv_general_dilated(
            x, w, window_strides=(stride,), padding=[(pad, pad)],
            dimension_numbers=("NCH", "OIH", "NCH"))
        return y + b[None, :, None]

    def bn_gelu(y, g, be):
        mean = jnp.mean(y, axis=(0, 2), keepdims=True)
        var = jnp.mean((y - mean) ** 2, axis=(0, 2), keepdims=True)
        yn = (y - mean) * jax.lax.rsqrt(var + _BN_EPS)
        yn = yn * g[None, :, None] + be[None, :, None]
        return 0.5 * yn * (1.0 + jax.lax.erf(yn * _INV_SQRT2))

    k0 = enc_width[0][0]
    h = conv(x_ncl, params["in0_w"], params["in0_b"], k0, k0 // 2)
    h = conv(h, params["in1_w"], params["in1_b"], k0 - 1, (k0 - 1) // 2)
    h = bn_gelu(h, params["in_bn_g"], params["in_bn_b"])
    for i, (widths, strides) in enumerate(zip(enc_width, enc_downsample)):
        res, t = h, h
        for j, (w, s) in enumerate(zip(widths, strides)):
            t = conv(t, params[f"res{i}_{j}_w"], params[f"res{i}_{j}_b"], s, w // 2)
            t = bn_gelu(t, params[f"res{i}_{j}_bn_g"], params[f"res{i}_{j}_bn_b"])
        h = res + t
    if use_output:
        kk = enc_width[-1][-1]
        sk = enc_downsample[-1][-1]
        h = conv(h, params["out0_w"], params["out0_b"], sk, kk // 2)
        h = conv(h, params["out1_w"], params["out1_b"], sk, kk // 2)
        h = bn_gelu(h, params["out_bn_g"], params["out_bn_b"])
    return h


if __name__ == "__main__":
    # Small shapes consistent with the module defaults (3 resblocks of width (3,3),
    # stride 1, use_output=False): batch=2, in_features=4, length=64,
    # encoder_h=32, output_h=16 (the 256/128 defaults scaled down for a quick run).
    B, C_IN, L = 2, 4, 64
    ENC_H, OUT_H = 32, 16
    ENC_WIDTH = ((3, 3), (3, 3), (3, 3))
    ENC_DOWN = ((1, 1), (1, 1), (1, 1))

    key = jax.random.PRNGKey(0)
    kx, kp = jax.random.split(key)
    x = jax.random.normal(kx, (B, C_IN, L), jnp.float32)
    params = init_params(kp, C_IN, ENC_H, OUT_H, ENC_WIDTH, ENC_DOWN, use_output=False)

    # Tiny tiles (tl=8, tm=16) so the small test shapes still exercise multi-tile
    # grids, the partial-tile masking and the cross-tile BN combine.  Production
    # defaults are tl=512 / tm=1024.
    fwd = jax.jit(functools.partial(
        conv_encoder3_res_bn_forward,
        enc_width=ENC_WIDTH, enc_downsample=ENC_DOWN, use_output=False, tl=8, tm=16))
    y = jax.block_until_ready(fwd(x, params))

    y_ref = jax.block_until_ready(
        _ref_forward(x, params, ENC_WIDTH, ENC_DOWN, use_output=False))
    assert y.shape == y_ref.shape, (y.shape, y_ref.shape)
    # Tolerance accounts for bf16 MXU operands and bf16 inter-layer / inter-pass
    # activations in the Pallas path vs the all-f32 reference across 8 conv+BN layers.
    np.testing.assert_allclose(np.asarray(y), np.asarray(y_ref), rtol=1e-1, atol=1e-1)

    print("KERNEL_OK")
</pallas_src>

<mosaic_0001>
module attributes {stable_mosaic.version = 11 : i64} {
  func.func @kernel(%arg0: i32, %arg1: memref<16x128xbf16, #tpu.memory_space<vmem>>, %arg2: memref<128x128xbf16, #tpu.memory_space<vmem>>, %arg3: memref<1x128xf32, #tpu.memory_space<vmem>>, %arg4: memref<16x128xbf16, #tpu.memory_space<vmem>>) attributes {dimension_semantics = [#tpu.dimension_semantics<parallel>], iteration_bounds = array<i64: 3>, scalar_prefetch = 0 : i64, scratch_operands = 0 : i64, tpu.core_type = #tpu.core_type<tc>, window_params = [{transform_indices = @transform_0, window_bounds = array<i64: 16, 128>}, {pipeline_mode = #tpu.pipeline_mode<synchronous>, transform_indices = @transform_1, window_bounds = array<i64: 128, 128>}, {pipeline_mode = #tpu.pipeline_mode<synchronous>, transform_indices = @transform_2, window_bounds = array<i64: 1, 128>}, {transform_indices = @transform_3, window_bounds = array<i64: 16, 128>}]} {
    %c0 = arith.constant 0 : index
    %c0_0 = arith.constant 0 : index
    %0 = vector.load %arg1[%c0, %c0_0] : memref<16x128xbf16, #tpu.memory_space<vmem>>, vector<16x128xbf16>
    %c0_1 = arith.constant 0 : index
    %c0_2 = arith.constant 0 : index
    %1 = vector.load %arg2[%c0_1, %c0_2] : memref<128x128xbf16, #tpu.memory_space<vmem>>, vector<128x128xbf16>
    %cst = arith.constant dense<0.000000e+00> : vector<16x128xf32>
    %2 = tpu.matmul %0, %1, %cst {dimension_numbers = #tpu.dot_dimension_numbers<[1], [0], [0], [1], [0, 0, 1, 1], [], []>} : vector<16x128xbf16>, vector<128x128xbf16>, vector<16x128xf32> -> vector<16x128xf32>
    %c0_3 = arith.constant 0 : index
    %c0_4 = arith.constant 0 : index
    %3 = vector.load %arg3[%c0_3, %c0_4] : memref<1x128xf32, #tpu.memory_space<vmem>>, vector<1x128xf32>
    %4 = vector.broadcast %3 : vector<1x128xf32> to vector<16x128xf32>
    %5 = arith.addf %2, %4 : vector<16x128xf32>
    %6 = arith.truncf %5 : vector<16x128xf32> to vector<16x128xbf16>
    %c0_5 = arith.constant 0 : index
    %c0_6 = arith.constant 0 : index
    %7 = vector.load %arg4[%c0_5, %c0_6] : memref<16x128xbf16, #tpu.memory_space<vmem>>, vector<16x128xbf16>
    tpu.vector_store %arg4[%c0_5, %c0_6], %6 {strides = array<i32>} : memref<16x128xbf16, #tpu.memory_space<vmem>>, vector<16x128xbf16>,
    return
  }
  func.func @transform_0(%arg0: i32) -> (i32, i32) {
    %c0_i32 = arith.constant 0 : i32
    %c0_i32_0 = arith.constant 0 : i32
    return %arg0, %c0_i32 : i32, i32
  }
  func.func @transform_1(%arg0: i32) -> (i32, i32) {
    %c0_i32 = arith.constant 0 : i32
    %c0_i32_0 = arith.constant 0 : i32
    %c0_i32_1 = arith.constant 0 : i32
    return %c0_i32, %c0_i32_0 : i32, i32
  }
  func.func @transform_2(%arg0: i32) -> (i32, i32) {
    %c0_i32 = arith.constant 0 : i32
    %c0_i32_0 = arith.constant 0 : i32
    %c0_i32_1 = arith.constant 0 : i32
    return %c0_i32, %c0_i32_0 : i32, i32
  }
  func.func @transform_3(%arg0: i32) -> (i32, i32) {
    %c0_i32 = arith.constant 0 : i32
    %c0_i32_0 = arith.constant 0 : i32
    return %arg0, %c0_i32 : i32, i32
  }
}

module attributes {stable_mosaic.version = 11 : i64} {
  func.func @kernel(%arg0: i32, %arg1: memref<16x256xbf16, #tpu.memory_space<vmem>>, %arg2: memref<256x128xbf16, #tpu.memory_space<vmem>>, %arg3: memref<1x128xf32, #tpu.memory_space<vmem>>, %arg4: memref<16x128xbf16, #tpu.memory_space<vmem>>, %arg5: memref<8x128xf32, #tpu.memory_space<vmem>>) attributes {dimension_semantics = [#tpu.dimension_semantics<parallel>], iteration_bounds = array<i64: 2>, scalar_prefetch = 0 : i64, scratch_operands = 0 : i64, tpu.core_type = #tpu.core_type<tc>, window_params = [{transform_indices = @transform_0, window_bounds = array<i64: 16, 256>}, {pipeline_mode = #tpu.pipeline_mode<synchronous>, transform_indices = @transform_1, window_bounds = array<i64: 256, 128>}, {pipeline_mode = #tpu.pipeline_mode<synchronous>, transform_indices = @transform_2, window_bounds = array<i64: 1, 128>}, {transform_indices = @transform_3, window_bounds = array<i64: 16, 128>}, {transform_indices = @transform_4, window_bounds = array<i64: 8, 128>}]} {
    %c0 = arith.constant 0 : index
    %c0_0 = arith.constant 0 : index
    %0 = vector.load %arg1[%c0, %c0_0] : memref<16x256xbf16, #tpu.memory_space<vmem>>, vector<16x256xbf16>
    %c0_1 = arith.constant 0 : index
    %c0_2 = arith.constant 0 : index
    %1 = vector.load %arg2[%c0_1, %c0_2] : memref<256x128xbf16, #tpu.memory_space<vmem>>, vector<256x128xbf16>
    %cst = arith.constant dense<0.000000e+00> : vector<16x128xf32>
    %2 = tpu.matmul %0, %1, %cst {dimension_numbers = #tpu.dot_dimension_numbers<[1], [0], [0], [1], [0, 0, 1, 1], [], []>} : vector<16x256xbf16>, vector<256x128xbf16>, vector<16x128xf32> -> vector<16x128xf32>
    %c0_3 = arith.constant 0 : index
    %c0_4 = arith.constant 0 : index
    %3 = vector.load %arg3[%c0_3, %c0_4] : memref<1x128xf32, #tpu.memory_space<vmem>>, vector<1x128xf32>
    %4 = vector.broadcast %3 : vector<1x128xf32> to vector<16x128xf32>
    %5 = arith.addf %2, %4 : vector<16x128xf32>
    %6 = tpu.iota {dimensions = array<i32: 0>} : vector<16x1xi32>
    %c16_i32 = arith.constant 16 : i32
    %7 = arith.muli %arg0, %c16_i32 : i32
    %8 = vector.broadcast %7 : i32 to vector<16x1xi32>
    %9 = arith.addi %6, %8 : vector<16x1xi32>
    %c24_i32 = arith.constant 24 : i32
    %10 = vector.broadcast %c24_i32 : i32 to vector<16x1xi32>
    %11 = arith.cmpi slt, %9, %10 : vector<16x1xi32>
    %c16_i32_5 = arith.constant 16 : i32
    %12 = arith.muli %arg0, %c16_i32_5 : i32
    %c24_i32_6 = arith.constant 24 : i32
    %13 = arith.subi %c24_i32_6, %12 : i32
    %c16_i32_7 = arith.constant 16 : i32
    %14 = arith.minsi %c16_i32_7, %13 : i32
    %15 = arith.sitofp %14 : i32 to f32
    %cst_8 = arith.constant 0.000000e+00 : f32
    %16 = vector.shape_cast %11 : vector<16x1xi1> to vector<16x1xi1>
    %17 = vector.broadcast %16 : vector<16x1xi1> to vector<16x128xi1>
    %18 = vector.broadcast %cst_8 : f32 to vector<16x128xf32>
    %19 = arith.select %17, %5, %18 : vector<16x128xi1>, vector<16x128xf32>
    %cst_9 = arith.constant dense<0.000000e+00> : vector<128xf32>
    %20 = vector.multi_reduction <add>, %19, %cst_9 [0] : vector<16x128xf32> to vector<128xf32>
    %21 = vector.shape_cast %20 : vector<128xf32> to vector<1x128xf32>
    %22 = vector.broadcast %15 : f32 to vector<1x128xf32>
    %23 = arith.divf %21, %22 : vector<1x128xf32>
    %24 = vector.broadcast %23 : vector<1x128xf32> to vector<16x128xf32>
    %25 = arith.subf %19, %24 : vector<16x128xf32>
    %cst_10 = arith.constant 0.000000e+00 : f32
    %26 = vector.shape_cast %11 : vector<16x1xi1> to vector<16x1xi1>
    %27 = vector.broadcast %26 : vector<16x1xi1> to vector<16x128xi1>
    %28 = vector.broadcast %cst_10 : f32 to vector<16x128xf32>
    %29 = arith.select %27, %25, %28 : vector<16x128xi1>, vector<16x128xf32>
    %30 = arith.mulf %29, %29 : vector<16x128xf32>
    %cst_11 = arith.constant dense<0.000000e+00> : vector<128xf32>
    %31 = vector.multi_reduction <add>, %30, %cst_11 [0] : vector<16x128xf32> to vector<128xf32>
    %32 = vector.shape_cast %31 : vector<128xf32> to vector<1x128xf32>
    %c0_12 = arith.constant 0 : index
    %c0_13 = arith.constant 0 : index
    %33 = vector.load %arg5[%c0_12, %c0_13] : memref<8x128xf32, #tpu.memory_space<vmem>>, vector<1x128xf32>
    tpu.vector_store %arg5[%c0_12, %c0_13], %21 {strides = array<i32>} : memref<8x128xf32, #tpu.memory_space<vmem>>, vector<1x128xf32>,
    %c1 = arith.constant 1 : index
    %c0_14 = arith.constant 0 : index
    %34 = vector.load %arg5[%c1, %c0_14] : memref<8x128xf32, #tpu.memory_space<vmem>>, vector<1x128xf32>
    tpu.vector_store %arg5[%c1, %c0_14], %32 {strides = array<i32>} : memref<8x128xf32, #tpu.memory_space<vmem>>, vector<1x128xf32>,
    %35 = arith.truncf %5 : vector<16x128xf32> to vector<16x128xbf16>
    %c0_15 = arith.constant 0 : index
    %c0_16 = arith.constant 0 : index
    %36 = vector.load %arg4[%c0_15, %c0_16] : memref<16x128xbf16, #tpu.memory_space<vmem>>, vector<16x128xbf16>
    tpu.vector_store %arg4[%c0_15, %c0_16], %35 {strides = array<i32>} : memref<16x128xbf16, #tpu.memory_space<vmem>>, vector<16x128xbf16>,
    return
  }
  func.func @transform_0(%arg0: i32) -> (i32, i32) {
    %c0_i32 = arith.constant 0 : i32
    %c0_i32_0 = arith.constant 0 : i32
    return %arg0, %c0_i32 : i32, i32
  }
  func.func @transform_1(%arg0: i32) -> (i32, i32) {
    %c0_i32 = arith.constant 0 : i32
    %c0_i32_0 = arith.constant 0 : i32
    %c0_i32_1 = arith.constant 0 : i32
    return %c0_i32, %c0_i32_0 : i32, i32
  }
  func.func @transform_2(%arg0: i32) -> (i32, i32) {
    %c0_i32 = arith.constant 0 : i32
    %c0_i32_0 = arith.constant 0 : i32
    %c0_i32_1 = arith.constant 0 : i32
    return %c0_i32, %c0_i32_0 : i32, i32
  }
  func.func @transform_3(%arg0: i32) -> (i32, i32) {
    %c0_i32 = arith.constant 0 : i32
    %c0_i32_0 = arith.constant 0 : i32
    return %arg0, %c0_i32 : i32, i32
  }
  func.func @transform_4(%arg0: i32) -> (i32, i32) {
    %c0_i32 = arith.constant 0 : i32
    %c0_i32_0 = arith.constant 0 : i32
    return %arg0, %c0_i32 : i32, i32
  }
}

module attributes {stable_mosaic.version = 11 : i64} {
  func.func @_flat_bn_gelu_kernel(%arg0: i32, %arg1: memref<16x128xbf16, #tpu.memory_space<vmem>>, %arg2: memref<1x128xf32, #tpu.memory_space<vmem>>, %arg3: memref<1x128xf32, #tpu.memory_space<vmem>>, %arg4: memref<16x128xbf16, #tpu.memory_space<vmem>>) attributes {dimension_semantics = [#tpu.dimension_semantics<parallel>], iteration_bounds = array<i64: 2>, scalar_prefetch = 0 : i64, scratch_operands = 0 : i64, tpu.core_type = #tpu.core_type<tc>, window_params = [{transform_indices = @transform_0, window_bounds = array<i64: 16, 128>}, {pipeline_mode = #tpu.pipeline_mode<synchronous>, transform_indices = @transform_1, window_bounds = array<i64: 1, 128>}, {pipeline_mode = #tpu.pipeline_mode<synchronous>, transform_indices = @transform_2, window_bounds = array<i64: 1, 128>}, {transform_indices = @transform_3, window_bounds = array<i64: 16, 128>}]} {
    %c0 = arith.constant 0 : index
    %c0_0 = arith.constant 0 : index
    %0 = vector.load %arg1[%c0, %c0_0] : memref<16x128xbf16, #tpu.memory_space<vmem>>, vector<16x128xbf16>
    %1 = arith.extf %0 : vector<16x128xbf16> to vector<16x128xf32>
    %c0_1 = arith.constant 0 : index
    %c0_2 = arith.constant 0 : index
    %2 = vector.load %arg2[%c0_1, %c0_2] : memref<1x128xf32, #tpu.memory_space<vmem>>, vector<1x128xf32>
    %3 = vector.broadcast %2 : vector<1x128xf32> to vector<16x128xf32>
    %4 = arith.mulf %1, %3 : vector<16x128xf32>
    %c0_3 = arith.constant 0 : index
    %c0_4 = arith.constant 0 : index
    %5 = vector.load %arg3[%c0_3, %c0_4] : memref<1x128xf32, #tpu.memory_space<vmem>>, vector<1x128xf32>
    %6 = vector.broadcast %5 : vector<1x128xf32> to vector<16x128xf32>
    %7 = arith.addf %4, %6 : vector<16x128xf32>
    %cst = arith.constant 5.000000e-01 : f32
    %8 = vector.broadcast %cst : f32 to vector<16x128xf32>
    %9 = arith.mulf %8, %7 : vector<16x128xf32>
    %cst_5 = arith.constant 0.707106769 : f32
    %10 = vector.broadcast %cst_5 : f32 to vector<16x128xf32>
    %11 = arith.mulf %7, %10 : vector<16x128xf32>
    %12 = math.erf %11 : vector<16x128xf32>
    %cst_6 = arith.constant 1.000000e+00 : f32
    %13 = vector.broadcast %cst_6 : f32 to vector<16x128xf32>
    %14 = arith.addf %13, %12 : vector<16x128xf32>
    %15 = arith.mulf %9, %14 : vector<16x128xf32>
    %16 = arith.truncf %15 : vector<16x128xf32> to vector<16x128xbf16>
    %c0_7 = arith.constant 0 : index
    %c0_8 = arith.constant 0 : index
    %17 = vector.load %arg4[%c0_7, %c0_8] : memref<16x128xbf16, #tpu.memory_space<vmem>>, vector<16x128xbf16>
    tpu.vector_store %arg4[%c0_7, %c0_8], %16 {strides = array<i32>} : memref<16x128xbf16, #tpu.memory_space<vmem>>, vector<16x128xbf16>,
    return
  }
  func.func @transform_0(%arg0: i32) -> (i32, i32) {
    %c0_i32 = arith.constant 0 : i32
    %c0_i32_0 = arith.constant 0 : i32
    return %arg0, %c0_i32 : i32, i32
  }
  func.func @transform_1(%arg0: i32) -> (i32, i32) {
    %c0_i32 = arith.constant 0 : i32
    %c0_i32_0 = arith.constant 0 : i32
    %c0_i32_1 = arith.constant 0 : i32
    return %c0_i32, %c0_i32_0 : i32, i32
  }
  func.func @transform_2(%arg0: i32) -> (i32, i32) {
    %c0_i32 = arith.constant 0 : i32
    %c0_i32_0 = arith.constant 0 : i32
    %c0_i32_1 = arith.constant 0 : i32
    return %c0_i32, %c0_i32_0 : i32, i32
  }
  func.func @transform_3(%arg0: i32) -> (i32, i32) {
    %c0_i32 = arith.constant 0 : i32
    %c0_i32_0 = arith.constant 0 : i32
    return %arg0, %c0_i32 : i32, i32
  }
}

module attributes {stable_mosaic.version = 11 : i64} {
  func.func @kernel(%arg0: i32, %arg1: i32, %arg2: memref<1x24x128xbf16, #tpu.memory_space<vmem>>, %arg3: memref<3x128x128xbf16, #tpu.memory_space<vmem>>, %arg4: memref<1x128xf32, #tpu.memory_space<vmem>>, %arg5: memref<1x8x128xbf16, #tpu.memory_space<vmem>>, %arg6: memref<8x128xf32, #tpu.memory_space<vmem>>) attributes {dimension_semantics = [#tpu.dimension_semantics<parallel>, #tpu.dimension_semantics<arbitrary>], iteration_bounds = array<i64: 2, 2>, scalar_prefetch = 0 : i64, scratch_operands = 0 : i64, tpu.core_type = #tpu.core_type<tc>, window_params = [{transform_indices = @transform_0, window_bounds = array<i64: 1, 24, 128>}, {pipeline_mode = #tpu.pipeline_mode<synchronous>, transform_indices = @transform_1, window_bounds = array<i64: 3, 128, 128>}, {pipeline_mode = #tpu.pipeline_mode<synchronous>, transform_indices = @transform_2, window_bounds = array<i64: 1, 128>}, {transform_indices = @transform_3, window_bounds = array<i64: 1, 8, 128>}, {transform_indices = @transform_4, window_bounds = array<i64: 8, 128>}]} {
    %c8_i32 = arith.constant 8 : i32
    %0 = arith.muli %arg1, %c8_i32 : i32
    %1 = tpu.assume_multiple %0, 8 : i32
    %c0 = arith.constant 0 : index
    %2 = arith.index_cast %1 : i32 to index
    %c0_0 = arith.constant 0 : index
    %3 = vector.load %arg2[%c0, %2, %c0_0] : memref<1x24x128xbf16, #tpu.memory_space<vmem>>, vector<1x16x128xbf16>
    %4 = vector.shape_cast %3 : vector<1x16x128xbf16> to vector<16x128xbf16>
    %c0_1 = arith.constant 0 : index
    %c0_2 = arith.constant 0 : index
    %c0_3 = arith.constant 0 : index
    %5 = vector.load %arg3[%c0_1, %c0_2, %c0_3] : memref<3x128x128xbf16, #tpu.memory_space<vmem>>, vector<1x128x128xbf16>
    %6 = vector.shape_cast %5 : vector<1x128x128xbf16> to vector<128x128xbf16>
    %cst = arith.constant dense<0.000000e+00> : vector<16x128xf32>
    %7 = tpu.matmul %4, %6, %cst {dimension_numbers = #tpu.dot_dimension_numbers<[1], [0], [0], [1], [0, 0, 1, 1], [], []>} : vector<16x128xbf16>, vector<128x128xbf16>, vector<16x128xf32> -> vector<16x128xf32>
    %8 = vector.extract_strided_slice %7 {offsets = [0, 0], sizes = [8, 128], strides = [1, 1]} : vector<16x128xf32> to vector<8x128xf32>
    %c1 = arith.constant 1 : index
    %c0_4 = arith.constant 0 : index
    %c0_5 = arith.constant 0 : index
    %9 = vector.load %arg3[%c1, %c0_4, %c0_5] : memref<3x128x128xbf16, #tpu.memory_space<vmem>>, vector<1x128x128xbf16>
    %10 = vector.shape_cast %9 : vector<1x128x128xbf16> to vector<128x128xbf16>
    %cst_6 = arith.constant dense<0.000000e+00> : vector<16x128xf32>
    %11 = tpu.matmul %4, %10, %cst_6 {dimension_numbers = #tpu.dot_dimension_numbers<[1], [0], [0], [1], [0, 0, 1, 1], [], []>} : vector<16x128xbf16>, vector<128x128xbf16>, vector<16x128xf32> -> vector<16x128xf32>
    %12 = vector.extract_strided_slice %11 {offsets = [1, 0], sizes = [8, 128], strides = [1, 1]} : vector<16x128xf32> to vector<8x128xf32>
    %13 = arith.addf %8, %12 : vector<8x128xf32>
    %c2 = arith.constant 2 : index
    %c0_7 = arith.constant 0 : index
    %c0_8 = arith.constant 0 : index
    %14 = vector.load %arg3[%c2, %c0_7, %c0_8] : memref<3x128x128xbf16, #tpu.memory_space<vmem>>, vector<1x128x128xbf16>
    %15 = vector.shape_cast %14 : vector<1x128x128xbf16> to vector<128x128xbf16>
    %cst_9 = arith.constant dense<0.000000e+00> : vector<16x128xf32>
    %16 = tpu.matmul %4, %15, %cst_9 {dimension_numbers = #tpu.dot_dimension_numbers<[1], [0], [0], [1], [0, 0, 1, 1], [], []>} : vector<16x128xbf16>, vector<128x128xbf16>, vector<16x128xf32> -> vector<16x128xf32>
    %17 = vector.extract_strided_slice %16 {offsets = [2, 0], sizes = [8, 128], strides = [1, 1]} : vector<16x128xf32> to vector<8x128xf32>
    %18 = arith.addf %13, %17 : vector<8x128xf32>
    %c0_10 = arith.constant 0 : index
    %c0_11 = arith.constant 0 : index
    %19 = vector.load %arg4[%c0_10, %c0_11] : memref<1x128xf32, #tpu.memory_space<vmem>>, vector<1x128xf32>
    %20 = vector.broadcast %19 : vector<1x128xf32> to vector<8x128xf32>
    %21 = arith.addf %18, %20 : vector<8x128xf32>
    %22 = tpu.iota {dimensions = array<i32: 0>} : vector<8x1xi32>
    %23 = vector.broadcast %1 : i32 to vector<8x1xi32>
    %24 = arith.addi %23, %22 : vector<8x1xi32>
    %c12_i32 = arith.constant 12 : i32
    %25 = vector.broadcast %c12_i32 : i32 to vector<8x1xi32>
    %26 = arith.cmpi slt, %24, %25 : vector<8x1xi32>
    %c12_i32_12 = arith.constant 12 : i32
    %27 = arith.subi %c12_i32_12, %1 : i32
    %c8_i32_13 = arith.constant 8 : i32
    %28 = arith.minsi %c8_i32_13, %27 : i32
    %29 = arith.sitofp %28 : i32 to f32
    %cst_14 = arith.constant 0.000000e+00 : f32
    %30 = vector.shape_cast %26 : vector<8x1xi1> to vector<8x1xi1>
    %31 = vector.broadcast %30 : vector<8x1xi1> to vector<8x128xi1>
    %32 = vector.broadcast %cst_14 : f32 to vector<8x128xf32>
    %33 = arith.select %31, %21, %32 : vector<8x128xi1>, vector<8x128xf32>
    %cst_15 = arith.constant dense<0.000000e+00> : vector<128xf32>
    %34 = vector.multi_reduction <add>, %33, %cst_15 [0] : vector<8x128xf32> to vector<128xf32>
    %35 = vector.shape_cast %34 : vector<128xf32> to vector<1x128xf32>
    %36 = vector.broadcast %29 : f32 to vector<1x128xf32>
    %37 = arith.divf %35, %36 : vector<1x128xf32>
    %38 = vector.broadcast %37 : vector<1x128xf32> to vector<8x128xf32>
    %39 = arith.subf %33, %38 : vector<8x128xf32>
    %cst_16 = arith.constant 0.000000e+00 : f32
    %40 = vector.shape_cast %26 : vector<8x1xi1> to vector<8x1xi1>
    %41 = vector.broadcast %40 : vector<8x1xi1> to vector<8x128xi1>
    %42 = vector.broadcast %cst_16 : f32 to vector<8x128xf32>
    %43 = arith.select %41, %39, %42 : vector<8x128xi1>, vector<8x128xf32>
    %44 = arith.mulf %43, %43 : vector<8x128xf32>
    %cst_17 = arith.constant dense<0.000000e+00> : vector<128xf32>
    %45 = vector.multi_reduction <add>, %44, %cst_17 [0] : vector<8x128xf32> to vector<128xf32>
    %46 = vector.shape_cast %45 : vector<128xf32> to vector<1x128xf32>
    %c0_18 = arith.constant 0 : index
    %c0_19 = arith.constant 0 : index
    %47 = vector.load %arg6[%c0_18, %c0_19] : memref<8x128xf32, #tpu.memory_space<vmem>>, vector<1x128xf32>
    tpu.vector_store %arg6[%c0_18, %c0_19], %35 {strides = array<i32>} : memref<8x128xf32, #tpu.memory_space<vmem>>, vector<1x128xf32>,
    %c1_20 = arith.constant 1 : index
    %c0_21 = arith.constant 0 : index
    %48 = vector.load %arg6[%c1_20, %c0_21] : memref<8x128xf32, #tpu.memory_space<vmem>>, vector<1x128xf32>
    tpu.vector_store %arg6[%c1_20, %c0_21], %46 {strides = array<i32>} : memref<8x128xf32, #tpu.memory_space<vmem>>, vector<1x128xf32>,
    %49 = arith.truncf %21 : vector<8x128xf32> to vector<8x128xbf16>
    %c0_22 = arith.constant 0 : index
    %c0_23 = arith.constant 0 : index
    %c0_24 = arith.constant 0 : index
    %50 = vector.load %arg5[%c0_22, %c0_23, %c0_24] : memref<1x8x128xbf16, #tpu.memory_space<vmem>>, vector<1x8x128xbf16>
    %51 = vector.shape_cast %50 : vector<1x8x128xbf16> to vector<8x128xbf16>
    %52 = vector.shape_cast %49 : vector<8x128xbf16> to vector<1x8x128xbf16>
    tpu.vector_store %arg5[%c0_22, %c0_23, %c0_24], %52 {strides = array<i32>} : memref<1x8x128xbf16, #tpu.memory_space<vmem>>, vector<1x8x128xbf16>,
    return
  }
  func.func @transform_0(%arg0: i32, %arg1: i32) -> (i32, i32, i32) {
    %c0_i32 = arith.constant 0 : i32
    %c0_i32_0 = arith.constant 0 : i32
    %c0_i32_1 = arith.constant 0 : i32
    return %arg0, %c0_i32, %c0_i32_0 : i32, i32, i32
  }
  func.func @transform_1(%arg0: i32, %arg1: i32) -> (i32, i32, i32) {
    %c0_i32 = arith.constant 0 : i32
    %c0_i32_0 = arith.constant 0 : i32
    %c0_i32_1 = arith.constant 0 : i32
    %c0_i32_2 = arith.constant 0 : i32
    return %c0_i32, %c0_i32_0, %c0_i32_1 : i32, i32, i32
  }
  func.func @transform_2(%arg0: i32, %arg1: i32) -> (i32, i32) {
    %c0_i32 = arith.constant 0 : i32
    %c0_i32_0 = arith.constant 0 : i32
    %c0_i32_1 = arith.constant 0 : i32
    return %c0_i32, %c0_i32_0 : i32, i32
  }
  func.func @transform_3(%arg0: i32, %arg1: i32) -> (i32, i32, i32) {
    %c0_i32 = arith.constant 0 : i32
    %c0_i32_0 = arith.constant 0 : i32
    return %arg0, %arg1, %c0_i32 : i32, i32, i32
  }
  func.func @transform_4(%arg0: i32, %arg1: i32) -> (i32, i32) {
    %c2_i32 = arith.constant 2 : i32
    %0 = arith.muli %arg0, %c2_i32 : i32
    %1 = arith.addi %0, %arg1 : i32
    %c0_i32 = arith.constant 0 : i32
    %c0_i32_0 = arith.constant 0 : i32
    return %1, %c0_i32 : i32, i32
  }
}

module attributes {stable_mosaic.version = 11 : i64} {
  func.func @kernel(%arg0: i32, %arg1: i32, %arg2: memref<1x8x128xbf16, #tpu.memory_space<vmem>>, %arg3: memref<1x128xf32, #tpu.memory_space<vmem>>, %arg4: memref<1x128xf32, #tpu.memory_space<vmem>>, %arg5: memref<1x8x128xbf16, #tpu.memory_space<vmem>>) attributes {dimension_semantics = [#tpu.dimension_semantics<parallel>, #tpu.dimension_semantics<parallel>], iteration_bounds = array<i64: 2, 2>, scalar_prefetch = 0 : i64, scratch_operands = 0 : i64, tpu.core_type = #tpu.core_type<tc>, window_params = [{transform_indices = @transform_0, window_bounds = array<i64: 1, 8, 128>}, {pipeline_mode = #tpu.pipeline_mode<synchronous>, transform_indices = @transform_1, window_bounds = array<i64: 1, 128>}, {pipeline_mode = #tpu.pipeline_mode<synchronous>, transform_indices = @transform_2, window_bounds = array<i64: 1, 128>}, {transform_indices = @transform_3, window_bounds = array<i64: 1, 8, 128>}]} {
    %c0 = arith.constant 0 : index
    %c0_0 = arith.constant 0 : index
    %c0_1 = arith.constant 0 : index
    %0 = vector.load %arg2[%c0, %c0_0, %c0_1] : memref<1x8x128xbf16, #tpu.memory_space<vmem>>, vector<1x8x128xbf16>
    %1 = vector.shape_cast %0 : vector<1x8x128xbf16> to vector<8x128xbf16>
    %2 = arith.extf %1 : vector<8x128xbf16> to vector<8x128xf32>
    %c0_2 = arith.constant 0 : index
    %c0_3 = arith.constant 0 : index
    %3 = vector.load %arg3[%c0_2, %c0_3] : memref<1x128xf32, #tpu.memory_space<vmem>>, vector<1x128xf32>
    %4 = vector.broadcast %3 : vector<1x128xf32> to vector<8x128xf32>
    %5 = arith.mulf %2, %4 : vector<8x128xf32>
    %c0_4 = arith.constant 0 : index
    %c0_5 = arith.constant 0 : index
    %6 = vector.load %arg4[%c0_4, %c0_5] : memref<1x128xf32, #tpu.memory_space<vmem>>, vector<1x128xf32>
    %7 = vector.broadcast %6 : vector<1x128xf32> to vector<8x128xf32>
    %8 = arith.addf %5, %7 : vector<8x128xf32>
    %cst = arith.constant 5.000000e-01 : f32
    %9 = vector.broadcast %cst : f32 to vector<8x128xf32>
    %10 = arith.mulf %9, %8 : vector<8x128xf32>
    %cst_6 = arith.constant 0.707106769 : f32
    %11 = vector.broadcast %cst_6 : f32 to vector<8x128xf32>
    %12 = arith.mulf %8, %11 : vector<8x128xf32>
    %13 = math.erf %12 : vector<8x128xf32>
    %cst_7 = arith.constant 1.000000e+00 : f32
    %14 = vector.broadcast %cst_7 : f32 to vector<8x128xf32>
    %15 = arith.addf %14, %13 : vector<8x128xf32>
    %16 = arith.mulf %10, %15 : vector<8x128xf32>
    %c8_i32 = arith.constant 8 : i32
    %17 = arith.muli %arg1, %c8_i32 : i32
    %18 = tpu.iota {dimensions = array<i32: 0>} : vector<8x1xi32>
    %19 = vector.broadcast %17 : i32 to vector<8x1xi32>
    %20 = arith.addi %19, %18 : vector<8x1xi32>
    %c12_i32 = arith.constant 12 : i32
    %21 = vector.broadcast %c12_i32 : i32 to vector<8x1xi32>
    %22 = arith.cmpi slt, %20, %21 : vector<8x1xi32>
    %cst_8 = arith.constant 0.000000e+00 : f32
    %23 = vector.shape_cast %22 : vector<8x1xi1> to vector<8x1xi1>
    %24 = vector.broadcast %23 : vector<8x1xi1> to vector<8x128xi1>
    %25 = vector.broadcast %cst_8 : f32 to vector<8x128xf32>
    %26 = arith.select %24, %16, %25 : vector<8x128xi1>, vector<8x128xf32>
    %27 = arith.truncf %26 : vector<8x128xf32> to vector<8x128xbf16>
    %c0_9 = arith.constant 0 : index
    %c0_10 = arith.constant 0 : index
    %c0_11 = arith.constant 0 : index
    %28 = vector.load %arg5[%c0_9, %c0_10, %c0_11] : memref<1x8x128xbf16, #tpu.memory_space<vmem>>, vector<1x8x128xbf16>
    %29 = vector.shape_cast %28 : vector<1x8x128xbf16> to vector<8x128xbf16>
    %30 = vector.shape_cast %27 : vector<8x128xbf16> to vector<1x8x128xbf16>
    tpu.vector_store %arg5[%c0_9, %c0_10, %c0_11], %30 {strides = array<i32>} : memref<1x8x128xbf16, #tpu.memory_space<vmem>>, vector<1x8x128xbf16>,
    return
  }
  func.func @transform_0(%arg0: i32, %arg1: i32) -> (i32, i32, i32) {
    %c0_i32 = arith.constant 0 : i32
    %c0_i32_0 = arith.constant 0 : i32
    return %arg0, %arg1, %c0_i32 : i32, i32, i32
  }
  func.func @transform_1(%arg0: i32, %arg1: i32) -> (i32, i32) {
    %c0_i32 = arith.constant 0 : i32
    %c0_i32_0 = arith.constant 0 : i32
    %c0_i32_1 = arith.constant 0 : i32
    return %c0_i32, %c0_i32_0 : i32, i32
  }
  func.func @transform_2(%arg0: i32, %arg1: i32) -> (i32, i32) {
    %c0_i32 = arith.constant 0 : i32
    %c0_i32_0 = arith.constant 0 : i32
    %c0_i32_1 = arith.constant 0 : i32
    return %c0_i32, %c0_i32_0 : i32, i32
  }
  func.func @transform_3(%arg0: i32, %arg1: i32) -> (i32, i32, i32) {
    %c0_i32 = arith.constant 0 : i32
    %c0_i32_0 = arith.constant 0 : i32
    return %arg0, %arg1, %c0_i32 : i32, i32, i32
  }
}

module attributes {stable_mosaic.version = 11 : i64} {
  func.func @kernel(%arg0: i32, %arg1: i32, %arg2: memref<1x8x128xbf16, #tpu.memory_space<vmem>>, %arg3: memref<1x128xf32, #tpu.memory_space<vmem>>, %arg4: memref<1x128xf32, #tpu.memory_space<vmem>>, %arg5: memref<1x8x128xbf16, #tpu.memory_space<vmem>>, %arg6: memref<1x8x128xbf16, #tpu.memory_space<vmem>>) attributes {dimension_semantics = [#tpu.dimension_semantics<parallel>, #tpu.dimension_semantics<parallel>], iteration_bounds = array<i64: 2, 2>, scalar_prefetch = 0 : i64, scratch_operands = 0 : i64, tpu.core_type = #tpu.core_type<tc>, window_params = [{transform_indices = @transform_0, window_bounds = array<i64: 1, 8, 128>}, {pipeline_mode = #tpu.pipeline_mode<synchronous>, transform_indices = @transform_1, window_bounds = array<i64: 1, 128>}, {pipeline_mode = #tpu.pipeline_mode<synchronous>, transform_indices = @transform_2, window_bounds = array<i64: 1, 128>}, {transform_indices = @transform_3, window_bounds = array<i64: 1, 8, 128>}, {transform_indices = @transform_4, window_bounds = array<i64: 1, 8, 128>}]} {
    %c0 = arith.constant 0 : index
    %c0_0 = arith.constant 0 : index
    %c0_1 = arith.constant 0 : index
    %0 = vector.load %arg2[%c0, %c0_0, %c0_1] : memref<1x8x128xbf16, #tpu.memory_space<vmem>>, vector<1x8x128xbf16>
    %1 = vector.shape_cast %0 : vector<1x8x128xbf16> to vector<8x128xbf16>
    %2 = arith.extf %1 : vector<8x128xbf16> to vector<8x128xf32>
    %c0_2 = arith.constant 0 : index
    %c0_3 = arith.constant 0 : index
    %3 = vector.load %arg3[%c0_2, %c0_3] : memref<1x128xf32, #tpu.memory_space<vmem>>, vector<1x128xf32>
    %4 = vector.broadcast %3 : vector<1x128xf32> to vector<8x128xf32>
    %5 = arith.mulf %2, %4 : vector<8x128xf32>
    %c0_4 = arith.constant 0 : index
    %c0_5 = arith.constant 0 : index
    %6 = vector.load %arg4[%c0_4, %c0_5] : memref<1x128xf32, #tpu.memory_space<vmem>>, vector<1x128xf32>
    %7 = vector.broadcast %6 : vector<1x128xf32> to vector<8x128xf32>
    %8 = arith.addf %5, %7 : vector<8x128xf32>
    %cst = arith.constant 5.000000e-01 : f32
    %9 = vector.broadcast %cst : f32 to vector<8x128xf32>
    %10 = arith.mulf %9, %8 : vector<8x128xf32>
    %cst_6 = arith.constant 0.707106769 : f32
    %11 = vector.broadcast %cst_6 : f32 to vector<8x128xf32>
    %12 = arith.mulf %8, %11 : vector<8x128xf32>
    %13 = math.erf %12 : vector<8x128xf32>
    %cst_7 = arith.constant 1.000000e+00 : f32
    %14 = vector.broadcast %cst_7 : f32 to vector<8x128xf32>
    %15 = arith.addf %14, %13 : vector<8x128xf32>
    %16 = arith.mulf %10, %15 : vector<8x128xf32>
    %c0_8 = arith.constant 0 : index
    %c0_9 = arith.constant 0 : index
    %c0_10 = arith.constant 0 : index
    %17 = vector.load %arg5[%c0_8, %c0_9, %c0_10] : memref<1x8x128xbf16, #tpu.memory_space<vmem>>, vector<1x8x128xbf16>
    %18 = vector.shape_cast %17 : vector<1x8x128xbf16> to vector<8x128xbf16>
    %19 = arith.extf %18 : vector<8x128xbf16> to vector<8x128xf32>
    %20 = arith.addf %16, %19 : vector<8x128xf32>
    %c8_i32 = arith.constant 8 : i32
    %21 = arith.muli %arg1, %c8_i32 : i32
    %22 = tpu.iota {dimensions = array<i32: 0>} : vector<8x1xi32>
    %23 = vector.broadcast %21 : i32 to vector<8x1xi32>
    %24 = arith.addi %23, %22 : vector<8x1xi32>
    %c12_i32 = arith.constant 12 : i32
    %25 = vector.broadcast %c12_i32 : i32 to vector<8x1xi32>
    %26 = arith.cmpi slt, %24, %25 : vector<8x1xi32>
    %cst_11 = arith.constant 0.000000e+00 : f32
    %27 = vector.shape_cast %26 : vector<8x1xi1> to vector<8x1xi1>
    %28 = vector.broadcast %27 : vector<8x1xi1> to vector<8x128xi1>
    %29 = vector.broadcast %cst_11 : f32 to vector<8x128xf32>
    %30 = arith.select %28, %20, %29 : vector<8x128xi1>, vector<8x128xf32>
    %31 = arith.truncf %30 : vector<8x128xf32> to vector<8x128xbf16>
    %c0_12 = arith.constant 0 : index
    %c0_13 = arith.constant 0 : index
    %c0_14 = arith.constant 0 : index
    %32 = vector.load %arg6[%c0_12, %c0_13, %c0_14] : memref<1x8x128xbf16, #tpu.memory_space<vmem>>, vector<1x8x128xbf16>
    %33 = vector.shape_cast %32 : vector<1x8x128xbf16> to vector<8x128xbf16>
    %34 = vector.shape_cast %31 : vector<8x128xbf16> to vector<1x8x128xbf16>
    tpu.vector_store %arg6[%c0_12, %c0_13, %c0_14], %34 {strides = array<i32>} : memref<1x8x128xbf16, #tpu.memory_space<vmem>>, vector<1x8x128xbf16>,
    return
  }
  func.func @transform_0(%arg0: i32, %arg1: i32) -> (i32, i32, i32) {
    %c0_i32 = arith.constant 0 : i32
    %c0_i32_0 = arith.constant 0 : i32
    return %arg0, %arg1, %c0_i32 : i32, i32, i32
  }
  func.func @transform_1(%arg0: i32, %arg1: i32) -> (i32, i32) {
    %c0_i32 = arith.constant 0 : i32
    %c0_i32_0 = arith.constant 0 : i32
    %c0_i32_1 = arith.constant 0 : i32
    return %c0_i32, %c0_i32_0 : i32, i32
  }
  func.func @transform_2(%arg0: i32, %arg1: i32) -> (i32, i32) {
    %c0_i32 = arith.constant 0 : i32
    %c0_i32_0 = arith.constant 0 : i32
    %c0_i32_1 = arith.constant 0 : i32
    return %c0_i32, %c0_i32_0 : i32, i32
  }
  func.func @transform_3(%arg0: i32, %arg1: i32) -> (i32, i32, i32) {
    %c0_i32 = arith.constant 0 : i32
    %c0_i32_0 = arith.constant 0 : i32
    return %arg0, %arg1, %c0_i32 : i32, i32, i32
  }
  func.func @transform_4(%arg0: i32, %arg1: i32) -> (i32, i32, i32) {
    %c0_i32 = arith.constant 0 : i32
    %c0_i32_0 = arith.constant 0 : i32
    return %arg0, %arg1, %c0_i32 : i32, i32, i32
  }
}

</mosaic_0001>

<llo_original>
// kernel: conv_encoder3_res_bn_forward.15
$region0: #{conv_encoder3_res_bn_forward.15}
  #allocation0 [shape = 'u32[]', space=smem, size = 0x4, offset = 0x4, fixed_abs, tag = 'smem constant byte address 0x4 - core index']
  #allocation1 [shape = 'u32[72,128]{1,0:T(1,128)}', space=vmem, size = 0x9000, scoped, tag = 'internal scratch']
  %s0 = inlined_call_operand.vmem [shape: bf16[48,128], index: 0, kind: input, shape index: {}]
  %s1 = inlined_call_operand.vmem [shape: bf16[128,128], index: 1, kind: input, shape index: {}]
  %s2 = inlined_call_operand.vmem [shape: f32[1,128], index: 2, kind: input, shape index: {}]
  %s3 = inlined_call_operand.vmem [shape: bf16[48,128], index: 3, kind: output, shape index: {}]
  %s4 = sld [smem:[#allocation0]]
  $region45: #{conv_encoder3_res_bn_forward.15} parent=0
    _
  %s6 = ssub.s32 1, %s4
  %s7 = scalar_select 0, %s6, %s4
  loop: start=0, step=1, limit=5
  $region2: #{conv_encoder3_res_bn_forward.15} parent=0 // loop_pre_header
    _
  $region3: #{conv_encoder3_res_bn_forward.15} parent=0 // loop_header
    %s9 = sphi 0, %s13
    %p10 = scmp.ge.s32.totalorder %s9, 5
    %s19 = sphi 0, %s21
    %s22 = sphi 0, %s19
    %s23 = sphi 0, %s22
    %s39 = sphi 0, %s23
    %s43 = sphi 0, %s43
    %s45 = sphi 0, %s43
    %s46 = sphi 0, %s45
    %s60 = sphi 0, %s46
    %s64 = sphi 0, %s64
    %s66 = sphi 0, %s64
    %s67 = sphi 0, %s66
    %s81 = sphi 0, %s67
    %s87 = sphi 0, %s89
    %s90 = sphi 0, %s87
    %s91 = sphi 0, %s90
    %s107 = sphi 0, %s91
  $region4: #{conv_encoder3_res_bn_forward.15} parent=0 // loop_header_branch
    %12 = sbr.rel (%p10) target = $region8
  $region5: #{conv_encoder3_res_bn_forward.15} parent=0 // loop_body
    %s14 = ssub.s32 %s9, 1
    %s15 = ssub.s32 %s9, 2
    %s16 = sadd.s32 %s9, 1
    %s17 = ssub.s32 %s9, %s16
    %p18 = scmp.eq.s32.totalorder %s17, 0
    %s20 = sadd.s32 %s19, 1
    %s21 = scalar_select %p18, %s19, %s20
    %p24 = pneg %p18
    %p25 = scmp.eq.s32.totalorder %s9, 2
    %p26 = por %p24, %p25
    %p27 = scmp.ne.s32.totalorder %s19, %s22
    %p28 = scmp.eq.s32.totalorder %s9, 0
    %p29 = por %p27, %p28
    %p30 = scmp.ne.s32.totalorder %s19, %s22
    %p31 = scmp.eq.s32.totalorder %s14, 2
    %p32 = por %p30, %p31
    %p33 = scmp.ne.s32.totalorder %s22, %s23
    %p34 = scmp.eq.s32.totalorder %s14, 0
    %p35 = por %p33, %p34
    %p36 = scmp.ne.s32.totalorder %s22, %s23
    %p37 = scmp.eq.s32.totalorder %s15, 2
    %p38 = por %p36, %p37
    %p40 = scmp.ne.s32.totalorder %s23, %s39
    %p41 = scmp.eq.s32.totalorder %s15, 0
    %p42 = por %p40, %p41
    %s44 = sadd.s32 %s43, 1
    %p47 = scmp.eq.s32.totalorder %s9, 2
    %p48 = scmp.ne.s32.totalorder %s43, %s45
    %p49 = scmp.eq.s32.totalorder %s9, 0
    %p50 = por %p48, %p49
    %p51 = scmp.ne.s32.totalorder %s43, %s45
    %p52 = scmp.eq.s32.totalorder %s14, 2
    %p53 = por %p51, %p52
    %p54 = scmp.ne.s32.totalorder %s45, %s46
    %p55 = scmp.eq.s32.totalorder %s14, 0
    %p56 = por %p54, %p55
    %p57 = scmp.ne.s32.totalorder %s45, %s46
    %p58 = scmp.eq.s32.totalorder %s15, 2
    %p59 = por %p57, %p58
    %p61 = scmp.ne.s32.totalorder %s46, %s60
    %p62 = scmp.eq.s32.totalorder %s15, 0
    %p63 = por %p61, %p62
    %s65 = sadd.s32 %s64, 1
    %p68 = scmp.eq.s32.totalorder %s9, 2
    %p69 = scmp.ne.s32.totalorder %s64, %s66
    %p70 = scmp.eq.s32.totalorder %s9, 0
    %p71 = por %p69, %p70
    %p72 = scmp.ne.s32.totalorder %s64, %s66
    %p73 = scmp.eq.s32.totalorder %s14, 2
    %p74 = por %p72, %p73
    %p75 = scmp.ne.s32.totalorder %s66, %s67
    %p76 = scmp.eq.s32.totalorder %s14, 0
    %p77 = por %p75, %p76
    %p78 = scmp.ne.s32.totalorder %s66, %s67
    %p79 = scmp.eq.s32.totalorder %s15, 2
    %p80 = por %p78, %p79
    %p82 = scmp.ne.s32.totalorder %s67, %s81
    %p83 = scmp.eq.s32.totalorder %s15, 0
    %p84 = por %p82, %p83
    %s85 = ssub.s32 %s9, %s16
    %p86 = scmp.eq.s32.totalorder %s85, 0
    %s88 = sadd.s32 %s87, 1
    %s89 = scalar_select %p86, %s87, %s88
    %p92 = pneg %p86
    %p93 = scmp.eq.s32.totalorder %s9, 2
    %p94 = por %p92, %p93
    %p95 = scmp.ne.s32.totalorder %s87, %s90
    %p96 = scmp.eq.s32.totalorder %s9, 0
    %p97 = por %p95, %p96
    %p98 = scmp.ne.s32.totalorder %s87, %s90
    %p99 = scmp.eq.s32.totalorder %s14, 2
    %p100 = por %p98, %p99
    %p101 = scmp.ne.s32.totalorder %s90, %s91
    %p102 = scmp.eq.s32.totalorder %s14, 0
    %p103 = por %p101, %p102
    %p104 = scmp.ne.s32.totalorder %s90, %s91
    %p105 = scmp.eq.s32.totalorder %s15, 2
    %p106 = por %p104, %p105
    %p108 = scmp.ne.s32.totalorder %s91, %s107
    %p109 = scmp.eq.s32.totalorder %s15, 0
    %p110 = por %p108, %p109
    %p111 = scmp.le.s32.totalorder 1, %s9
    %p112 = scmp.lt.s32.totalorder %s9, 4
    %p113 = pnand %p111, %p112
    %p114 = pneg %p113
    // Predicated region
    $region9: #{conv_encoder3_res_bn_forward.15} parent=5 // pred_check
      _
    $region10: #{conv_encoder3_res_bn_forward.15} parent=5 // pred_check_branch
      %116 = sbr.rel (%p113) target = $region12
    $region11: #{conv_encoder3_res_bn_forward.15} parent=5 // pred_region
      %s117 = ssub.s32 %s9, 1
      // Predicated region
      $region13: #{conv_encoder3_res_bn_forward.15} parent=11 // pred_check
        %p118 = pneg %p56
      $region14: #{conv_encoder3_res_bn_forward.15} parent=11 // pred_check_branch
        %120 = sbr.rel (%p118) target = $region16
      $region15: #{conv_encoder3_res_bn_forward.15} parent=11 // pred_region
        _
      $region16: #{conv_encoder3_res_bn_forward.15} parent=11 // pred_fallthru
        _
      // Predicated region
      $region17: #{conv_encoder3_res_bn_forward.15} parent=11 // pred_check
        %p121 = pneg %p77
      $region18: #{conv_encoder3_res_bn_forward.15} parent=11 // pred_check_branch
        %123 = sbr.rel (%p121) target = $region20
      $region19: #{conv_encoder3_res_bn_forward.15} parent=11 // pred_region
        _
      $region20: #{conv_encoder3_res_bn_forward.15} parent=11 // pred_fallthru
        _
    $region12: #{conv_encoder3_res_bn_forward.15} parent=5 // pred_fallthru
      _
    %p124 = scmp.lt.s32.totalorder %s9, 3
    // Predicated region
    $region21: #{conv_encoder3_res_bn_forward.15} parent=5 // pred_check
      %p125 = pneg %p124
    $region22: #{conv_encoder3_res_bn_forward.15} parent=5 // pred_check_branch
      %127 = sbr.rel (%p125) target = $region24
    $region23: #{conv_encoder3_res_bn_forward.15} parent=5 // pred_region
      // Predicated region
      $region25: #{conv_encoder3_res_bn_forward.15} parent=23 // pred_check
        %p128 = pneg %p29
      $region26: #{conv_encoder3_res_bn_forward.15} parent=23 // pred_check_branch
        %130 = sbr.rel (%p128) target = $region28
      $region27: #{conv_encoder3_res_bn_forward.15} parent=23 // pred_region
        %s131 = smul.u32 2, %s9
        %p132 = scmp.lt.s32.totalorder %s131, 5
        %s133 = scalar_select %p132, %s131, 5
        %s134 = smul.addr %s133, 4
        %s135 = scalar_lea.vmem %s0, %s134
        %s136 = smul.u32 2, %s9
      $region28: #{conv_encoder3_res_bn_forward.15} parent=23 // pred_fallthru
        _
    $region24: #{conv_encoder3_res_bn_forward.15} parent=5 // pred_fallthru
      _
    %p137 = scmp.le.s32.totalorder 1, %s9
    %p138 = scmp.lt.s32.totalorder %s9, 4
    %p139 = pnand %p137, %p138
    %p140 = pneg %p139
    // Predicated region
    $region29: #{conv_encoder3_res_bn_forward.15} parent=5 // pred_check
      _
    $region30: #{conv_encoder3_res_bn_forward.15} parent=5 // pred_check_branch
      %142 = sbr.rel (%p139) target = $region32
    $region31: #{conv_encoder3_res_bn_forward.15} parent=5 // pred_region
      %s143 = ssub.s32 %s9, 1
      %s144 = smul.u32 2, %s14
      %p145 = scmp.lt.s32.totalorder %s144, 5
      %s146 = scalar_select %p145, %s144, 5
      %s147 = smul.addr %s146, 4
      %s148 = scalar_lea.vmem %s0, %s147
      %p149 = pneg %p35
      %p150 = pneg %p32
      %p151 = pneg %p56
      %p152 = pneg %p53
      %p153 = pneg %p77
      %p154 = pneg %p74
      %p155 = pneg %p103
      %p156 = pneg %p100
      %s157 = smul.u32 2, %s14
      %p158 = scmp.lt.s32.totalorder %s157, 5
      %s159 = scalar_select %p158, %s157, 5
      %s160 = smul.addr %s159, 4
      %s161 = scalar_lea.vmem %s3, %s160
      %s162 = smul.u32 2, %s14
      %p163 = scmp.lt.s32.totalorder %s162, 5
      %s164 = scalar_select %p163, %s162, 5
      %s165 = smul.addr %s164, 4
      %s166 = scalar_lea.vmem %s0, %s165
      %s167 = smul.u32 2, %s14
      %s168 = smul.u32 2, %s14
      %p169 = scmp.lt.s32.totalorder %s168, 5
      %s170 = scalar_select %p169, %s168, 5
      %s171 = smul.addr %s170, 4
      %s172 = scalar_lea.vmem %s3, %s171
      %s173 = smul.u32 2, %s14
      %v174 = vld [vmem:[%s166] sm:$0xf]
      %v175 = vld [vmem:[%s166 + $0x4] sm:$0xf]
      %v176 = vld [vmem:[%s1] sm:$0xf]
      %v177 = vld [vmem:[%s1 + $0x4] sm:$0xf]
      %v178 = vld [vmem:[%s1 + $0x8] sm:$0xf]
      %v179 = vld [vmem:[%s1 + $0xc] sm:$0xf]
      %v180 = vld [vmem:[%s1 + $0x10] sm:$0xf]
      %v181 = vld [vmem:[%s1 + $0x14] sm:$0xf]
      %v182 = vld [vmem:[%s1 + $0x18] sm:$0xf]
      %v183 = vld [vmem:[%s1 + $0x1c] sm:$0xf]
      %v184 = vld [vmem:[%s1 + $0x20] sm:$0xf]
      %v185 = vld [vmem:[%s1 + $0x24] sm:$0xf]
      %v186 = vld [vmem:[%s1 + $0x28] sm:$0xf]
      %v187 = vld [vmem:[%s1 + $0x2c] sm:$0xf]
      %v188 = vld [vmem:[%s1 + $0x30] sm:$0xf]
      %v189 = vld [vmem:[%s1 + $0x34] sm:$0xf]
      %v190 = vld [vmem:[%s1 + $0x38] sm:$0xf]
      %v191 = vld [vmem:[%s1 + $0x3c] sm:$0xf]
      %v192 = vld [vmem:[%s2] sm:$0x1]
      %v194 = vperm.slane %v192, 0
      %v198 = vunpack.c.l.b16 %v174
      %v199 = vunpack.c.l.b16 %v175
      %v200 = vpack.c.b16 %v199, %v198
      %v218 = vunpack.c.l.b16 %v176
      %v219 = vunpack.c.l.b16 %v177
      %v220 = vunpack.c.l.b16 %v178
      %v221 = vunpack.c.l.b16 %v179
      %v222 = vunpack.c.l.b16 %v180
      %v223 = vunpack.c.l.b16 %v181
      %v224 = vunpack.c.l.b16 %v182
      %v225 = vunpack.c.l.b16 %v183
      %v226 = vunpack.c.l.b16 %v184
      %v227 = vunpack.c.l.b16 %v185
      %v228 = vunpack.c.l.b16 %v186
      %v229 = vunpack.c.l.b16 %v187
      %v230 = vunpack.c.l.b16 %v188
      %v231 = vunpack.c.l.b16 %v189
      %v232 = vunpack.c.l.b16 %v190
      %v233 = vunpack.c.l.b16 %v191
      %v234 = vpack.c.b16 %v219, %v218
      %v235 = vpack.c.b16 %v221, %v220
      %v236 = vpack.c.b16 %v223, %v222
      %v237 = vpack.c.b16 %v225, %v224
      %v238 = vpack.c.b16 %v227, %v226
      %v239 = vpack.c.b16 %v229, %v228
      %v240 = vpack.c.b16 %v231, %v230
      %v241 = vpack.c.b16 %v233, %v232
      %250 = vmatpush.bf16.msra.mxu0 %v241
      %251 = vmatpush.bf16.msra.mxu0 %v240
      %252 = vmatpush.bf16.msra.mxu0 %v239
      %253 = vmatpush.bf16.msra.mxu0 %v238
      %254 = vmatpush.bf16.msra.mxu0 %v237
      %255 = vmatpush.bf16.msra.mxu0 %v236
      %256 = vmatpush.bf16.msra.mxu0 %v235
      %257 = vmatpush.bf16.msra.mxu0 %v234
      %258 = vmatmul.bf16.gmra.mxu0 %v200
      %v259 = vpop.f32.mrf.mxu0
      %v260 = vadd.f32 %v194, %v259
      %v261 = vpop.f32.mrf.mxu0
      %v262 = vadd.f32 %v194, %v261
      %263 = vdwg.mxu0
      %v264 = vpack.c.bf16 %v260, %v260
      %v265 = vpack.c.bf16 %v262, %v262
      %266 = vst [vmem:[%s172] sm:$0xf] %v264
      %267 = vst [vmem:[%s172 + $0x4] sm:$0xf] %v265
      %s268 = smul.u32 2, %s14
      %p269 = scmp.lt.s32.totalorder %s268, 5
      %s270 = scalar_select %p269, %s268, 5
      %s271 = smul.addr %s270, 4
      %s272 = scalar_lea.vmem %s3, %s271
      // Predicated region
      $region33: #{conv_encoder3_res_bn_forward.15} parent=31 // pred_check
        %p273 = pneg %p100
      $region34: #{conv_encoder3_res_bn_forward.15} parent=31 // pred_check_branch
        %275 = sbr.rel (%p273) target = $region36
      $region35: #{conv_encoder3_res_bn_forward.15} parent=31 // pred_region
        %s276 = smul.u32 2, %s14
      $region36: #{conv_encoder3_res_bn_forward.15} parent=31 // pred_fallthru
        _
    $region32: #{conv_encoder3_res_bn_forward.15} parent=5 // pred_fallthru
      _
    %p277 = scmp.le.s32.totalorder 2, %s9
    // Predicated region
    $region37: #{conv_encoder3_res_bn_forward.15} parent=5 // pred_check
      %p278 = pneg %p277
    $region38: #{conv_encoder3_res_bn_forward.15} parent=5 // pred_check_branch
      %280 = sbr.rel (%p278) target = $region40
    $region39: #{conv_encoder3_res_bn_forward.15} parent=5 // pred_region
      %s281 = ssub.s32 %s9, 2
      // Predicated region
      $region41: #{conv_encoder3_res_bn_forward.15} parent=39 // pred_check
        %p282 = pneg %p106
      $region42: #{conv_encoder3_res_bn_forward.15} parent=39 // pred_check_branch
        %284 = sbr.rel (%p282) target = $region44
      $region43: #{conv_encoder3_res_bn_forward.15} parent=39 // pred_region
        %s285 = smul.u32 2, %s15
        %p286 = scmp.lt.s32.totalorder %s285, 5
        %s287 = scalar_select %p286, %s285, 5
        %s288 = smul.addr %s287, 4
        %s289 = scalar_lea.vmem %s3, %s288
      $region44: #{conv_encoder3_res_bn_forward.15} parent=39 // pred_fallthru
        _
    $region40: #{conv_encoder3_res_bn_forward.15} parent=5 // pred_fallthru
      _
  $region6: #{conv_encoder3_res_bn_forward.15} parent=0 // loop_footer
    %s13 = sadd.s32 1, %s9
  $region7: #{conv_encoder3_res_bn_forward.15} parent=0 // loop_footer_branch
    %8 = sbr.rel target = $region3
  $region8: #{conv_encoder3_res_bn_forward.15} parent=0 // loop_exit
    _

// kernel: conv_encoder3_res_bn_forward.16
$region0: #{conv_encoder3_res_bn_forward.16}
  #allocation0 [shape = 'u32[]', space=smem, size = 0x4, offset = 0x4, fixed_abs, tag = 'smem constant byte address 0x4 - core index']
  #allocation1 [shape = 'u32[72,128]{1,0:T(1,128)}', space=vmem, size = 0x9000, scoped, tag = 'internal scratch']
  %s0 = inlined_call_operand.vmem [shape: bf16[32,256], index: 0, kind: input, shape index: {}]
  %s1 = inlined_call_operand.vmem [shape: bf16[256,128], index: 1, kind: input, shape index: {}]
  %s2 = inlined_call_operand.vmem [shape: f32[1,128], index: 2, kind: input, shape index: {}]
  %s3 = inlined_call_operand.vmem [shape: bf16[32,128], index: 3, kind: output, shape index: {0}]
  %s4 = inlined_call_operand.vmem [shape: f32[16,128], index: 4, kind: output, shape index: {1}]
  %5 = xla_tuple %s3, %s4
  %s6 = sld [smem:[#allocation0]]
  $region53: #{conv_encoder3_res_bn_forward.16} parent=0
    _
  %s8 = ssub.s32 1, %s6
  %s9 = scalar_select 0, %s8, %s6
  loop: start=0, step=1, limit=4
  $region2: #{conv_encoder3_res_bn_forward.16} parent=0 // loop_pre_header
    _
  $region3: #{conv_encoder3_res_bn_forward.16} parent=0 // loop_header
    %s11 = sphi 0, %s15
    %p12 = scmp.ge.s32.totalorder %s11, 4
    %s21 = sphi 0, %s23
    %s24 = sphi 0, %s21
    %s25 = sphi 0, %s24
    %s41 = sphi 0, %s25
    %s45 = sphi 0, %s45
    %s47 = sphi 0, %s45
    %s48 = sphi 0, %s47
    %s62 = sphi 0, %s48
    %s66 = sphi 0, %s66
    %s68 = sphi 0, %s66
    %s69 = sphi 0, %s68
    %s83 = sphi 0, %s69
    %s89 = sphi 0, %s91
    %s92 = sphi 0, %s89
    %s93 = sphi 0, %s92
    %s109 = sphi 0, %s93
    %s115 = sphi 0, %s117
    %s118 = sphi 0, %s115
    %s119 = sphi 0, %s118
    %s135 = sphi 0, %s119
  $region4: #{conv_encoder3_res_bn_forward.16} parent=0 // loop_header_branch
    %14 = sbr.rel (%p12) target = $region8
  $region5: #{conv_encoder3_res_bn_forward.16} parent=0 // loop_body
    %s16 = ssub.s32 %s11, 1
    %s17 = ssub.s32 %s11, 2
    %s18 = sadd.s32 %s11, 1
    %s19 = ssub.s32 %s11, %s18
    %p20 = scmp.eq.s32.totalorder %s19, 0
    %s22 = sadd.s32 %s21, 1
    %s23 = scalar_select %p20, %s21, %s22
    %p26 = pneg %p20
    %p27 = scmp.eq.s32.totalorder %s11, 1
    %p28 = por %p26, %p27
    %p29 = scmp.ne.s32.totalorder %s21, %s24
    %p30 = scmp.eq.s32.totalorder %s11, 0
    %p31 = por %p29, %p30
    %p32 = scmp.ne.s32.totalorder %s21, %s24
    %p33 = scmp.eq.s32.totalorder %s16, 1
    %p34 = por %p32, %p33
    %p35 = scmp.ne.s32.totalorder %s24, %s25
    %p36 = scmp.eq.s32.totalorder %s16, 0
    %p37 = por %p35, %p36
    %p38 = scmp.ne.s32.totalorder %s24, %s25
    %p39 = scmp.eq.s32.totalorder %s17, 1
    %p40 = por %p38, %p39
    %p42 = scmp.ne.s32.totalorder %s25, %s41
    %p43 = scmp.eq.s32.totalorder %s17, 0
    %p44 = por %p42, %p43
    %s46 = sadd.s32 %s45, 1
    %p49 = scmp.eq.s32.totalorder %s11, 1
    %p50 = scmp.ne.s32.totalorder %s45, %s47
    %p51 = scmp.eq.s32.totalorder %s11, 0
    %p52 = por %p50, %p51
    %p53 = scmp.ne.s32.totalorder %s45, %s47
    %p54 = scmp.eq.s32.totalorder %s16, 1
    %p55 = por %p53, %p54
    %p56 = scmp.ne.s32.totalorder %s47, %s48
    %p57 = scmp.eq.s32.totalorder %s16, 0
    %p58 = por %p56, %p57
    %p59 = scmp.ne.s32.totalorder %s47, %s48
    %p60 = scmp.eq.s32.totalorder %s17, 1
    %p61 = por %p59, %p60
    %p63 = scmp.ne.s32.totalorder %s48, %s62
    %p64 = scmp.eq.s32.totalorder %s17, 0
    %p65 = por %p63, %p64
    %s67 = sadd.s32 %s66, 1
    %p70 = scmp.eq.s32.totalorder %s11, 1
    %p71 = scmp.ne.s32.totalorder %s66, %s68
    %p72 = scmp.eq.s32.totalorder %s11, 0
    %p73 = por %p71, %p72
    %p74 = scmp.ne.s32.totalorder %s66, %s68
    %p75 = scmp.eq.s32.totalorder %s16, 1
    %p76 = por %p74, %p75
    %p77 = scmp.ne.s32.totalorder %s68, %s69
    %p78 = scmp.eq.s32.totalorder %s16, 0
    %p79 = por %p77, %p78
    %p80 = scmp.ne.s32.totalorder %s68, %s69
    %p81 = scmp.eq.s32.totalorder %s17, 1
    %p82 = por %p80, %p81
    %p84 = scmp.ne.s32.totalorder %s69, %s83
    %p85 = scmp.eq.s32.totalorder %s17, 0
    %p86 = por %p84, %p85
    %s87 = ssub.s32 %s11, %s18
    %p88 = scmp.eq.s32.totalorder %s87, 0
    %s90 = sadd.s32 %s89, 1
    %s91 = scalar_select %p88, %s89, %s90
    %p94 = pneg %p88
    %p95 = scmp.eq.s32.totalorder %s11, 1
    %p96 = por %p94, %p95
    %p97 = scmp.ne.s32.totalorder %s89, %s92
    %p98 = scmp.eq.s32.totalorder %s11, 0
    %p99 = por %p97, %p98
    %p100 = scmp.ne.s32.totalorder %s89, %s92
    %p101 = scmp.eq.s32.totalorder %s16, 1
    %p102 = por %p100, %p101
    %p103 = scmp.ne.s32.totalorder %s92, %s93
    %p104 = scmp.eq.s32.totalorder %s16, 0
    %p105 = por %p103, %p104
    %p106 = scmp.ne.s32.totalorder %s92, %s93
    %p107 = scmp.eq.s32.totalorder %s17, 1
    %p108 = por %p106, %p107
    %p110 = scmp.ne.s32.totalorder %s93, %s109
    %p111 = scmp.eq.s32.totalorder %s17, 0
    %p112 = por %p110, %p111
    %s113 = ssub.s32 %s11, %s18
    %p114 = scmp.eq.s32.totalorder %s113, 0
    %s116 = sadd.s32 %s115, 1
    %s117 = scalar_select %p114, %s115, %s116
    %p120 = pneg %p114
    %p121 = scmp.eq.s32.totalorder %s11, 1
    %p122 = por %p120, %p121
    %p123 = scmp.ne.s32.totalorder %s115, %s118
    %p124 = scmp.eq.s32.totalorder %s11, 0
    %p125 = por %p123, %p124
    %p126 = scmp.ne.s32.totalorder %s115, %s118
    %p127 = scmp.eq.s32.totalorder %s16, 1
    %p128 = por %p126, %p127
    %p129 = scmp.ne.s32.totalorder %s118, %s119
    %p130 = scmp.eq.s32.totalorder %s16, 0
    %p131 = por %p129, %p130
    %p132 = scmp.ne.s32.totalorder %s118, %s119
    %p133 = scmp.eq.s32.totalorder %s17, 1
    %p134 = por %p132, %p133
    %p136 = scmp.ne.s32.totalorder %s119, %s135
    %p137 = scmp.eq.s32.totalorder %s17, 0
    %p138 = por %p136, %p137
    %p139 = scmp.le.s32.totalorder 1, %s11
    %p140 = scmp.lt.s32.totalorder %s11, 3
    %p141 = pnand %p139, %p140
    %p142 = pneg %p141
    // Predicated region
    $region9: #{conv_encoder3_res_bn_forward.16} parent=5 // pred_check
      _
    $region10: #{conv_encoder3_res_bn_forward.16} parent=5 // pred_check_branch
      %144 = sbr.rel (%p141) target = $region12
    $region11: #{conv_encoder3_res_bn_forward.16} parent=5 // pred_region
      %s145 = ssub.s32 %s11, 1
      // Predicated region
      $region13: #{conv_encoder3_res_bn_forward.16} parent=11 // pred_check
        %p146 = pneg %p58
      $region14: #{conv_encoder3_res_bn_forward.16} parent=11 // pred_check_branch
        %148 = sbr.rel (%p146) target = $region16
      $region15: #{conv_encoder3_res_bn_forward.16} parent=11 // pred_region
        _
      $region16: #{conv_encoder3_res_bn_forward.16} parent=11 // pred_fallthru
        _
      // Predicated region
      $region17: #{conv_encoder3_res_bn_forward.16} parent=11 // pred_check
        %p149 = pneg %p79
      $region18: #{conv_encoder3_res_bn_forward.16} parent=11 // pred_check_branch
        %151 = sbr.rel (%p149) target = $region20
      $region19: #{conv_encoder3_res_bn_forward.16} parent=11 // pred_region
        _
      $region20: #{conv_encoder3_res_bn_forward.16} parent=11 // pred_fallthru
        _
    $region12: #{conv_encoder3_res_bn_forward.16} parent=5 // pred_fallthru
      _
    %p152 = scmp.lt.s32.totalorder %s11, 2
    // Predicated region
    $region21: #{conv_encoder3_res_bn_forward.16} parent=5 // pred_check
      %p153 = pneg %p152
    $region22: #{conv_encoder3_res_bn_forward.16} parent=5 // pred_check_branch
      %155 = sbr.rel (%p153) target = $region24
    $region23: #{conv_encoder3_res_bn_forward.16} parent=5 // pred_region
      // Predicated region
      $region25: #{conv_encoder3_res_bn_forward.16} parent=23 // pred_check
        %p156 = pneg %p31
      $region26: #{conv_encoder3_res_bn_forward.16} parent=23 // pred_check_branch
        %158 = sbr.rel (%p156) target = $region28
      $region27: #{conv_encoder3_res_bn_forward.16} parent=23 // pred_region
        %s159 = smul.u32 2, %s11
        %p160 = scmp.lt.s32.totalorder %s159, 3
        %s161 = scalar_select %p160, %s159, 3
        %s162 = smul.addr %s161, 2
        %s163 = smul.addr %s162, 4
        %s164 = scalar_lea.vmem %s0, %s163
        %s165 = smul.u32 2, %s11
      $region28: #{conv_encoder3_res_bn_forward.16} parent=23 // pred_fallthru
        _
    $region24: #{conv_encoder3_res_bn_forward.16} parent=5 // pred_fallthru
      _
    %p166 = scmp.le.s32.totalorder 1, %s11
    %p167 = scmp.lt.s32.totalorder %s11, 3
    %p168 = pnand %p166, %p167
    %p169 = pneg %p168
    // Predicated region
    $region29: #{conv_encoder3_res_bn_forward.16} parent=5 // pred_check
      _
    $region30: #{conv_encoder3_res_bn_forward.16} parent=5 // pred_check_branch
      %171 = sbr.rel (%p168) target = $region32
    $region31: #{conv_encoder3_res_bn_forward.16} parent=5 // pred_region
      %s172 = ssub.s32 %s11, 1
      %s173 = smul.u32 2, %s16
      %p174 = scmp.lt.s32.totalorder %s173, 3
      %s175 = scalar_select %p174, %s173, 3
      %s176 = smul.addr %s175, 2
      %s177 = smul.addr %s176, 4
      %s178 = scalar_lea.vmem %s0, %s177
      %p179 = pneg %p37
      %p180 = pneg %p34
      %p181 = pneg %p58
      %p182 = pneg %p55
      %p183 = pneg %p79
      %p184 = pneg %p76
      %p185 = pneg %p105
      %p186 = pneg %p102
      %s187 = smul.u32 2, %s16
      %p188 = scmp.lt.s32.totalorder %s187, 3
      %s189 = scalar_select %p188, %s187, 3
      %s190 = smul.addr %s189, 4
      %s191 = scalar_lea.vmem %s3, %s190
      %p192 = pneg %p131
      %p193 = pneg %p128
      %p194 = scmp.lt.s32.totalorder %s16, 1
      %s195 = scalar_select %p194, %s16, 1
      %s196 = smul.addr %s195, 8
      %s197 = scalar_lea.vmem %s4, %s196
      %s198 = smul.u32 2, %s16
      %p199 = scmp.lt.s32.totalorder %s198, 3
      %s200 = scalar_select %p199, %s198, 3
      %s201 = smul.addr %s200, 2
      %s202 = smul.addr %s201, 4
      %s203 = scalar_lea.vmem %s0, %s202
      %s204 = smul.u32 2, %s16
      %s205 = smul.u32 2, %s16
      %p206 = scmp.lt.s32.totalorder %s205, 3
      %s207 = scalar_select %p206, %s205, 3
      %s208 = smul.addr %s207, 4
      %s209 = scalar_lea.vmem %s3, %s208
      %s210 = smul.u32 2, %s16
      %p211 = scmp.lt.s32.totalorder %s16, 1
      %s212 = scalar_select %p211, %s16, 1
      %s213 = smul.addr %s212, 8
      %s214 = scalar_lea.vmem %s4, %s213
      %v215 = vld [vmem:[%s203] sm:$0xff]
      %v216 = vld [vmem:[%s203 + $0x8] sm:$0xff]
      %v217 = vld [vmem:[%s1] sm:$0xf]
      %v218 = vld [vmem:[%s1 + $0x4] sm:$0xf]
      %v219 = vld [vmem:[%s1 + $0x8] sm:$0xf]
      %v220 = vld [vmem:[%s1 + $0xc] sm:$0xf]
      %v221 = vld [vmem:[%s1 + $0x10] sm:$0xf]
      %v222 = vld [vmem:[%s1 + $0x14] sm:$0xf]
      %v223 = vld [vmem:[%s1 + $0x18] sm:$0xf]
      %v224 = vld [vmem:[%s1 + $0x1c] sm:$0xf]
      %v225 = vld [vmem:[%s1 + $0x20] sm:$0xf]
      %v226 = vld [vmem:[%s1 + $0x24] sm:$0xf]
      %v227 = vld [vmem:[%s1 + $0x28] sm:$0xf]
      %v228 = vld [vmem:[%s1 + $0x2c] sm:$0xf]
      %v229 = vld [vmem:[%s1 + $0x30] sm:$0xf]
      %v230 = vld [vmem:[%s1 + $0x34] sm:$0xf]
      %v231 = vld [vmem:[%s1 + $0x38] sm:$0xf]
      %v232 = vld [vmem:[%s1 + $0x3c] sm:$0xf]
      %v233 = vld [vmem:[%s1 + $0x40] sm:$0xf]
      %v234 = vld [vmem:[%s1 + $0x44] sm:$0xf]
      %v235 = vld [vmem:[%s1 + $0x48] sm:$0xf]
      %v236 = vld [vmem:[%s1 + $0x4c] sm:$0xf]
      %v237 = vld [vmem:[%s1 + $0x50] sm:$0xf]
      %v238 = vld [vmem:[%s1 + $0x54] sm:$0xf]
      %v239 = vld [vmem:[%s1 + $0x58] sm:$0xf]
      %v240 = vld [vmem:[%s1 + $0x5c] sm:$0xf]
      %v241 = vld [vmem:[%s1 + $0x60] sm:$0xf]
      %v242 = vld [vmem:[%s1 + $0x64] sm:$0xf]
      %v243 = vld [vmem:[%s1 + $0x68] sm:$0xf]
      %v244 = vld [vmem:[%s1 + $0x6c] sm:$0xf]
      %v245 = vld [vmem:[%s1 + $0x70] sm:$0xf]
      %v246 = vld [vmem:[%s1 + $0x74] sm:$0xf]
      %v247 = vld [vmem:[%s1 + $0x78] sm:$0xf]
      %v248 = vld [vmem:[%s1 + $0x7c] sm:$0xf]
      %v249 = vld [vmem:[%s2] sm:$0x1]
      %v251 = vperm.slane %v249, 0
      %v255 = vunpack.c.l.b16 %v215
      %v256 = vunpack.c.h.b16 %v215
      %v257 = vunpack.c.l.b16 %v216
      %v258 = vunpack.c.h.b16 %v216
      %v259 = vpack.c.b16 %v257, %v255
      %v260 = vpack.c.b16 %v258, %v256
      %v295 = vunpack.c.l.b16 %v217
      %v296 = vunpack.c.l.b16 %v218
      %v297 = vunpack.c.l.b16 %v219
      %v298 = vunpack.c.l.b16 %v220
      %v299 = vunpack.c.l.b16 %v221
      %v300 = vunpack.c.l.b16 %v222
      %v301 = vunpack.c.l.b16 %v223
      %v302 = vunpack.c.l.b16 %v224
      %v303 = vunpack.c.l.b16 %v225
      %v304 = vunpack.c.l.b16 %v226
      %v305 = vunpack.c.l.b16 %v227
      %v306 = vunpack.c.l.b16 %v228
      %v307 = vunpack.c.l.b16 %v229
      %v308 = vunpack.c.l.b16 %v230
      %v309 = vunpack.c.l.b16 %v231
      %v310 = vunpack.c.l.b16 %v232
      %v311 = vunpack.c.l.b16 %v233
      %v312 = vunpack.c.l.b16 %v234
      %v313 = vunpack.c.l.b16 %v235
      %v314 = vunpack.c.l.b16 %v236
      %v315 = vunpack.c.l.b16 %v237
      %v316 = vunpack.c.l.b16 %v238
      %v317 = vunpack.c.l.b16 %v239
      %v318 = vunpack.c.l.b16 %v240
      %v319 = vunpack.c.l.b16 %v241
      %v320 = vunpack.c.l.b16 %v242
      %v321 = vunpack.c.l.b16 %v243
      %v322 = vunpack.c.l.b16 %v244
      %v323 = vunpack.c.l.b16 %v245
      %v324 = vunpack.c.l.b16 %v246
      %v325 = vunpack.c.l.b16 %v247
      %v326 = vunpack.c.l.b16 %v248
      %v327 = vpack.c.b16 %v296, %v295
      %v328 = vpack.c.b16 %v298, %v297
      %v329 = vpack.c.b16 %v300, %v299
      %v330 = vpack.c.b16 %v302, %v301
      %v331 = vpack.c.b16 %v304, %v303
      %v332 = vpack.c.b16 %v306, %v305
      %v333 = vpack.c.b16 %v308, %v307
      %v334 = vpack.c.b16 %v310, %v309
      %v335 = vpack.c.b16 %v312, %v311
      %v336 = vpack.c.b16 %v314, %v313
      %v337 = vpack.c.b16 %v316, %v315
      %v338 = vpack.c.b16 %v318, %v317
      %v339 = vpack.c.b16 %v320, %v319
      %v340 = vpack.c.b16 %v322, %v321
      %v341 = vpack.c.b16 %v324, %v323
      %v342 = vpack.c.b16 %v326, %v325
      %359 = vmatpush.bf16.msra.mxu0 %v334
      %360 = vmatpush.bf16.msra.mxu0 %v333
      %361 = vmatpush.bf16.msra.mxu0 %v332
      %362 = vmatpush.bf16.msra.mxu0 %v331
      %363 = vmatpush.bf16.msra.mxu0 %v330
      %364 = vmatpush.bf16.msra.mxu0 %v329
      %365 = vmatpush.bf16.msra.mxu0 %v328
      %366 = vmatpush.bf16.msra.mxu0 %v327
      %367 = vmatmul.bf16.gmra.mxu0 %v259
      %v368 = vpop.f32.mrf.mxu0
      %v369 = vadd.f32 %v251, %v368
      %v370 = vpop.f32.mrf.mxu0
      %v371 = vadd.f32 %v251, %v370
      %372 = vdwg.mxu0
      %373 = vmatpush.bf16.msra.mxu0 %v342
      %374 = vmatpush.bf16.msra.mxu0 %v341
      %375 = vmatpush.bf16.msra.mxu0 %v340
      %376 = vmatpush.bf16.msra.mxu0 %v339
      %377 = vmatpush.bf16.msra.mxu0 %v338
      %378 = vmatpush.bf16.msra.mxu0 %v337
      %379 = vmatpush.bf16.msra.mxu0 %v336
      %380 = vmatpush.bf16.msra.mxu0 %v335
      %381 = vmatmul.bf16.gmra.mxu0 %v260
      %v382 = vpop.f32.mrf.mxu0
      %v383 = vadd.f32 %v369, %v382
      %v384 = vpop.f32.mrf.mxu0
      %v385 = vadd.f32 %v371, %v384
      %386 = vdwg.mxu0
      %v387 = vlaneseq
      %v388 = vshrl.u32 %v387, 7
      %v389 = vadd.s32 %v388, 8
      %s390 = smul.u32 %s16, 16
      %v391 = vstv %s390
      %v392 = vadd.s32 %v388, %v391
      %v393 = vadd.s32 %v389, %v391
      %vm394 = vcmp.lt.s32.totalorder %v392, 24
      %vm395 = vcmp.lt.s32.totalorder %v393, 24
      %s396 = ssub.s32 24, %s390
      %p397 = scmp.lt.s32.totalorder %s396, 16
      %s398 = scalar_select %p397, %s396, 16
      %s399 = scvt.s32.f32 %s398
      %v400 = vsel %vm394, 1, 0
      %v401 = vsel %vm395, 1, 0
      %vm402 = vcmp.eq.s32.totalorder %v400, 1
      %vm403 = vcmp.eq.s32.totalorder %v401, 1
      %v404 = vsel %vm402, %v383, 0.0
      %v405 = vsel %vm403, %v385, 0.0
      %v406 = vadd.f32 %v404, %v405
      %v407 = vrot.slane %v406, 4
      %v408 = vadd.f32 %v406, %v407
      %v409 = vrot.slane %v408, 2
      %v410 = vadd.f32 %v408, %v409
      %v411 = vrot.slane %v410, 1
      %v412 = vadd.f32 %v410, %v411
      %v413 = vstv %s399
      %v414 = vrcp.pop %v413
      %v415 = vmul.f32 %v413, %v414
      %v416 = vsub.f32 1.0, %v415
      %v417 = vmul.f32 %v414, %v416
      %v418 = vadd.f32 %v414, %v417
      %vm419 = vweird.f32 %v413
      %vm420 = vweird.f32 %v414
      %vm421 = vmor %vm419, %vm420
      %v422 = vsel %vm421, %v414, %v418
      %v423 = vand.u32 2147483647, %v413
      %vm424 = vcmp.eq.f32.partialorder %v423, 8.507059e+37
      %v425 = vand.u32 %v413, 2147483648
      %v426 = vor.u32 1.1754944e-38, %v425
      %v427 = vsel %vm424, %v426, %v422
      %v428 = vmul.f32 %v412, %v427
      %v429 = vsub.f32 %v404, %v428
      %v430 = vsub.f32 %v405, %v428
      %v431 = vsel %vm402, %v429, 0.0
      %v432 = vsel %vm403, %v430, 0.0
      %v433 = vmul.f32 %v431, %v431
      %v434 = vmul.f32 %v432, %v432
      %v435 = vadd.f32 %v433, %v434
      %v436 = vrot.slane %v435, 4
      %v437 = vadd.f32 %v435, %v436
      %v438 = vrot.slane %v437, 2
      %v439 = vadd.f32 %v437, %v438
      %v440 = vrot.slane %v439, 1
      %v441 = vadd.f32 %v439, %v440
      %442 = vst [vmem:[%s214] sm:$0x1] %v412
      %443 = vst [vmem:[%s214 + $0x1] sm:$0x1] %v441
      %v444 = vpack.c.bf16 %v383, %v383
      %v445 = vpack.c.bf16 %v385, %v385
      %446 = vst [vmem:[%s209] sm:$0xf] %v444
      %447 = vst [vmem:[%s209 + $0x4] sm:$0xf] %v445
      %s448 = smul.u32 2, %s16
      %p449 = scmp.lt.s32.totalorder %s448, 3
      %s450 = scalar_select %p449, %s448, 3
      %s451 = smul.addr %s450, 4
      %s452 = scalar_lea.vmem %s3, %s451
      %p453 = scmp.lt.s32.totalorder %s16, 1
      %s454 = scalar_select %p453, %s16, 1
      %s455 = smul.addr %s454, 8
      %s456 = scalar_lea.vmem %s4, %s455
      // Predicated region
      $region33: #{conv_encoder3_res_bn_forward.16} parent=31 // pred_check
        %p457 = pneg %p102
      $region34: #{conv_encoder3_res_bn_forward.16} parent=31 // pred_check_branch
        %459 = sbr.rel (%p457) target = $region36
      $region35: #{conv_encoder3_res_bn_forward.16} parent=31 // pred_region
        %s460 = smul.u32 2, %s16
      $region36: #{conv_encoder3_res_bn_forward.16} parent=31 // pred_fallthru
        _
      // Predicated region
      $region37: #{conv_encoder3_res_bn_forward.16} parent=31 // pred_check
        %p461 = pneg %p128
      $region38: #{conv_encoder3_res_bn_forward.16} parent=31 // pred_check_branch
        %463 = sbr.rel (%p461) target = $region40
      $region39: #{conv_encoder3_res_bn_forward.16} parent=31 // pred_region
        _
      $region40: #{conv_encoder3_res_bn_forward.16} parent=31 // pred_fallthru
        _
    $region32: #{conv_encoder3_res_bn_forward.16} parent=5 // pred_fallthru
      _
    %p464 = scmp.le.s32.totalorder 2, %s11
    // Predicated region
    $region41: #{conv_encoder3_res_bn_forward.16} parent=5 // pred_check
      %p465 = pneg %p464
    $region42: #{conv_encoder3_res_bn_forward.16} parent=5 // pred_check_branch
      %467 = sbr.rel (%p465) target = $region44
    $region43: #{conv_encoder3_res_bn_forward.16} parent=5 // pred_region
      %s468 = ssub.s32 %s11, 2
      // Predicated region
      $region45: #{conv_encoder3_res_bn_forward.16} parent=43 // pred_check
        %p469 = pneg %p108
      $region46: #{conv_encoder3_res_bn_forward.16} parent=43 // pred_check_branch
        %471 = sbr.rel (%p469) target = $region48
      $region47: #{conv_encoder3_res_bn_forward.16} parent=43 // pred_region
        %s472 = smul.u32 2, %s17
        %p473 = scmp.lt.s32.totalorder %s472, 3
        %s474 = scalar_select %p473, %s472, 3
        %s475 = smul.addr %s474, 4
        %s476 = scalar_lea.vmem %s3, %s475
      $region48: #{conv_encoder3_res_bn_forward.16} parent=43 // pred_fallthru
        _
      // Predicated region
      $region49: #{conv_encoder3_res_bn_forward.16} parent=43 // pred_check
        %p477 = pneg %p134
      $region50: #{conv_encoder3_res_bn_forward.16} parent=43 // pred_check_branch
        %479 = sbr.rel (%p477) target = $region52
      $region51: #{conv_encoder3_res_bn_forward.16} parent=43 // pred_region
        %p480 = scmp.lt.s32.totalorder %s17, 1
        %s481 = scalar_select %p480, %s17, 1
        %s482 = smul.addr %s481, 8
        %s483 = scalar_lea.vmem %s4, %s482
      $region52: #{conv_encoder3_res_bn_forward.16} parent=43 // pred_fallthru
        _
    $region44: #{conv_encoder3_res_bn_forward.16} parent=5 // pred_fallthru
      _
  $region6: #{conv_encoder3_res_bn_forward.16} parent=0 // loop_footer
    %s15 = sadd.s32 1, %s11
  $region7: #{conv_encoder3_res_bn_forward.16} parent=0 // loop_footer_branch
    %10 = sbr.rel target = $region3
  $region8: #{conv_encoder3_res_bn_forward.16} parent=0 // loop_exit
    _

// kernel: conv_encoder3_res_bn_forward.17
$region0: #{conv_encoder3_res_bn_forward.17}
  #allocation0 [shape = 'u32[]', space=smem, size = 0x4, offset = 0x4, fixed_abs, tag = 'smem constant byte address 0x4 - core index']
  #allocation1 [shape = 'u32[72,128]{1,0:T(1,128)}', space=vmem, size = 0x9000, scoped, tag = 'internal scratch']
  %s0 = inlined_call_operand.vmem [shape: bf16[32,128], index: 0, kind: input, shape index: {}]
  %s1 = inlined_call_operand.vmem [shape: f32[1,128], index: 1, kind: input, shape index: {}]
  %s2 = inlined_call_operand.vmem [shape: f32[1,128], index: 2, kind: input, shape index: {}]
  %s3 = inlined_call_operand.vmem [shape: bf16[32,128], index: 3, kind: output, shape index: {}]
  %s4 = sld [smem:[#allocation0]]
  $region45: #{conv_encoder3_res_bn_forward.17} parent=0
    _
  %s6 = ssub.s32 1, %s4
  %s7 = scalar_select 0, %s6, %s4
  loop: start=0, step=1, limit=4
  $region2: #{conv_encoder3_res_bn_forward.17} parent=0 // loop_pre_header
    _
  $region3: #{conv_encoder3_res_bn_forward.17} parent=0 // loop_header
    %s9 = sphi 0, %s13
    %p10 = scmp.ge.s32.totalorder %s9, 4
    %s19 = sphi 0, %s21
    %s22 = sphi 0, %s19
    %s23 = sphi 0, %s22
    %s39 = sphi 0, %s23
    %s43 = sphi 0, %s43
    %s45 = sphi 0, %s43
    %s46 = sphi 0, %s45
    %s60 = sphi 0, %s46
    %s64 = sphi 0, %s64
    %s66 = sphi 0, %s64
    %s67 = sphi 0, %s66
    %s81 = sphi 0, %s67
    %s87 = sphi 0, %s89
    %s90 = sphi 0, %s87
    %s91 = sphi 0, %s90
    %s107 = sphi 0, %s91
  $region4: #{conv_encoder3_res_bn_forward.17} parent=0 // loop_header_branch
    %12 = sbr.rel (%p10) target = $region8
  $region5: #{conv_encoder3_res_bn_forward.17} parent=0 // loop_body
    %s14 = ssub.s32 %s9, 1
    %s15 = ssub.s32 %s9, 2
    %s16 = sadd.s32 %s9, 1
    %s17 = ssub.s32 %s9, %s16
    %p18 = scmp.eq.s32.totalorder %s17, 0
    %s20 = sadd.s32 %s19, 1
    %s21 = scalar_select %p18, %s19, %s20
    %p24 = pneg %p18
    %p25 = scmp.eq.s32.totalorder %s9, 1
    %p26 = por %p24, %p25
    %p27 = scmp.ne.s32.totalorder %s19, %s22
    %p28 = scmp.eq.s32.totalorder %s9, 0
    %p29 = por %p27, %p28
    %p30 = scmp.ne.s32.totalorder %s19, %s22
    %p31 = scmp.eq.s32.totalorder %s14, 1
    %p32 = por %p30, %p31
    %p33 = scmp.ne.s32.totalorder %s22, %s23
    %p34 = scmp.eq.s32.totalorder %s14, 0
    %p35 = por %p33, %p34
    %p36 = scmp.ne.s32.totalorder %s22, %s23
    %p37 = scmp.eq.s32.totalorder %s15, 1
    %p38 = por %p36, %p37
    %p40 = scmp.ne.s32.totalorder %s23, %s39
    %p41 = scmp.eq.s32.totalorder %s15, 0
    %p42 = por %p40, %p41
    %s44 = sadd.s32 %s43, 1
    %p47 = scmp.eq.s32.totalorder %s9, 1
    %p48 = scmp.ne.s32.totalorder %s43, %s45
    %p49 = scmp.eq.s32.totalorder %s9, 0
    %p50 = por %p48, %p49
    %p51 = scmp.ne.s32.totalorder %s43, %s45
    %p52 = scmp.eq.s32.totalorder %s14, 1
    %p53 = por %p51, %p52
    %p54 = scmp.ne.s32.totalorder %s45, %s46
    %p55 = scmp.eq.s32.totalorder %s14, 0
    %p56 = por %p54, %p55
    %p57 = scmp.ne.s32.totalorder %s45, %s46
    %p58 = scmp.eq.s32.totalorder %s15, 1
    %p59 = por %p57, %p58
    %p61 = scmp.ne.s32.totalorder %s46, %s60
    %p62 = scmp.eq.s32.totalorder %s15, 0
    %p63 = por %p61, %p62
    %s65 = sadd.s32 %s64, 1
    %p68 = scmp.eq.s32.totalorder %s9, 1
    %p69 = scmp.ne.s32.totalorder %s64, %s66
    %p70 = scmp.eq.s32.totalorder %s9, 0
    %p71 = por %p69, %p70
    %p72 = scmp.ne.s32.totalorder %s64, %s66
    %p73 = scmp.eq.s32.totalorder %s14, 1
    %p74 = por %p72, %p73
    %p75 = scmp.ne.s32.totalorder %s66, %s67
    %p76 = scmp.eq.s32.totalorder %s14, 0
    %p77 = por %p75, %p76
    %p78 = scmp.ne.s32.totalorder %s66, %s67
    %p79 = scmp.eq.s32.totalorder %s15, 1
    %p80 = por %p78, %p79
    %p82 = scmp.ne.s32.totalorder %s67, %s81
    %p83 = scmp.eq.s32.totalorder %s15, 0
    %p84 = por %p82, %p83
    %s85 = ssub.s32 %s9, %s16
    %p86 = scmp.eq.s32.totalorder %s85, 0
    %s88 = sadd.s32 %s87, 1
    %s89 = scalar_select %p86, %s87, %s88
    %p92 = pneg %p86
    %p93 = scmp.eq.s32.totalorder %s9, 1
    %p94 = por %p92, %p93
    %p95 = scmp.ne.s32.totalorder %s87, %s90
    %p96 = scmp.eq.s32.totalorder %s9, 0
    %p97 = por %p95, %p96
    %p98 = scmp.ne.s32.totalorder %s87, %s90
    %p99 = scmp.eq.s32.totalorder %s14, 1
    %p100 = por %p98, %p99
    %p101 = scmp.ne.s32.totalorder %s90, %s91
    %p102 = scmp.eq.s32.totalorder %s14, 0
    %p103 = por %p101, %p102
    %p104 = scmp.ne.s32.totalorder %s90, %s91
    %p105 = scmp.eq.s32.totalorder %s15, 1
    %p106 = por %p104, %p105
    %p108 = scmp.ne.s32.totalorder %s91, %s107
    %p109 = scmp.eq.s32.totalorder %s15, 0
    %p110 = por %p108, %p109
    %p111 = scmp.le.s32.totalorder 1, %s9
    %p112 = scmp.lt.s32.totalorder %s9, 3
    %p113 = pnand %p111, %p112
    %p114 = pneg %p113
    // Predicated region
    $region9: #{conv_encoder3_res_bn_forward.17} parent=5 // pred_check
      _
    $region10: #{conv_encoder3_res_bn_forward.17} parent=5 // pred_check_branch
      %116 = sbr.rel (%p113) target = $region12
    $region11: #{conv_encoder3_res_bn_forward.17} parent=5 // pred_region
      %s117 = ssub.s32 %s9, 1
      // Predicated region
      $region13: #{conv_encoder3_res_bn_forward.17} parent=11 // pred_check
        %p118 = pneg %p56
      $region14: #{conv_encoder3_res_bn_forward.17} parent=11 // pred_check_branch
        %120 = sbr.rel (%p118) target = $region16
      $region15: #{conv_encoder3_res_bn_forward.17} parent=11 // pred_region
        _
      $region16: #{conv_encoder3_res_bn_forward.17} parent=11 // pred_fallthru
        _
      // Predicated region
      $region17: #{conv_encoder3_res_bn_forward.17} parent=11 // pred_check
        %p121 = pneg %p77
      $region18: #{conv_encoder3_res_bn_forward.17} parent=11 // pred_check_branch
        %123 = sbr.rel (%p121) target = $region20
      $region19: #{conv_encoder3_res_bn_forward.17} parent=11 // pred_region
        _
      $region20: #{conv_encoder3_res_bn_forward.17} parent=11 // pred_fallthru
        _
    $region12: #{conv_encoder3_res_bn_forward.17} parent=5 // pred_fallthru
      _
    %p124 = scmp.lt.s32.totalorder %s9, 2
    // Predicated region
    $region21: #{conv_encoder3_res_bn_forward.17} parent=5 // pred_check
      %p125 = pneg %p124
    $region22: #{conv_encoder3_res_bn_forward.17} parent=5 // pred_check_branch
      %127 = sbr.rel (%p125) target = $region24
    $region23: #{conv_encoder3_res_bn_forward.17} parent=5 // pred_region
      // Predicated region
      $region25: #{conv_encoder3_res_bn_forward.17} parent=23 // pred_check
        %p128 = pneg %p29
      $region26: #{conv_encoder3_res_bn_forward.17} parent=23 // pred_check_branch
        %130 = sbr.rel (%p128) target = $region28
      $region27: #{conv_encoder3_res_bn_forward.17} parent=23 // pred_region
        %s131 = smul.u32 2, %s9
        %p132 = scmp.lt.s32.totalorder %s131, 3
        %s133 = scalar_select %p132, %s131, 3
        %s134 = smul.addr %s133, 4
        %s135 = scalar_lea.vmem %s0, %s134
        %s136 = smul.u32 2, %s9
      $region28: #{conv_encoder3_res_bn_forward.17} parent=23 // pred_fallthru
        _
    $region24: #{conv_encoder3_res_bn_forward.17} parent=5 // pred_fallthru
      _
    %p137 = scmp.le.s32.totalorder 1, %s9
    %p138 = scmp.lt.s32.totalorder %s9, 3
    %p139 = pnand %p137, %p138
    %p140 = pneg %p139
    // Predicated region
    $region29: #{conv_encoder3_res_bn_forward.17} parent=5 // pred_check
      _
    $region30: #{conv_encoder3_res_bn_forward.17} parent=5 // pred_check_branch
      %142 = sbr.rel (%p139) target = $region32
    $region31: #{conv_encoder3_res_bn_forward.17} parent=5 // pred_region
      %s143 = ssub.s32 %s9, 1
      %s144 = smul.u32 2, %s14
      %p145 = scmp.lt.s32.totalorder %s144, 3
      %s146 = scalar_select %p145, %s144, 3
      %s147 = smul.addr %s146, 4
      %s148 = scalar_lea.vmem %s0, %s147
      %p149 = pneg %p35
      %p150 = pneg %p32
      %p151 = pneg %p56
      %p152 = pneg %p53
      %p153 = pneg %p77
      %p154 = pneg %p74
      %p155 = pneg %p103
      %p156 = pneg %p100
      %s157 = smul.u32 2, %s14
      %p158 = scmp.lt.s32.totalorder %s157, 3
      %s159 = scalar_select %p158, %s157, 3
      %s160 = smul.addr %s159, 4
      %s161 = scalar_lea.vmem %s3, %s160
      %s162 = smul.u32 2, %s14
      %p163 = scmp.lt.s32.totalorder %s162, 3
      %s164 = scalar_select %p163, %s162, 3
      %s165 = smul.addr %s164, 4
      %s166 = scalar_lea.vmem %s0, %s165
      %s167 = smul.u32 2, %s14
      %s168 = smul.u32 2, %s14
      %p169 = scmp.lt.s32.totalorder %s168, 3
      %s170 = scalar_select %p169, %s168, 3
      %s171 = smul.addr %s170, 4
      %s172 = scalar_lea.vmem %s3, %s171
      %s173 = smul.u32 2, %s14
      %v174 = vld [vmem:[%s166] sm:$0xf]
      %v175 = vld [vmem:[%s166 + $0x4] sm:$0xf]
      %v176 = vunpack.c.l.bf16 %v174
      %v177 = vunpack.c.l.bf16 %v175
      %v178 = vld [vmem:[%s1] sm:$0x1]
      %v180 = vperm.slane %v178, 0
      %v182 = vmul.f32 %v176, %v180
      %v183 = vmul.f32 %v177, %v180
      %v184 = vld [vmem:[%s2] sm:$0x1]
      %v186 = vperm.slane %v184, 0
      %v188 = vadd.f32 %v182, %v186
      %v189 = vadd.f32 %v183, %v186
      %v190 = vmul.f32 %v188, 0.5
      %v191 = vmul.f32 %v189, 0.5
      %v192 = vmul.f32 %v188, 0.70710677
      %v193 = vmul.f32 %v189, 0.70710677
      %v194 = vmul.f32 %v192, %v192
      %v195 = vmin.f32 16.0, %v194
      %v196 = vmul.f32 %v195, 2.1237322e-06
      %v197 = vadd.f32 %v196, 0.00028619796
      %v198 = vmul.f32 %v195, %v197
      %v199 = vadd.f32 %v198, 0.0036580483
      %v200 = vmul.f32 %v195, %v199
      %v201 = vadd.f32 %v200, 0.05243302
      %v202 = vmul.f32 %v195, %v201
      %v203 = vadd.f32 %v202, 0.18741608
      %v204 = vmul.f32 %v195, %v203
      %v205 = vadd.f32 %v204, 1.1283791
      %v206 = vmul.f32 %v192, %v205
      %v207 = vmul.f32 %v195, 3.8918573e-05
      %v208 = vadd.f32 %v207, 0.001143296
      %v209 = vmul.f32 %v195, %v208
      %v210 = vadd.f32 %v209, 0.014752088
      %v211 = vmul.f32 %v195, %v210
      %v212 = vadd.f32 %v211, 0.112945676
      %v213 = vmul.f32 %v195, %v212
      %v214 = vadd.f32 %v213, 0.4994258
      %v215 = vmul.f32 %v195, %v214
      %v216 = vadd.f32 %v215, 1.0
      %v217 = vrcp.pop %v216
      %v218 = vmul.f32 %v216, %v217
      %v219 = vsub.f32 1.0, %v218
      %v220 = vmul.f32 %v217, %v219
      %v221 = vadd.f32 %v217, %v220
      %vm222 = vweird.f32 %v216
      %vm223 = vweird.f32 %v217
      %vm224 = vmor %vm222, %vm223
      %v225 = vsel %vm224, %v217, %v221
      %v226 = vand.u32 2147483647, %v216
      %vm227 = vcmp.eq.f32.partialorder %v226, 8.507059e+37
      %v228 = vand.u32 %v216, 2147483648
      %v229 = vor.u32 1.1754944e-38, %v228
      %v230 = vsel %vm227, %v229, %v225
      %v231 = vmul.f32 %v206, %v230
      %v232 = vmin.f32 %v231, 1.0
      %v233 = vmax.f32 %v232, -1.0
      %v234 = vmul.f32 %v193, %v193
      %v235 = vmin.f32 16.0, %v234
      %v236 = vmul.f32 %v235, 2.1237322e-06
      %v237 = vadd.f32 %v236, 0.00028619796
      %v238 = vmul.f32 %v235, %v237
      %v239 = vadd.f32 %v238, 0.0036580483
      %v240 = vmul.f32 %v235, %v239
      %v241 = vadd.f32 %v240, 0.05243302
      %v242 = vmul.f32 %v235, %v241
      %v243 = vadd.f32 %v242, 0.18741608
      %v244 = vmul.f32 %v235, %v243
      %v245 = vadd.f32 %v244, 1.1283791
      %v246 = vmul.f32 %v193, %v245
      %v247 = vmul.f32 %v235, 3.8918573e-05
      %v248 = vadd.f32 %v247, 0.001143296
      %v249 = vmul.f32 %v235, %v248
      %v250 = vadd.f32 %v249, 0.014752088
      %v251 = vmul.f32 %v235, %v250
      %v252 = vadd.f32 %v251, 0.112945676
      %v253 = vmul.f32 %v235, %v252
      %v254 = vadd.f32 %v253, 0.4994258
      %v255 = vmul.f32 %v235, %v254
      %v256 = vadd.f32 %v255, 1.0
      %v257 = vrcp.pop %v256
      %v258 = vmul.f32 %v256, %v257
      %v259 = vsub.f32 1.0, %v258
      %v260 = vmul.f32 %v257, %v259
      %v261 = vadd.f32 %v257, %v260
      %vm262 = vweird.f32 %v256
      %vm263 = vweird.f32 %v257
      %vm264 = vmor %vm262, %vm263
      %v265 = vsel %vm264, %v257, %v261
      %v266 = vand.u32 2147483647, %v256
      %vm267 = vcmp.eq.f32.partialorder %v266, 8.507059e+37
      %v268 = vand.u32 %v256, 2147483648
      %v269 = vor.u32 1.1754944e-38, %v268
      %v270 = vsel %vm267, %v269, %v265
      %v271 = vmul.f32 %v246, %v270
      %v272 = vmin.f32 %v271, 1.0
      %v273 = vmax.f32 %v272, -1.0
      %v274 = vadd.f32 %v233, 1.0
      %v275 = vadd.f32 %v273, 1.0
      %v276 = vmul.f32 %v190, %v274
      %v277 = vmul.f32 %v191, %v275
      %v278 = vpack.c.bf16 %v276, %v276
      %v279 = vpack.c.bf16 %v277, %v277
      %280 = vst [vmem:[%s172] sm:$0xf] %v278
      %281 = vst [vmem:[%s172 + $0x4] sm:$0xf] %v279
      %s282 = smul.u32 2, %s14
      %p283 = scmp.lt.s32.totalorder %s282, 3
      %s284 = scalar_select %p283, %s282, 3
      %s285 = smul.addr %s284, 4
      %s286 = scalar_lea.vmem %s3, %s285
      // Predicated region
      $region33: #{conv_encoder3_res_bn_forward.17} parent=31 // pred_check
        %p287 = pneg %p100
      $region34: #{conv_encoder3_res_bn_forward.17} parent=31 // pred_check_branch
        %289 = sbr.rel (%p287) target = $region36
      $region35: #{conv_encoder3_res_bn_forward.17} parent=31 // pred_region
        %s290 = smul.u32 2, %s14
      $region36: #{conv_encoder3_res_bn_forward.17} parent=31 // pred_fallthru
        _
    $region32: #{conv_encoder3_res_bn_forward.17} parent=5 // pred_fallthru
      _
    %p291 = scmp.le.s32.totalorder 2, %s9
    // Predicated region
    $region37: #{conv_encoder3_res_bn_forward.17} parent=5 // pred_check
      %p292 = pneg %p291
    $region38: #{conv_encoder3_res_bn_forward.17} parent=5 // pred_check_branch
      %294 = sbr.rel (%p292) target = $region40
    $region39: #{conv_encoder3_res_bn_forward.17} parent=5 // pred_region
      %s295 = ssub.s32 %s9, 2
      // Predicated region
      $region41: #{conv_encoder3_res_bn_forward.17} parent=39 // pred_check
        %p296 = pneg %p106
      $region42: #{conv_encoder3_res_bn_forward.17} parent=39 // pred_check_branch
        %298 = sbr.rel (%p296) target = $region44
      $region43: #{conv_encoder3_res_bn_forward.17} parent=39 // pred_region
        %s299 = smul.u32 2, %s15
        %p300 = scmp.lt.s32.totalorder %s299, 3
        %s301 = scalar_select %p300, %s299, 3
        %s302 = smul.addr %s301, 4
        %s303 = scalar_lea.vmem %s3, %s302
      $region44: #{conv_encoder3_res_bn_forward.17} parent=39 // pred_fallthru
        _
    $region40: #{conv_encoder3_res_bn_forward.17} parent=5 // pred_fallthru
      _
  $region6: #{conv_encoder3_res_bn_forward.17} parent=0 // loop_footer
    %s13 = sadd.s32 1, %s9
  $region7: #{conv_encoder3_res_bn_forward.17} parent=0 // loop_footer_branch
    %8 = sbr.rel target = $region3
  $region8: #{conv_encoder3_res_bn_forward.17} parent=0 // loop_exit
    _

// kernel: conv_encoder3_res_bn_forward.19
$region0: #{conv_encoder3_res_bn_forward.19}
  #allocation0 [shape = 'u32[]', space=smem, size = 0x4, offset = 0x4, fixed_abs, tag = 'smem constant byte address 0x4 - core index']
  #allocation1 [shape = 'u32[72,128]{1,0:T(1,128)}', space=vmem, size = 0x9000, scoped, tag = 'internal scratch']
  %s0 = inlined_call_operand.vmem [shape: bf16[2,16,128], index: 0, kind: input, shape index: {}]
  %s1 = inlined_call_operand.vmem [shape: f32[1,128], index: 1, kind: input, shape index: {}]
  %s2 = inlined_call_operand.vmem [shape: f32[1,128], index: 2, kind: input, shape index: {}]
  %s3 = inlined_call_operand.vmem [shape: bf16[2,16,128], index: 3, kind: output, shape index: {}]
  %s4 = sld [smem:[#allocation0]]
  $region45: #{conv_encoder3_res_bn_forward.19} parent=0
    _
  %s6 = ssub.s32 1, %s4
  %s7 = scalar_select 0, %s6, %s4
  loop: start=0, step=1, limit=6
  $region2: #{conv_encoder3_res_bn_forward.19} parent=0 // loop_pre_header
    _
  $region3: #{conv_encoder3_res_bn_forward.19} parent=0 // loop_header
    %s9 = sphi 0, %s13
    %p10 = scmp.ge.s32.totalorder %s9, 6
    %s16 = sphi 0, %s28
    %s17 = sphi 0, %s24
    %s18 = sphi 0, %s16
    %s19 = sphi 0, %s17
    %s20 = sphi 0, %s18
    %s21 = sphi 0, %s19
    %s33 = sphi 0, %s35
    %s36 = sphi 0, %s33
    %s37 = sphi 0, %s36
    %s53 = sphi 0, %s37
    %s57 = sphi 0, %s57
    %s59 = sphi 0, %s57
    %s60 = sphi 0, %s59
    %s74 = sphi 0, %s60
    %s78 = sphi 0, %s78
    %s80 = sphi 0, %s78
    %s81 = sphi 0, %s80
    %s95 = sphi 0, %s81
    %s103 = sphi 0, %s105
    %s106 = sphi 0, %s103
    %s107 = sphi 0, %s106
    %s123 = sphi 0, %s107
  $region4: #{conv_encoder3_res_bn_forward.19} parent=0 // loop_header_branch
    %12 = sbr.rel (%p10) target = $region8
  $region5: #{conv_encoder3_res_bn_forward.19} parent=0 // loop_body
    %s14 = ssub.s32 %s9, 1
    %s15 = ssub.s32 %s9, 2
    %s22 = sadd.s32 1, %s17
    %p23 = scmp.ge.s32.totalorder %s22, 2
    %s24 = scalar_select %p23, 0, %s22
    %s25 = sadd.s32 1, %s16
    %s26 = scalar_select %p23, %s25, %s16
    %p27 = scmp.ge.s32.totalorder %s26, 2
    %s28 = scalar_select %p27, 0, %s26
    %s29 = ssub.s32 %s16, %s28
    %s30 = ssub.s32 %s17, %s24
    %s31 = sor.u32 %s29, %s30
    %p32 = scmp.eq.s32.totalorder %s31, 0
    %s34 = sadd.s32 %s33, 1
    %s35 = scalar_select %p32, %s33, %s34
    %p38 = pneg %p32
    %p39 = scmp.eq.s32.totalorder %s9, 3
    %p40 = por %p38, %p39
    %p41 = scmp.ne.s32.totalorder %s33, %s36
    %p42 = scmp.eq.s32.totalorder %s9, 0
    %p43 = por %p41, %p42
    %p44 = scmp.ne.s32.totalorder %s33, %s36
    %p45 = scmp.eq.s32.totalorder %s14, 3
    %p46 = por %p44, %p45
    %p47 = scmp.ne.s32.totalorder %s36, %s37
    %p48 = scmp.eq.s32.totalorder %s14, 0
    %p49 = por %p47, %p48
    %p50 = scmp.ne.s32.totalorder %s36, %s37
    %p51 = scmp.eq.s32.totalorder %s15, 3
    %p52 = por %p50, %p51
    %p54 = scmp.ne.s32.totalorder %s37, %s53
    %p55 = scmp.eq.s32.totalorder %s15, 0
    %p56 = por %p54, %p55
    %s58 = sadd.s32 %s57, 1
    %p61 = scmp.eq.s32.totalorder %s9, 3
    %p62 = scmp.ne.s32.totalorder %s57, %s59
    %p63 = scmp.eq.s32.totalorder %s9, 0
    %p64 = por %p62, %p63
    %p65 = scmp.ne.s32.totalorder %s57, %s59
    %p66 = scmp.eq.s32.totalorder %s14, 3
    %p67 = por %p65, %p66
    %p68 = scmp.ne.s32.totalorder %s59, %s60
    %p69 = scmp.eq.s32.totalorder %s14, 0
    %p70 = por %p68, %p69
    %p71 = scmp.ne.s32.totalorder %s59, %s60
    %p72 = scmp.eq.s32.totalorder %s15, 3
    %p73 = por %p71, %p72
    %p75 = scmp.ne.s32.totalorder %s60, %s74
    %p76 = scmp.eq.s32.totalorder %s15, 0
    %p77 = por %p75, %p76
    %s79 = sadd.s32 %s78, 1
    %p82 = scmp.eq.s32.totalorder %s9, 3
    %p83 = scmp.ne.s32.totalorder %s78, %s80
    %p84 = scmp.eq.s32.totalorder %s9, 0
    %p85 = por %p83, %p84
    %p86 = scmp.ne.s32.totalorder %s78, %s80
    %p87 = scmp.eq.s32.totalorder %s14, 3
    %p88 = por %p86, %p87
    %p89 = scmp.ne.s32.totalorder %s80, %s81
    %p90 = scmp.eq.s32.totalorder %s14, 0
    %p91 = por %p89, %p90
    %p92 = scmp.ne.s32.totalorder %s80, %s81
    %p93 = scmp.eq.s32.totalorder %s15, 3
    %p94 = por %p92, %p93
    %p96 = scmp.ne.s32.totalorder %s81, %s95
    %p97 = scmp.eq.s32.totalorder %s15, 0
    %p98 = por %p96, %p97
    %s99 = ssub.s32 %s16, %s28
    %s100 = ssub.s32 %s17, %s24
    %s101 = sor.u32 %s99, %s100
    %p102 = scmp.eq.s32.totalorder %s101, 0
    %s104 = sadd.s32 %s103, 1
    %s105 = scalar_select %p102, %s103, %s104
    %p108 = pneg %p102
    %p109 = scmp.eq.s32.totalorder %s9, 3
    %p110 = por %p108, %p109
    %p111 = scmp.ne.s32.totalorder %s103, %s106
    %p112 = scmp.eq.s32.totalorder %s9, 0
    %p113 = por %p111, %p112
    %p114 = scmp.ne.s32.totalorder %s103, %s106
    %p115 = scmp.eq.s32.totalorder %s14, 3
    %p116 = por %p114, %p115
    %p117 = scmp.ne.s32.totalorder %s106, %s107
    %p118 = scmp.eq.s32.totalorder %s14, 0
    %p119 = por %p117, %p118
    %p120 = scmp.ne.s32.totalorder %s106, %s107
    %p121 = scmp.eq.s32.totalorder %s15, 3
    %p122 = por %p120, %p121
    %p124 = scmp.ne.s32.totalorder %s107, %s123
    %p125 = scmp.eq.s32.totalorder %s15, 0
    %p126 = por %p124, %p125
    %p127 = scmp.le.s32.totalorder 1, %s9
    %p128 = scmp.lt.s32.totalorder %s9, 5
    %p129 = pnand %p127, %p128
    %p130 = pneg %p129
    // Predicated region
    $region9: #{conv_encoder3_res_bn_forward.19} parent=5 // pred_check
      _
    $region10: #{conv_encoder3_res_bn_forward.19} parent=5 // pred_check_branch
      %132 = sbr.rel (%p129) target = $region12
    $region11: #{conv_encoder3_res_bn_forward.19} parent=5 // pred_region
      %s133 = ssub.s32 %s9, 1
      // Predicated region
      $region13: #{conv_encoder3_res_bn_forward.19} parent=11 // pred_check
        %p134 = pneg %p70
      $region14: #{conv_encoder3_res_bn_forward.19} parent=11 // pred_check_branch
        %136 = sbr.rel (%p134) target = $region16
      $region15: #{conv_encoder3_res_bn_forward.19} parent=11 // pred_region
        _
      $region16: #{conv_encoder3_res_bn_forward.19} parent=11 // pred_fallthru
        _
      // Predicated region
      $region17: #{conv_encoder3_res_bn_forward.19} parent=11 // pred_check
        %p137 = pneg %p91
      $region18: #{conv_encoder3_res_bn_forward.19} parent=11 // pred_check_branch
        %139 = sbr.rel (%p137) target = $region20
      $region19: #{conv_encoder3_res_bn_forward.19} parent=11 // pred_region
        _
      $region20: #{conv_encoder3_res_bn_forward.19} parent=11 // pred_fallthru
        _
    $region12: #{conv_encoder3_res_bn_forward.19} parent=5 // pred_fallthru
      _
    %p140 = scmp.lt.s32.totalorder %s9, 4
    // Predicated region
    $region21: #{conv_encoder3_res_bn_forward.19} parent=5 // pred_check
      %p141 = pneg %p140
    $region22: #{conv_encoder3_res_bn_forward.19} parent=5 // pred_check_branch
      %143 = sbr.rel (%p141) target = $region24
    $region23: #{conv_encoder3_res_bn_forward.19} parent=5 // pred_region
      // Predicated region
      $region25: #{conv_encoder3_res_bn_forward.19} parent=23 // pred_check
        %p144 = pneg %p43
      $region26: #{conv_encoder3_res_bn_forward.19} parent=23 // pred_check_branch
        %146 = sbr.rel (%p144) target = $region28
      $region27: #{conv_encoder3_res_bn_forward.19} parent=23 // pred_region
        %p147 = scmp.lt.s32.totalorder %s16, 1
        %s148 = scalar_select %p147, %s16, 1
        %p149 = scmp.lt.s32.totalorder %s17, 1
        %s150 = scalar_select %p149, %s17, 1
        %s151 = smul.addr %s148, 2
        %s152 = sadd.s32 %s150, %s151
        %s153 = smul.addr %s152, 4
        %s154 = scalar_lea.vmem %s0, %s153
      $region28: #{conv_encoder3_res_bn_forward.19} parent=23 // pred_fallthru
        _
    $region24: #{conv_encoder3_res_bn_forward.19} parent=5 // pred_fallthru
      _
    %p155 = scmp.le.s32.totalorder 1, %s9
    %p156 = scmp.lt.s32.totalorder %s9, 5
    %p157 = pnand %p155, %p156
    %p158 = pneg %p157
    // Predicated region
    $region29: #{conv_encoder3_res_bn_forward.19} parent=5 // pred_check
      _
    $region30: #{conv_encoder3_res_bn_forward.19} parent=5 // pred_check_branch
      %160 = sbr.rel (%p157) target = $region32
    $region31: #{conv_encoder3_res_bn_forward.19} parent=5 // pred_region
      %s161 = ssub.s32 %s9, 1
      %p162 = scmp.lt.s32.totalorder %s18, 1
      %s163 = scalar_select %p162, %s18, 1
      %p164 = scmp.lt.s32.totalorder %s19, 1
      %s165 = scalar_select %p164, %s19, 1
      %s166 = smul.addr %s163, 2
      %s167 = sadd.s32 %s165, %s166
      %s168 = smul.addr %s167, 4
      %s169 = scalar_lea.vmem %s0, %s168
      %p170 = pneg %p49
      %p171 = pneg %p46
      %p172 = pneg %p70
      %p173 = pneg %p67
      %p174 = pneg %p91
      %p175 = pneg %p88
      %p176 = pneg %p119
      %p177 = pneg %p116
      %p178 = scmp.lt.s32.totalorder %s18, 1
      %s179 = scalar_select %p178, %s18, 1
      %p180 = scmp.lt.s32.totalorder %s19, 1
      %s181 = scalar_select %p180, %s19, 1
      %s182 = smul.addr %s179, 2
      %s183 = sadd.s32 %s181, %s182
      %s184 = smul.addr %s183, 4
      %s185 = scalar_lea.vmem %s3, %s184
      %p186 = scmp.lt.s32.totalorder %s18, 1
      %s187 = scalar_select %p186, %s18, 1
      %p188 = scmp.lt.s32.totalorder %s19, 1
      %s189 = scalar_select %p188, %s19, 1
      %s190 = smul.addr %s187, 2
      %s191 = sadd.s32 %s189, %s190
      %s192 = smul.addr %s191, 4
      %s193 = scalar_lea.vmem %s0, %s192
      %p194 = scmp.lt.s32.totalorder %s18, 1
      %s195 = scalar_select %p194, %s18, 1
      %p196 = scmp.lt.s32.totalorder %s19, 1
      %s197 = scalar_select %p196, %s19, 1
      %s198 = smul.addr %s195, 2
      %s199 = sadd.s32 %s197, %s198
      %s200 = smul.addr %s199, 4
      %s201 = scalar_lea.vmem %s3, %s200
      %v202 = vld [vmem:[%s193] sm:$0xf]
      %v203 = vunpack.c.l.bf16 %v202
      %v204 = vld [vmem:[%s1] sm:$0x1]
      %v206 = vperm.slane %v204, 0
      %v208 = vmul.f32 %v203, %v206
      %v209 = vld [vmem:[%s2] sm:$0x1]
      %v211 = vperm.slane %v209, 0
      %v213 = vadd.f32 %v208, %v211
      %v214 = vmul.f32 %v213, 0.5
      %v215 = vmul.f32 %v213, 0.70710677
      %v216 = vmul.f32 %v215, %v215
      %v217 = vmin.f32 16.0, %v216
      %v218 = vmul.f32 %v217, 2.1237322e-06
      %v219 = vadd.f32 %v218, 0.00028619796
      %v220 = vmul.f32 %v217, %v219
      %v221 = vadd.f32 %v220, 0.0036580483
      %v222 = vmul.f32 %v217, %v221
      %v223 = vadd.f32 %v222, 0.05243302
      %v224 = vmul.f32 %v217, %v223
      %v225 = vadd.f32 %v224, 0.18741608
      %v226 = vmul.f32 %v217, %v225
      %v227 = vadd.f32 %v226, 1.1283791
      %v228 = vmul.f32 %v215, %v227
      %v229 = vmul.f32 %v217, 3.8918573e-05
      %v230 = vadd.f32 %v229, 0.001143296
      %v231 = vmul.f32 %v217, %v230
      %v232 = vadd.f32 %v231, 0.014752088
      %v233 = vmul.f32 %v217, %v232
      %v234 = vadd.f32 %v233, 0.112945676
      %v235 = vmul.f32 %v217, %v234
      %v236 = vadd.f32 %v235, 0.4994258
      %v237 = vmul.f32 %v217, %v236
      %v238 = vadd.f32 %v237, 1.0
      %v239 = vrcp.pop %v238
      %v240 = vmul.f32 %v238, %v239
      %v241 = vsub.f32 1.0, %v240
      %v242 = vmul.f32 %v239, %v241
      %v243 = vadd.f32 %v239, %v242
      %vm244 = vweird.f32 %v238
      %vm245 = vweird.f32 %v239
      %vm246 = vmor %vm244, %vm245
      %v247 = vsel %vm246, %v239, %v243
      %v248 = vand.u32 2147483647, %v238
      %vm249 = vcmp.eq.f32.partialorder %v248, 8.507059e+37
      %v250 = vand.u32 %v238, 2147483648
      %v251 = vor.u32 1.1754944e-38, %v250
      %v252 = vsel %vm249, %v251, %v247
      %v253 = vmul.f32 %v228, %v252
      %v254 = vmin.f32 %v253, 1.0
      %v255 = vmax.f32 %v254, -1.0
      %v256 = vadd.f32 %v255, 1.0
      %v257 = vmul.f32 %v214, %v256
      %s258 = smul.u32 %s19, 8
      %v259 = vlaneseq
      %v260 = vshrl.u32 %v259, 7
      %v261 = vstv %s258
      %v262 = vadd.s32 %v261, %v260
      %vm263 = vcmp.lt.s32.totalorder %v262, 12
      %v264 = vsel %vm263, 1, 0
      %vm265 = vcmp.eq.s32.totalorder %v264, 1
      %v266 = vsel %vm265, %v257, 0.0
      %v267 = vpack.c.bf16 %v266, %v266
      %268 = vst [vmem:[%s201] sm:$0xf] %v267
      %p269 = scmp.lt.s32.totalorder %s18, 1
      %s270 = scalar_select %p269, %s18, 1
      %p271 = scmp.lt.s32.totalorder %s19, 1
      %s272 = scalar_select %p271, %s19, 1
      %s273 = smul.addr %s270, 2
      %s274 = sadd.s32 %s272, %s273
      %s275 = smul.addr %s274, 4
      %s276 = scalar_lea.vmem %s3, %s275
      // Predicated region
      $region33: #{conv_encoder3_res_bn_forward.19} parent=31 // pred_check
        %p277 = pneg %p116
      $region34: #{conv_encoder3_res_bn_forward.19} parent=31 // pred_check_branch
        %279 = sbr.rel (%p277) target = $region36
      $region35: #{conv_encoder3_res_bn_forward.19} parent=31 // pred_region
        _
      $region36: #{conv_encoder3_res_bn_forward.19} parent=31 // pred_fallthru
        _
    $region32: #{conv_encoder3_res_bn_forward.19} parent=5 // pred_fallthru
      _
    %p280 = scmp.le.s32.totalorder 2, %s9
    // Predicated region
    $region37: #{conv_encoder3_res_bn_forward.19} parent=5 // pred_check
      %p281 = pneg %p280
    $region38: #{conv_encoder3_res_bn_forward.19} parent=5 // pred_check_branch
      %283 = sbr.rel (%p281) target = $region40
    $region39: #{conv_encoder3_res_bn_forward.19} parent=5 // pred_region
      %s284 = ssub.s32 %s9, 2
      // Predicated region
      $region41: #{conv_encoder3_res_bn_forward.19} parent=39 // pred_check
        %p285 = pneg %p122
      $region42: #{conv_encoder3_res_bn_forward.19} parent=39 // pred_check_branch
        %287 = sbr.rel (%p285) target = $region44
      $region43: #{conv_encoder3_res_bn_forward.19} parent=39 // pred_region
        %p288 = scmp.lt.s32.totalorder %s20, 1
        %s289 = scalar_select %p288, %s20, 1
        %p290 = scmp.lt.s32.totalorder %s21, 1
        %s291 = scalar_select %p290, %s21, 1
        %s292 = smul.addr %s289, 2
        %s293 = sadd.s32 %s291, %s292
        %s294 = smul.addr %s293, 4
        %s295 = scalar_lea.vmem %s3, %s294
      $region44: #{conv_encoder3_res_bn_forward.19} parent=39 // pred_fallthru
        _
    $region40: #{conv_encoder3_res_bn_forward.19} parent=5 // pred_fallthru
      _
  $region6: #{conv_encoder3_res_bn_forward.19} parent=0 // loop_footer
    %s13 = sadd.s32 1, %s9
  $region7: #{conv_encoder3_res_bn_forward.19} parent=0 // loop_footer_branch
    %8 = sbr.rel target = $region3
  $region8: #{conv_encoder3_res_bn_forward.19} parent=0 // loop_exit
    _

// kernel: conv_encoder3_res_bn_forward.21
$region0: #{conv_encoder3_res_bn_forward.21}
  #allocation0 [shape = 'u32[]', space=smem, size = 0x4, offset = 0x4, fixed_abs, tag = 'smem constant byte address 0x4 - core index']
  #allocation1 [shape = 'u32[72,128]{1,0:T(1,128)}', space=vmem, size = 0x9000, scoped, tag = 'internal scratch']
  %s0 = inlined_call_operand.vmem [shape: bf16[2,16,128], index: 0, kind: input, shape index: {}]
  %s1 = inlined_call_operand.vmem [shape: f32[1,128], index: 1, kind: input, shape index: {}]
  %s2 = inlined_call_operand.vmem [shape: f32[1,128], index: 2, kind: input, shape index: {}]
  %s3 = inlined_call_operand.vmem [shape: bf16[2,16,128], index: 3, kind: input, shape index: {}]
  %s4 = inlined_call_operand.vmem [shape: bf16[2,16,128], index: 4, kind: output, shape index: {}]
  %s5 = sld [smem:[#allocation0]]
  $region49: #{conv_encoder3_res_bn_forward.21} parent=0
    _
  %s7 = ssub.s32 1, %s5
  %s8 = scalar_select 0, %s7, %s5
  loop: start=0, step=1, limit=6
  $region2: #{conv_encoder3_res_bn_forward.21} parent=0 // loop_pre_header
    _
  $region3: #{conv_encoder3_res_bn_forward.21} parent=0 // loop_header
    %s10 = sphi 0, %s14
    %p11 = scmp.ge.s32.totalorder %s10, 6
    %s17 = sphi 0, %s29
    %s18 = sphi 0, %s25
    %s19 = sphi 0, %s17
    %s20 = sphi 0, %s18
    %s21 = sphi 0, %s19
    %s22 = sphi 0, %s20
    %s34 = sphi 0, %s36
    %s37 = sphi 0, %s34
    %s38 = sphi 0, %s37
    %s54 = sphi 0, %s38
    %s58 = sphi 0, %s58
    %s60 = sphi 0, %s58
    %s61 = sphi 0, %s60
    %s75 = sphi 0, %s61
    %s79 = sphi 0, %s79
    %s81 = sphi 0, %s79
    %s82 = sphi 0, %s81
    %s96 = sphi 0, %s82
    %s104 = sphi 0, %s106
    %s107 = sphi 0, %s104
    %s108 = sphi 0, %s107
    %s124 = sphi 0, %s108
    %s132 = sphi 0, %s134
    %s135 = sphi 0, %s132
    %s136 = sphi 0, %s135
    %s152 = sphi 0, %s136
  $region4: #{conv_encoder3_res_bn_forward.21} parent=0 // loop_header_branch
    %13 = sbr.rel (%p11) target = $region8
  $region5: #{conv_encoder3_res_bn_forward.21} parent=0 // loop_body
    %s15 = ssub.s32 %s10, 1
    %s16 = ssub.s32 %s10, 2
    %s23 = sadd.s32 1, %s18
    %p24 = scmp.ge.s32.totalorder %s23, 2
    %s25 = scalar_select %p24, 0, %s23
    %s26 = sadd.s32 1, %s17
    %s27 = scalar_select %p24, %s26, %s17
    %p28 = scmp.ge.s32.totalorder %s27, 2
    %s29 = scalar_select %p28, 0, %s27
    %s30 = ssub.s32 %s17, %s29
    %s31 = ssub.s32 %s18, %s25
    %s32 = sor.u32 %s30, %s31
    %p33 = scmp.eq.s32.totalorder %s32, 0
    %s35 = sadd.s32 %s34, 1
    %s36 = scalar_select %p33, %s34, %s35
    %p39 = pneg %p33
    %p40 = scmp.eq.s32.totalorder %s10, 3
    %p41 = por %p39, %p40
    %p42 = scmp.ne.s32.totalorder %s34, %s37
    %p43 = scmp.eq.s32.totalorder %s10, 0
    %p44 = por %p42, %p43
    %p45 = scmp.ne.s32.totalorder %s34, %s37
    %p46 = scmp.eq.s32.totalorder %s15, 3
    %p47 = por %p45, %p46
    %p48 = scmp.ne.s32.totalorder %s37, %s38
    %p49 = scmp.eq.s32.totalorder %s15, 0
    %p50 = por %p48, %p49
    %p51 = scmp.ne.s32.totalorder %s37, %s38
    %p52 = scmp.eq.s32.totalorder %s16, 3
    %p53 = por %p51, %p52
    %p55 = scmp.ne.s32.totalorder %s38, %s54
    %p56 = scmp.eq.s32.totalorder %s16, 0
    %p57 = por %p55, %p56
    %s59 = sadd.s32 %s58, 1
    %p62 = scmp.eq.s32.totalorder %s10, 3
    %p63 = scmp.ne.s32.totalorder %s58, %s60
    %p64 = scmp.eq.s32.totalorder %s10, 0
    %p65 = por %p63, %p64
    %p66 = scmp.ne.s32.totalorder %s58, %s60
    %p67 = scmp.eq.s32.totalorder %s15, 3
    %p68 = por %p66, %p67
    %p69 = scmp.ne.s32.totalorder %s60, %s61
    %p70 = scmp.eq.s32.totalorder %s15, 0
    %p71 = por %p69, %p70
    %p72 = scmp.ne.s32.totalorder %s60, %s61
    %p73 = scmp.eq.s32.totalorder %s16, 3
    %p74 = por %p72, %p73
    %p76 = scmp.ne.s32.totalorder %s61, %s75
    %p77 = scmp.eq.s32.totalorder %s16, 0
    %p78 = por %p76, %p77
    %s80 = sadd.s32 %s79, 1
    %p83 = scmp.eq.s32.totalorder %s10, 3
    %p84 = scmp.ne.s32.totalorder %s79, %s81
    %p85 = scmp.eq.s32.totalorder %s10, 0
    %p86 = por %p84, %p85
    %p87 = scmp.ne.s32.totalorder %s79, %s81
    %p88 = scmp.eq.s32.totalorder %s15, 3
    %p89 = por %p87, %p88
    %p90 = scmp.ne.s32.totalorder %s81, %s82
    %p91 = scmp.eq.s32.totalorder %s15, 0
    %p92 = por %p90, %p91
    %p93 = scmp.ne.s32.totalorder %s81, %s82
    %p94 = scmp.eq.s32.totalorder %s16, 3
    %p95 = por %p93, %p94
    %p97 = scmp.ne.s32.totalorder %s82, %s96
    %p98 = scmp.eq.s32.totalorder %s16, 0
    %p99 = por %p97, %p98
    %s100 = ssub.s32 %s17, %s29
    %s101 = ssub.s32 %s18, %s25
    %s102 = sor.u32 %s100, %s101
    %p103 = scmp.eq.s32.totalorder %s102, 0
    %s105 = sadd.s32 %s104, 1
    %s106 = scalar_select %p103, %s104, %s105
    %p109 = pneg %p103
    %p110 = scmp.eq.s32.totalorder %s10, 3
    %p111 = por %p109, %p110
    %p112 = scmp.ne.s32.totalorder %s104, %s107
    %p113 = scmp.eq.s32.totalorder %s10, 0
    %p114 = por %p112, %p113
    %p115 = scmp.ne.s32.totalorder %s104, %s107
    %p116 = scmp.eq.s32.totalorder %s15, 3
    %p117 = por %p115, %p116
    %p118 = scmp.ne.s32.totalorder %s107, %s108
    %p119 = scmp.eq.s32.totalorder %s15, 0
    %p120 = por %p118, %p119
    %p121 = scmp.ne.s32.totalorder %s107, %s108
    %p122 = scmp.eq.s32.totalorder %s16, 3
    %p123 = por %p121, %p122
    %p125 = scmp.ne.s32.totalorder %s108, %s124
    %p126 = scmp.eq.s32.totalorder %s16, 0
    %p127 = por %p125, %p126
    %s128 = ssub.s32 %s17, %s29
    %s129 = ssub.s32 %s18, %s25
    %s130 = sor.u32 %s128, %s129
    %p131 = scmp.eq.s32.totalorder %s130, 0
    %s133 = sadd.s32 %s132, 1
    %s134 = scalar_select %p131, %s132, %s133
    %p137 = pneg %p131
    %p138 = scmp.eq.s32.totalorder %s10, 3
    %p139 = por %p137, %p138
    %p140 = scmp.ne.s32.totalorder %s132, %s135
    %p141 = scmp.eq.s32.totalorder %s10, 0
    %p142 = por %p140, %p141
    %p143 = scmp.ne.s32.totalorder %s132, %s135
    %p144 = scmp.eq.s32.totalorder %s15, 3
    %p145 = por %p143, %p144
    %p146 = scmp.ne.s32.totalorder %s135, %s136
    %p147 = scmp.eq.s32.totalorder %s15, 0
    %p148 = por %p146, %p147
    %p149 = scmp.ne.s32.totalorder %s135, %s136
    %p150 = scmp.eq.s32.totalorder %s16, 3
    %p151 = por %p149, %p150
    %p153 = scmp.ne.s32.totalorder %s136, %s152
    %p154 = scmp.eq.s32.totalorder %s16, 0
    %p155 = por %p153, %p154
    %p156 = scmp.le.s32.totalorder 1, %s10
    %p157 = scmp.lt.s32.totalorder %s10, 5
    %p158 = pnand %p156, %p157
    %p159 = pneg %p158
    // Predicated region
    $region9: #{conv_encoder3_res_bn_forward.21} parent=5 // pred_check
      _
    $region10: #{conv_encoder3_res_bn_forward.21} parent=5 // pred_check_branch
      %161 = sbr.rel (%p158) target = $region12
    $region11: #{conv_encoder3_res_bn_forward.21} parent=5 // pred_region
      %s162 = ssub.s32 %s10, 1
      // Predicated region
      $region13: #{conv_encoder3_res_bn_forward.21} parent=11 // pred_check
        %p163 = pneg %p71
      $region14: #{conv_encoder3_res_bn_forward.21} parent=11 // pred_check_branch
        %165 = sbr.rel (%p163) target = $region16
      $region15: #{conv_encoder3_res_bn_forward.21} parent=11 // pred_region
        _
      $region16: #{conv_encoder3_res_bn_forward.21} parent=11 // pred_fallthru
        _
      // Predicated region
      $region17: #{conv_encoder3_res_bn_forward.21} parent=11 // pred_check
        %p166 = pneg %p92
      $region18: #{conv_encoder3_res_bn_forward.21} parent=11 // pred_check_branch
        %168 = sbr.rel (%p166) target = $region20
      $region19: #{conv_encoder3_res_bn_forward.21} parent=11 // pred_region
        _
      $region20: #{conv_encoder3_res_bn_forward.21} parent=11 // pred_fallthru
        _
    $region12: #{conv_encoder3_res_bn_forward.21} parent=5 // pred_fallthru
      _
    %p169 = scmp.lt.s32.totalorder %s10, 4
    // Predicated region
    $region21: #{conv_encoder3_res_bn_forward.21} parent=5 // pred_check
      %p170 = pneg %p169
    $region22: #{conv_encoder3_res_bn_forward.21} parent=5 // pred_check_branch
      %172 = sbr.rel (%p170) target = $region24
    $region23: #{conv_encoder3_res_bn_forward.21} parent=5 // pred_region
      // Predicated region
      $region25: #{conv_encoder3_res_bn_forward.21} parent=23 // pred_check
        %p173 = pneg %p44
      $region26: #{conv_encoder3_res_bn_forward.21} parent=23 // pred_check_branch
        %175 = sbr.rel (%p173) target = $region28
      $region27: #{conv_encoder3_res_bn_forward.21} parent=23 // pred_region
        %p176 = scmp.lt.s32.totalorder %s17, 1
        %s177 = scalar_select %p176, %s17, 1
        %p178 = scmp.lt.s32.totalorder %s18, 1
        %s179 = scalar_select %p178, %s18, 1
        %s180 = smul.addr %s177, 2
        %s181 = sadd.s32 %s179, %s180
        %s182 = smul.addr %s181, 4
        %s183 = scalar_lea.vmem %s0, %s182
      $region28: #{conv_encoder3_res_bn_forward.21} parent=23 // pred_fallthru
        _
      // Predicated region
      $region29: #{conv_encoder3_res_bn_forward.21} parent=23 // pred_check
        %p184 = pneg %p114
      $region30: #{conv_encoder3_res_bn_forward.21} parent=23 // pred_check_branch
        %186 = sbr.rel (%p184) target = $region32
      $region31: #{conv_encoder3_res_bn_forward.21} parent=23 // pred_region
        %p187 = scmp.lt.s32.totalorder %s17, 1
        %s188 = scalar_select %p187, %s17, 1
        %p189 = scmp.lt.s32.totalorder %s18, 1
        %s190 = scalar_select %p189, %s18, 1
        %s191 = smul.addr %s188, 2
        %s192 = sadd.s32 %s190, %s191
        %s193 = smul.addr %s192, 4
        %s194 = scalar_lea.vmem %s3, %s193
      $region32: #{conv_encoder3_res_bn_forward.21} parent=23 // pred_fallthru
        _
    $region24: #{conv_encoder3_res_bn_forward.21} parent=5 // pred_fallthru
      _
    %p195 = scmp.le.s32.totalorder 1, %s10
    %p196 = scmp.lt.s32.totalorder %s10, 5
    %p197 = pnand %p195, %p196
    %p198 = pneg %p197
    // Predicated region
    $region33: #{conv_encoder3_res_bn_forward.21} parent=5 // pred_check
      _
    $region34: #{conv_encoder3_res_bn_forward.21} parent=5 // pred_check_branch
      %200 = sbr.rel (%p197) target = $region36
    $region35: #{conv_encoder3_res_bn_forward.21} parent=5 // pred_region
      %s201 = ssub.s32 %s10, 1
      %p202 = scmp.lt.s32.totalorder %s19, 1
      %s203 = scalar_select %p202, %s19, 1
      %p204 = scmp.lt.s32.totalorder %s20, 1
      %s205 = scalar_select %p204, %s20, 1
      %s206 = smul.addr %s203, 2
      %s207 = sadd.s32 %s205, %s206
      %s208 = smul.addr %s207, 4
      %s209 = scalar_lea.vmem %s0, %s208
      %p210 = pneg %p50
      %p211 = pneg %p47
      %p212 = pneg %p71
      %p213 = pneg %p68
      %p214 = pneg %p92
      %p215 = pneg %p89
      %p216 = scmp.lt.s32.totalorder %s19, 1
      %s217 = scalar_select %p216, %s19, 1
      %p218 = scmp.lt.s32.totalorder %s20, 1
      %s219 = scalar_select %p218, %s20, 1
      %s220 = smul.addr %s217, 2
      %s221 = sadd.s32 %s219, %s220
      %s222 = smul.addr %s221, 4
      %s223 = scalar_lea.vmem %s3, %s222
      %p224 = pneg %p120
      %p225 = pneg %p117
      %p226 = pneg %p148
      %p227 = pneg %p145
      %p228 = scmp.lt.s32.totalorder %s19, 1
      %s229 = scalar_select %p228, %s19, 1
      %p230 = scmp.lt.s32.totalorder %s20, 1
      %s231 = scalar_select %p230, %s20, 1
      %s232 = smul.addr %s229, 2
      %s233 = sadd.s32 %s231, %s232
      %s234 = smul.addr %s233, 4
      %s235 = scalar_lea.vmem %s4, %s234
      %p236 = scmp.lt.s32.totalorder %s19, 1
      %s237 = scalar_select %p236, %s19, 1
      %p238 = scmp.lt.s32.totalorder %s20, 1
      %s239 = scalar_select %p238, %s20, 1
      %s240 = smul.addr %s237, 2
      %s241 = sadd.s32 %s239, %s240
      %s242 = smul.addr %s241, 4
      %s243 = scalar_lea.vmem %s0, %s242
      %p244 = scmp.lt.s32.totalorder %s19, 1
      %s245 = scalar_select %p244, %s19, 1
      %p246 = scmp.lt.s32.totalorder %s20, 1
      %s247 = scalar_select %p246, %s20, 1
      %s248 = smul.addr %s245, 2
      %s249 = sadd.s32 %s247, %s248
      %s250 = smul.addr %s249, 4
      %s251 = scalar_lea.vmem %s3, %s250
      %p252 = scmp.lt.s32.totalorder %s19, 1
      %s253 = scalar_select %p252, %s19, 1
      %p254 = scmp.lt.s32.totalorder %s20, 1
      %s255 = scalar_select %p254, %s20, 1
      %s256 = smul.addr %s253, 2
      %s257 = sadd.s32 %s255, %s256
      %s258 = smul.addr %s257, 4
      %s259 = scalar_lea.vmem %s4, %s258
      %v260 = vld [vmem:[%s243] sm:$0xf]
      %v261 = vunpack.c.l.bf16 %v260
      %v262 = vld [vmem:[%s1] sm:$0x1]
      %v264 = vperm.slane %v262, 0
      %v266 = vmul.f32 %v261, %v264
      %v267 = vld [vmem:[%s2] sm:$0x1]
      %v269 = vperm.slane %v267, 0
      %v271 = vadd.f32 %v266, %v269
      %v272 = vmul.f32 %v271, 0.5
      %v273 = vmul.f32 %v271, 0.70710677
      %v274 = vmul.f32 %v273, %v273
      %v275 = vmin.f32 16.0, %v274
      %v276 = vmul.f32 %v275, 2.1237322e-06
      %v277 = vadd.f32 %v276, 0.00028619796
      %v278 = vmul.f32 %v275, %v277
      %v279 = vadd.f32 %v278, 0.0036580483
      %v280 = vmul.f32 %v275, %v279
      %v281 = vadd.f32 %v280, 0.05243302
      %v282 = vmul.f32 %v275, %v281
      %v283 = vadd.f32 %v282, 0.18741608
      %v284 = vmul.f32 %v275, %v283
      %v285 = vadd.f32 %v284, 1.1283791
      %v286 = vmul.f32 %v273, %v285
      %v287 = vmul.f32 %v275, 3.8918573e-05
      %v288 = vadd.f32 %v287, 0.001143296
      %v289 = vmul.f32 %v275, %v288
      %v290 = vadd.f32 %v289, 0.014752088
      %v291 = vmul.f32 %v275, %v290
      %v292 = vadd.f32 %v291, 0.112945676
      %v293 = vmul.f32 %v275, %v292
      %v294 = vadd.f32 %v293, 0.4994258
      %v295 = vmul.f32 %v275, %v294
      %v296 = vadd.f32 %v295, 1.0
      %v297 = vrcp.pop %v296
      %v298 = vmul.f32 %v296, %v297
      %v299 = vsub.f32 1.0, %v298
      %v300 = vmul.f32 %v297, %v299
      %v301 = vadd.f32 %v297, %v300
      %vm302 = vweird.f32 %v296
      %vm303 = vweird.f32 %v297
      %vm304 = vmor %vm302, %vm303
      %v305 = vsel %vm304, %v297, %v301
      %v306 = vand.u32 2147483647, %v296
      %vm307 = vcmp.eq.f32.partialorder %v306, 8.507059e+37
      %v308 = vand.u32 %v296, 2147483648
      %v309 = vor.u32 1.1754944e-38, %v308
      %v310 = vsel %vm307, %v309, %v305
      %v311 = vmul.f32 %v286, %v310
      %v312 = vmin.f32 %v311, 1.0
      %v313 = vmax.f32 %v312, -1.0
      %v314 = vadd.f32 %v313, 1.0
      %v315 = vmul.f32 %v272, %v314
      %v316 = vld [vmem:[%s251] sm:$0xf]
      %v317 = vunpack.c.l.bf16 %v316
      %v318 = vadd.f32 %v315, %v317
      %s319 = smul.u32 %s20, 8
      %v320 = vlaneseq
      %v321 = vshrl.u32 %v320, 7
      %v322 = vstv %s319
      %v323 = vadd.s32 %v322, %v321
      %vm324 = vcmp.lt.s32.totalorder %v323, 12
      %v325 = vsel %vm324, 1, 0
      %vm326 = vcmp.eq.s32.totalorder %v325, 1
      %v327 = vsel %vm326, %v318, 0.0
      %v328 = vpack.c.bf16 %v327, %v327
      %329 = vst [vmem:[%s259] sm:$0xf] %v328
      %p330 = scmp.lt.s32.totalorder %s19, 1
      %s331 = scalar_select %p330, %s19, 1
      %p332 = scmp.lt.s32.totalorder %s20, 1
      %s333 = scalar_select %p332, %s20, 1
      %s334 = smul.addr %s331, 2
      %s335 = sadd.s32 %s333, %s334
      %s336 = smul.addr %s335, 4
      %s337 = scalar_lea.vmem %s4, %s336
      // Predicated region
      $region37: #{conv_encoder3_res_bn_forward.21} parent=35 // pred_check
        %p338 = pneg %p145
      $region38: #{conv_encoder3_res_bn_forward.21} parent=35 // pred_check_branch
        %340 = sbr.rel (%p338) target = $region40
      $region39: #{conv_encoder3_res_bn_forward.21} parent=35 // pred_region
        _
      $region40: #{conv_encoder3_res_bn_forward.21} parent=35 // pred_fallthru
        _
    $region36: #{conv_encoder3_res_bn_forward.21} parent=5 // pred_fallthru
      _
    %p341 = scmp.le.s32.totalorder 2, %s10
    // Predicated region
    $region41: #{conv_encoder3_res_bn_forward.21} parent=5 // pred_check
      %p342 = pneg %p341
    $region42: #{conv_encoder3_res_bn_forward.21} parent=5 // pred_check_branch
      %344 = sbr.rel (%p342) target = $region44
    $region43: #{conv_encoder3_res_bn_forward.21} parent=5 // pred_region
      %s345 = ssub.s32 %s10, 2
      // Predicated region
      $region45: #{conv_encoder3_res_bn_forward.21} parent=43 // pred_check
        %p346 = pneg %p151
      $region46: #{conv_encoder3_res_bn_forward.21} parent=43 // pred_check_branch
        %348 = sbr.rel (%p346) target = $region48
      $region47: #{conv_encoder3_res_bn_forward.21} parent=43 // pred_region
        %p349 = scmp.lt.s32.totalorder %s21, 1
        %s350 = scalar_select %p349, %s21, 1
        %p351 = scmp.lt.s32.totalorder %s22, 1
        %s352 = scalar_select %p351, %s22, 1
        %s353 = smul.addr %s350, 2
        %s354 = sadd.s32 %s352, %s353
        %s355 = smul.addr %s354, 4
        %s356 = scalar_lea.vmem %s4, %s355
      $region48: #{conv_encoder3_res_bn_forward.21} parent=43 // pred_fallthru
        _
    $region44: #{conv_encoder3_res_bn_forward.21} parent=5 // pred_fallthru
      _
  $region6: #{conv_encoder3_res_bn_forward.21} parent=0 // loop_footer
    %s14 = sadd.s32 1, %s10
  $region7: #{conv_encoder3_res_bn_forward.21} parent=0 // loop_footer_branch
    %9 = sbr.rel target = $region3
  $region8: #{conv_encoder3_res_bn_forward.21} parent=0 // loop_exit
    _

// kernel: conv_encoder3_res_bn_forward.18
$region0: #{conv_encoder3_res_bn_forward.18}
  #allocation0 [shape = 'u32[]', space=smem, size = 0x4, offset = 0x4, fixed_abs, tag = 'smem constant byte address 0x4 - core index']
  #allocation1 [shape = 'u32[72,128]{1,0:T(1,128)}', space=vmem, size = 0x9000, scoped, tag = 'internal scratch']
  %s0 = inlined_call_operand.vmem [shape: bf16[2,24,128], index: 0, kind: input, shape index: {}]
  %s1 = inlined_call_operand.vmem [shape: bf16[3,128,128], index: 1, kind: input, shape index: {}]
  %s2 = inlined_call_operand.vmem [shape: f32[1,128], index: 2, kind: input, shape index: {}]
  %s3 = inlined_call_operand.vmem [shape: bf16[2,16,128], index: 3, kind: output, shape index: {0}]
  %s4 = inlined_call_operand.vmem [shape: f32[32,128], index: 4, kind: output, shape index: {1}]
  %5 = xla_tuple %s3, %s4
  %s6 = sld [smem:[#allocation0]]
  $region53: #{conv_encoder3_res_bn_forward.18} parent=0
    _
  %s8 = ssub.s32 1, %s6
  %s9 = scalar_select 0, %s8, %s6
  loop: start=0, step=1, limit=6
  $region2: #{conv_encoder3_res_bn_forward.18} parent=0 // loop_pre_header
    _
  $region3: #{conv_encoder3_res_bn_forward.18} parent=0 // loop_header
    %s11 = sphi 0, %s15
    %p12 = scmp.ge.s32.totalorder %s11, 6
    %s18 = sphi 0, %s30
    %s19 = sphi 0, %s26
    %s20 = sphi 0, %s18
    %s21 = sphi 0, %s19
    %s22 = sphi 0, %s20
    %s23 = sphi 0, %s21
    %s33 = sphi 0, %s35
    %s36 = sphi 0, %s33
    %s37 = sphi 0, %s36
    %s53 = sphi 0, %s37
    %s57 = sphi 0, %s57
    %s59 = sphi 0, %s57
    %s60 = sphi 0, %s59
    %s74 = sphi 0, %s60
    %s78 = sphi 0, %s78
    %s80 = sphi 0, %s78
    %s81 = sphi 0, %s80
    %s95 = sphi 0, %s81
    %s103 = sphi 0, %s105
    %s106 = sphi 0, %s103
    %s107 = sphi 0, %s106
    %s123 = sphi 0, %s107
    %s133 = sphi 0, %s135
    %s136 = sphi 0, %s133
    %s137 = sphi 0, %s136
    %s153 = sphi 0, %s137
  $region4: #{conv_encoder3_res_bn_forward.18} parent=0 // loop_header_branch
    %14 = sbr.rel (%p12) target = $region8
  $region5: #{conv_encoder3_res_bn_forward.18} parent=0 // loop_body
    %s16 = ssub.s32 %s11, 1
    %s17 = ssub.s32 %s11, 2
    %s24 = sadd.s32 1, %s19
    %p25 = scmp.ge.s32.totalorder %s24, 2
    %s26 = scalar_select %p25, 0, %s24
    %s27 = sadd.s32 1, %s18
    %s28 = scalar_select %p25, %s27, %s18
    %p29 = scmp.ge.s32.totalorder %s28, 2
    %s30 = scalar_select %p29, 0, %s28
    %s31 = ssub.s32 %s18, %s30
    %p32 = scmp.eq.s32.totalorder %s31, 0
    %s34 = sadd.s32 %s33, 1
    %s35 = scalar_select %p32, %s33, %s34
    %p38 = pneg %p32
    %p39 = scmp.eq.s32.totalorder %s11, 3
    %p40 = por %p38, %p39
    %p41 = scmp.ne.s32.totalorder %s33, %s36
    %p42 = scmp.eq.s32.totalorder %s11, 0
    %p43 = por %p41, %p42
    %p44 = scmp.ne.s32.totalorder %s33, %s36
    %p45 = scmp.eq.s32.totalorder %s16, 3
    %p46 = por %p44, %p45
    %p47 = scmp.ne.s32.totalorder %s36, %s37
    %p48 = scmp.eq.s32.totalorder %s16, 0
    %p49 = por %p47, %p48
    %p50 = scmp.ne.s32.totalorder %s36, %s37
    %p51 = scmp.eq.s32.totalorder %s17, 3
    %p52 = por %p50, %p51
    %p54 = scmp.ne.s32.totalorder %s37, %s53
    %p55 = scmp.eq.s32.totalorder %s17, 0
    %p56 = por %p54, %p55
    %s58 = sadd.s32 %s57, 1
    %p61 = scmp.eq.s32.totalorder %s11, 3
    %p62 = scmp.ne.s32.totalorder %s57, %s59
    %p63 = scmp.eq.s32.totalorder %s11, 0
    %p64 = por %p62, %p63
    %p65 = scmp.ne.s32.totalorder %s57, %s59
    %p66 = scmp.eq.s32.totalorder %s16, 3
    %p67 = por %p65, %p66
    %p68 = scmp.ne.s32.totalorder %s59, %s60
    %p69 = scmp.eq.s32.totalorder %s16, 0
    %p70 = por %p68, %p69
    %p71 = scmp.ne.s32.totalorder %s59, %s60
    %p72 = scmp.eq.s32.totalorder %s17, 3
    %p73 = por %p71, %p72
    %p75 = scmp.ne.s32.totalorder %s60, %s74
    %p76 = scmp.eq.s32.totalorder %s17, 0
    %p77 = por %p75, %p76
    %s79 = sadd.s32 %s78, 1
    %p82 = scmp.eq.s32.totalorder %s11, 3
    %p83 = scmp.ne.s32.totalorder %s78, %s80
    %p84 = scmp.eq.s32.totalorder %s11, 0
    %p85 = por %p83, %p84
    %p86 = scmp.ne.s32.totalorder %s78, %s80
    %p87 = scmp.eq.s32.totalorder %s16, 3
    %p88 = por %p86, %p87
    %p89 = scmp.ne.s32.totalorder %s80, %s81
    %p90 = scmp.eq.s32.totalorder %s16, 0
    %p91 = por %p89, %p90
    %p92 = scmp.ne.s32.totalorder %s80, %s81
    %p93 = scmp.eq.s32.totalorder %s17, 3
    %p94 = por %p92, %p93
    %p96 = scmp.ne.s32.totalorder %s81, %s95
    %p97 = scmp.eq.s32.totalorder %s17, 0
    %p98 = por %p96, %p97
    %s99 = ssub.s32 %s18, %s30
    %s100 = ssub.s32 %s19, %s26
    %s101 = sor.u32 %s99, %s100
    %p102 = scmp.eq.s32.totalorder %s101, 0
    %s104 = sadd.s32 %s103, 1
    %s105 = scalar_select %p102, %s103, %s104
    %p108 = pneg %p102
    %p109 = scmp.eq.s32.totalorder %s11, 3
    %p110 = por %p108, %p109
    %p111 = scmp.ne.s32.totalorder %s103, %s106
    %p112 = scmp.eq.s32.totalorder %s11, 0
    %p113 = por %p111, %p112
    %p114 = scmp.ne.s32.totalorder %s103, %s106
    %p115 = scmp.eq.s32.totalorder %s16, 3
    %p116 = por %p114, %p115
    %p117 = scmp.ne.s32.totalorder %s106, %s107
    %p118 = scmp.eq.s32.totalorder %s16, 0
    %p119 = por %p117, %p118
    %p120 = scmp.ne.s32.totalorder %s106, %s107
    %p121 = scmp.eq.s32.totalorder %s17, 3
    %p122 = por %p120, %p121
    %p124 = scmp.ne.s32.totalorder %s107, %s123
    %p125 = scmp.eq.s32.totalorder %s17, 0
    %p126 = por %p124, %p125
    %s127 = smul.u32 %s18, 2
    %s128 = sadd.s32 %s127, %s19
    %s129 = smul.u32 %s30, 2
    %s130 = sadd.s32 %s129, %s26
    %s131 = ssub.s32 %s128, %s130
    %p132 = scmp.eq.s32.totalorder %s131, 0
    %s134 = sadd.s32 %s133, 1
    %s135 = scalar_select %p132, %s133, %s134
    %p138 = pneg %p132
    %p139 = scmp.eq.s32.totalorder %s11, 3
    %p140 = por %p138, %p139
    %p141 = scmp.ne.s32.totalorder %s133, %s136
    %p142 = scmp.eq.s32.totalorder %s11, 0
    %p143 = por %p141, %p142
    %p144 = scmp.ne.s32.totalorder %s133, %s136
    %p145 = scmp.eq.s32.totalorder %s16, 3
    %p146 = por %p144, %p145
    %p147 = scmp.ne.s32.totalorder %s136, %s137
    %p148 = scmp.eq.s32.totalorder %s16, 0
    %p149 = por %p147, %p148
    %p150 = scmp.ne.s32.totalorder %s136, %s137
    %p151 = scmp.eq.s32.totalorder %s17, 3
    %p152 = por %p150, %p151
    %p154 = scmp.ne.s32.totalorder %s137, %s153
    %p155 = scmp.eq.s32.totalorder %s17, 0
    %p156 = por %p154, %p155
    %p157 = scmp.le.s32.totalorder 1, %s11
    %p158 = scmp.lt.s32.totalorder %s11, 5
    %p159 = pnand %p157, %p158
    %p160 = pneg %p159
    // Predicated region
    $region9: #{conv_encoder3_res_bn_forward.18} parent=5 // pred_check
      _
    $region10: #{conv_encoder3_res_bn_forward.18} parent=5 // pred_check_branch
      %162 = sbr.rel (%p159) target = $region12
    $region11: #{conv_encoder3_res_bn_forward.18} parent=5 // pred_region
      %s163 = ssub.s32 %s11, 1
      // Predicated region
      $region13: #{conv_encoder3_res_bn_forward.18} parent=11 // pred_check
        %p164 = pneg %p70
      $region14: #{conv_encoder3_res_bn_forward.18} parent=11 // pred_check_branch
        %166 = sbr.rel (%p164) target = $region16
      $region15: #{conv_encoder3_res_bn_forward.18} parent=11 // pred_region
        _
      $region16: #{conv_encoder3_res_bn_forward.18} parent=11 // pred_fallthru
        _
      // Predicated region
      $region17: #{conv_encoder3_res_bn_forward.18} parent=11 // pred_check
        %p167 = pneg %p91
      $region18: #{conv_encoder3_res_bn_forward.18} parent=11 // pred_check_branch
        %169 = sbr.rel (%p167) target = $region20
      $region19: #{conv_encoder3_res_bn_forward.18} parent=11 // pred_region
        _
      $region20: #{conv_encoder3_res_bn_forward.18} parent=11 // pred_fallthru
        _
    $region12: #{conv_encoder3_res_bn_forward.18} parent=5 // pred_fallthru
      _
    %p170 = scmp.lt.s32.totalorder %s11, 4
    // Predicated region
    $region21: #{conv_encoder3_res_bn_forward.18} parent=5 // pred_check
      %p171 = pneg %p170
    $region22: #{conv_encoder3_res_bn_forward.18} parent=5 // pred_check_branch
      %173 = sbr.rel (%p171) target = $region24
    $region23: #{conv_encoder3_res_bn_forward.18} parent=5 // pred_region
      // Predicated region
      $region25: #{conv_encoder3_res_bn_forward.18} parent=23 // pred_check
        %p174 = pneg %p43
      $region26: #{conv_encoder3_res_bn_forward.18} parent=23 // pred_check_branch
        %176 = sbr.rel (%p174) target = $region28
      $region27: #{conv_encoder3_res_bn_forward.18} parent=23 // pred_region
        %p177 = scmp.lt.s32.totalorder %s18, 1
        %s178 = scalar_select %p177, %s18, 1
        %s179 = smul.addr %s178, 3
        %s180 = smul.addr %s179, 4
        %s181 = scalar_lea.vmem %s0, %s180
      $region28: #{conv_encoder3_res_bn_forward.18} parent=23 // pred_fallthru
        _
    $region24: #{conv_encoder3_res_bn_forward.18} parent=5 // pred_fallthru
      _
    %p182 = scmp.le.s32.totalorder 1, %s11
    %p183 = scmp.lt.s32.totalorder %s11, 5
    %p184 = pnand %p182, %p183
    %p185 = pneg %p184
    // Predicated region
    $region29: #{conv_encoder3_res_bn_forward.18} parent=5 // pred_check
      _
    $region30: #{conv_encoder3_res_bn_forward.18} parent=5 // pred_check_branch
      %187 = sbr.rel (%p184) target = $region32
    $region31: #{conv_encoder3_res_bn_forward.18} parent=5 // pred_region
      %s188 = ssub.s32 %s11, 1
      %p189 = scmp.lt.s32.totalorder %s20, 1
      %s190 = scalar_select %p189, %s20, 1
      %s191 = smul.addr %s190, 3
      %s192 = smul.addr %s191, 4
      %s193 = scalar_lea.vmem %s0, %s192
      %p194 = pneg %p49
      %p195 = pneg %p46
      %p196 = pneg %p70
      %p197 = pneg %p67
      %p198 = pneg %p91
      %p199 = pneg %p88
      %p200 = pneg %p119
      %p201 = pneg %p116
      %p202 = scmp.lt.s32.totalorder %s20, 1
      %s203 = scalar_select %p202, %s20, 1
      %p204 = scmp.lt.s32.totalorder %s21, 1
      %s205 = scalar_select %p204, %s21, 1
      %s206 = smul.addr %s203, 2
      %s207 = sadd.s32 %s205, %s206
      %s208 = smul.addr %s207, 4
      %s209 = scalar_lea.vmem %s3, %s208
      %p210 = pneg %p149
      %p211 = pneg %p146
      %s212 = smul.u32 %s20, 2
      %s213 = sadd.s32 %s212, %s21
      %p214 = scmp.lt.s32.totalorder %s213, 3
      %s215 = scalar_select %p214, %s213, 3
      %s216 = smul.addr %s215, 8
      %s217 = scalar_lea.vmem %s4, %s216
      %p218 = scmp.lt.s32.totalorder %s20, 1
      %s219 = scalar_select %p218, %s20, 1
      %s220 = smul.addr %s219, 3
      %s221 = smul.addr %s220, 4
      %s222 = scalar_lea.vmem %s0, %s221
      %p223 = scmp.lt.s32.totalorder %s20, 1
      %s224 = scalar_select %p223, %s20, 1
      %p225 = scmp.lt.s32.totalorder %s21, 1
      %s226 = scalar_select %p225, %s21, 1
      %s227 = smul.addr %s224, 2
      %s228 = sadd.s32 %s226, %s227
      %s229 = smul.addr %s228, 4
      %s230 = scalar_lea.vmem %s3, %s229
      %s231 = smul.u32 %s20, 2
      %s232 = sadd.s32 %s231, %s21
      %p233 = scmp.lt.s32.totalorder %s232, 3
      %s234 = scalar_select %p233, %s232, 3
      %s235 = smul.addr %s234, 8
      %s236 = scalar_lea.vmem %s4, %s235
      %s237 = smul.u32 %s20, 2
      %s238 = sadd.s32 %s237, %s21
      %s239 = smul.u32 %s21, 8
      %s240 = sshra.s32 %s239, 3
      %s241 = sand.u32 %s239, 7
      %s242 = smul.addr %s240, 4
      %s243 = scalar_lea.vmem %s222, %s242
      %v244 = vld [vmem:[%s243] sm:$0xf]
      %v245 = vld [vmem:[%s243 + $0x4] sm:$0xf]
      %v246 = vld [vmem:[%s1] sm:$0xf]
      %v247 = vld [vmem:[%s1 + $0x4] sm:$0xf]
      %v248 = vld [vmem:[%s1 + $0x8] sm:$0xf]
      %v249 = vld [vmem:[%s1 + $0xc] sm:$0xf]
      %v250 = vld [vmem:[%s1 + $0x10] sm:$0xf]
      %v251 = vld [vmem:[%s1 + $0x14] sm:$0xf]
      %v252 = vld [vmem:[%s1 + $0x18] sm:$0xf]
      %v253 = vld [vmem:[%s1 + $0x1c] sm:$0xf]
      %v254 = vld [vmem:[%s1 + $0x20] sm:$0xf]
      %v255 = vld [vmem:[%s1 + $0x24] sm:$0xf]
      %v256 = vld [vmem:[%s1 + $0x28] sm:$0xf]
      %v257 = vld [vmem:[%s1 + $0x2c] sm:$0xf]
      %v258 = vld [vmem:[%s1 + $0x30] sm:$0xf]
      %v259 = vld [vmem:[%s1 + $0x34] sm:$0xf]
      %v260 = vld [vmem:[%s1 + $0x38] sm:$0xf]
      %v261 = vld [vmem:[%s1 + $0x3c] sm:$0xf]
      %v264 = vunpack.c.l.b16 %v244
      %v265 = vunpack.c.l.b16 %v245
      %v266 = vpack.c.b16 %v265, %v264
      %v284 = vunpack.c.l.b16 %v246
      %v285 = vunpack.c.l.b16 %v247
      %v286 = vunpack.c.l.b16 %v248
      %v287 = vunpack.c.l.b16 %v249
      %v288 = vunpack.c.l.b16 %v250
      %v289 = vunpack.c.l.b16 %v251
      %v290 = vunpack.c.l.b16 %v252
      %v291 = vunpack.c.l.b16 %v253
      %v292 = vunpack.c.l.b16 %v254
      %v293 = vunpack.c.l.b16 %v255
      %v294 = vunpack.c.l.b16 %v256
      %v295 = vunpack.c.l.b16 %v257
      %v296 = vunpack.c.l.b16 %v258
      %v297 = vunpack.c.l.b16 %v259
      %v298 = vunpack.c.l.b16 %v260
      %v299 = vunpack.c.l.b16 %v261
      %v300 = vpack.c.b16 %v285, %v284
      %v301 = vpack.c.b16 %v287, %v286
      %v302 = vpack.c.b16 %v289, %v288
      %v303 = vpack.c.b16 %v291, %v290
      %v304 = vpack.c.b16 %v293, %v292
      %v305 = vpack.c.b16 %v295, %v294
      %v306 = vpack.c.b16 %v297, %v296
      %v307 = vpack.c.b16 %v299, %v298
      %316 = vmatpush.bf16.msra.mxu0 %v307
      %317 = vmatpush.bf16.msra.mxu0 %v306
      %318 = vmatpush.bf16.msra.mxu0 %v305
      %319 = vmatpush.bf16.msra.mxu0 %v304
      %320 = vmatpush.bf16.msra.mxu0 %v303
      %321 = vmatpush.bf16.msra.mxu0 %v302
      %322 = vmatpush.bf16.msra.mxu0 %v301
      %323 = vmatpush.bf16.msra.mxu0 %v300
      %324 = vmatmul.bf16.gmra.mxu0 %v266
      %v325 = vpop.f32.mrf.mxu0
      %v326 = vadd.f32 0.0, %v325
      %v327 = vpop.f32.mrf.mxu0
      %328 = vdwg.mxu0
      %s329 = scalar_lea.vmem %s1, 64
      %v330 = vld [vmem:[%s329] sm:$0xf]
      %v331 = vld [vmem:[%s329 + $0x4] sm:$0xf]
      %v332 = vld [vmem:[%s329 + $0x8] sm:$0xf]
      %v333 = vld [vmem:[%s329 + $0xc] sm:$0xf]
      %v334 = vld [vmem:[%s329 + $0x10] sm:$0xf]
      %v335 = vld [vmem:[%s329 + $0x14] sm:$0xf]
      %v336 = vld [vmem:[%s329 + $0x18] sm:$0xf]
      %v337 = vld [vmem:[%s329 + $0x1c] sm:$0xf]
      %v338 = vld [vmem:[%s329 + $0x20] sm:$0xf]
      %v339 = vld [vmem:[%s329 + $0x24] sm:$0xf]
      %v340 = vld [vmem:[%s329 + $0x28] sm:$0xf]
      %v341 = vld [vmem:[%s329 + $0x2c] sm:$0xf]
      %v342 = vld [vmem:[%s329 + $0x30] sm:$0xf]
      %v343 = vld [vmem:[%s329 + $0x34] sm:$0xf]
      %v344 = vld [vmem:[%s329 + $0x38] sm:$0xf]
      %v345 = vld [vmem:[%s329 + $0x3c] sm:$0xf]
      %v362 = vunpack.c.l.b16 %v330
      %v363 = vunpack.c.l.b16 %v331
      %v364 = vunpack.c.l.b16 %v332
      %v365 = vunpack.c.l.b16 %v333
      %v366 = vunpack.c.l.b16 %v334
      %v367 = vunpack.c.l.b16 %v335
      %v368 = vunpack.c.l.b16 %v336
      %v369 = vunpack.c.l.b16 %v337
      %v370 = vunpack.c.l.b16 %v338
      %v371 = vunpack.c.l.b16 %v339
      %v372 = vunpack.c.l.b16 %v340
      %v373 = vunpack.c.l.b16 %v341
      %v374 = vunpack.c.l.b16 %v342
      %v375 = vunpack.c.l.b16 %v343
      %v376 = vunpack.c.l.b16 %v344
      %v377 = vunpack.c.l.b16 %v345
      %v378 = vpack.c.b16 %v363, %v362
      %v379 = vpack.c.b16 %v365, %v364
      %v380 = vpack.c.b16 %v367, %v366
      %v381 = vpack.c.b16 %v369, %v368
      %v382 = vpack.c.b16 %v371, %v370
      %v383 = vpack.c.b16 %v373, %v372
      %v384 = vpack.c.b16 %v375, %v374
      %v385 = vpack.c.b16 %v377, %v376
      %394 = vmatpush.bf16.msra.mxu0 %v385
      %395 = vmatpush.bf16.msra.mxu0 %v384
      %396 = vmatpush.bf16.msra.mxu0 %v383
      %397 = vmatpush.bf16.msra.mxu0 %v382
      %398 = vmatpush.bf16.msra.mxu0 %v381
      %399 = vmatpush.bf16.msra.mxu0 %v380
      %400 = vmatpush.bf16.msra.mxu0 %v379
      %401 = vmatpush.bf16.msra.mxu0 %v378
      %402 = vmatmul.bf16.gmra.mxu0 %v266
      %v403 = vpop.f32.mrf.mxu0
      %v404 = vadd.f32 0.0, %v403
      %v405 = vpop.f32.mrf.mxu0
      %v406 = vadd.f32 0.0, %v405
      %407 = vdwg.mxu0
      %vm410 = vcmask 1046528
      %v411 = vrot.slane %v404, 1
      %v412 = vrot.slane %v406, 1
      %v413 = vsel %vm410, %v411, %v412
      %v415 = vadd.f32 %v326, %v413
      %s416 = scalar_lea.vmem %s1, 128
      %v417 = vld [vmem:[%s416] sm:$0xf]
      %v418 = vld [vmem:[%s416 + $0x4] sm:$0xf]
      %v419 = vld [vmem:[%s416 + $0x8] sm:$0xf]
      %v420 = vld [vmem:[%s416 + $0xc] sm:$0xf]
      %v421 = vld [vmem:[%s416 + $0x10] sm:$0xf]
      %v422 = vld [vmem:[%s416 + $0x14] sm:$0xf]
      %v423 = vld [vmem:[%s416 + $0x18] sm:$0xf]
      %v424 = vld [vmem:[%s416 + $0x1c] sm:$0xf]
      %v425 = vld [vmem:[%s416 + $0x20] sm:$0xf]
      %v426 = vld [vmem:[%s416 + $0x24] sm:$0xf]
      %v427 = vld [vmem:[%s416 + $0x28] sm:$0xf]
      %v428 = vld [vmem:[%s416 + $0x2c] sm:$0xf]
      %v429 = vld [vmem:[%s416 + $0x30] sm:$0xf]
      %v430 = vld [vmem:[%s416 + $0x34] sm:$0xf]
      %v431 = vld [vmem:[%s416 + $0x38] sm:$0xf]
      %v432 = vld [vmem:[%s416 + $0x3c] sm:$0xf]
      %v449 = vunpack.c.l.b16 %v417
      %v450 = vunpack.c.l.b16 %v418
      %v451 = vunpack.c.l.b16 %v419
      %v452 = vunpack.c.l.b16 %v420
      %v453 = vunpack.c.l.b16 %v421
      %v454 = vunpack.c.l.b16 %v422
      %v455 = vunpack.c.l.b16 %v423
      %v456 = vunpack.c.l.b16 %v424
      %v457 = vunpack.c.l.b16 %v425
      %v458 = vunpack.c.l.b16 %v426
      %v459 = vunpack.c.l.b16 %v427
      %v460 = vunpack.c.l.b16 %v428
      %v461 = vunpack.c.l.b16 %v429
      %v462 = vunpack.c.l.b16 %v430
      %v463 = vunpack.c.l.b16 %v431
      %v464 = vunpack.c.l.b16 %v432
      %v465 = vpack.c.b16 %v450, %v449
      %v466 = vpack.c.b16 %v452, %v451
      %v467 = vpack.c.b16 %v454, %v453
      %v468 = vpack.c.b16 %v456, %v455
      %v469 = vpack.c.b16 %v458, %v457
      %v470 = vpack.c.b16 %v460, %v459
      %v471 = vpack.c.b16 %v462, %v461
      %v472 = vpack.c.b16 %v464, %v463
      %481 = vmatpush.bf16.msra.mxu0 %v472
      %482 = vmatpush.bf16.msra.mxu0 %v471
      %483 = vmatpush.bf16.msra.mxu0 %v470
      %484 = vmatpush.bf16.msra.mxu0 %v469
      %485 = vmatpush.bf16.msra.mxu0 %v468
      %486 = vmatpush.bf16.msra.mxu0 %v467
      %487 = vmatpush.bf16.msra.mxu0 %v466
      %488 = vmatpush.bf16.msra.mxu0 %v465
      %489 = vmatmul.bf16.gmra.mxu0 %v266
      %v490 = vpop.f32.mrf.mxu0
      %v491 = vadd.f32 0.0, %v490
      %v492 = vpop.f32.mrf.mxu0
      %v493 = vadd.f32 0.0, %v492
      %494 = vdwg.mxu0
      %vm497 = vcmask 1045504
      %v498 = vrot.slane %v491, 2
      %v499 = vrot.slane %v493, 2
      %v500 = vsel %vm497, %v498, %v499
      %v502 = vadd.f32 %v415, %v500
      %v503 = vld [vmem:[%s2] sm:$0x1]
      %v505 = vperm.slane %v503, 0
      %v507 = vadd.f32 %v502, %v505
      %v508 = vlaneseq
      %v509 = vshrl.u32 %v508, 7
      %v510 = vstv %s239
      %v511 = vadd.s32 %v510, %v509
      %vm512 = vcmp.lt.s32.totalorder %v511, 12
      %s513 = ssub.s32 12, %s239
      %p514 = scmp.lt.s32.totalorder %s513, 8
      %s515 = scalar_select %p514, %s513, 8
      %s516 = scvt.s32.f32 %s515
      %v517 = vsel %vm512, 1, 0
      %vm518 = vcmp.eq.s32.totalorder %v517, 1
      %v519 = vsel %vm518, %v507, 0.0
      %v520 = vrot.slane %v519, 4
      %v521 = vadd.f32 %v519, %v520
      %v522 = vrot.slane %v521, 2
      %v523 = vadd.f32 %v521, %v522
      %v524 = vrot.slane %v523, 1
      %v525 = vadd.f32 %v523, %v524
      %v526 = vstv %s516
      %v527 = vrcp.pop %v526
      %v528 = vmul.f32 %v526, %v527
      %v529 = vsub.f32 1.0, %v528
      %v530 = vmul.f32 %v527, %v529
      %v531 = vadd.f32 %v527, %v530
      %vm532 = vweird.f32 %v526
      %vm533 = vweird.f32 %v527
      %vm534 = vmor %vm532, %vm533
      %v535 = vsel %vm534, %v527, %v531
      %v536 = vand.u32 2147483647, %v526
      %vm537 = vcmp.eq.f32.partialorder %v536, 8.507059e+37
      %v538 = vand.u32 %v526, 2147483648
      %v539 = vor.u32 1.1754944e-38, %v538
      %v540 = vsel %vm537, %v539, %v535
      %v541 = vmul.f32 %v525, %v540
      %v542 = vsub.f32 %v519, %v541
      %v543 = vsel %vm518, %v542, 0.0
      %v544 = vmul.f32 %v543, %v543
      %v545 = vrot.slane %v544, 4
      %v546 = vadd.f32 %v544, %v545
      %v547 = vrot.slane %v546, 2
      %v548 = vadd.f32 %v546, %v547
      %v549 = vrot.slane %v548, 1
      %v550 = vadd.f32 %v548, %v549
      %551 = vst [vmem:[%s236] sm:$0x1] %v525
      %552 = vst [vmem:[%s236 + $0x1] sm:$0x1] %v550
      %v553 = vpack.c.bf16 %v507, %v507
      %554 = vst [vmem:[%s230] sm:$0xf] %v553
      %p555 = scmp.lt.s32.totalorder %s20, 1
      %s556 = scalar_select %p555, %s20, 1
      %p557 = scmp.lt.s32.totalorder %s21, 1
      %s558 = scalar_select %p557, %s21, 1
      %s559 = smul.addr %s556, 2
      %s560 = sadd.s32 %s558, %s559
      %s561 = smul.addr %s560, 4
      %s562 = scalar_lea.vmem %s3, %s561
      %s563 = smul.u32 %s20, 2
      %s564 = sadd.s32 %s563, %s21
      %p565 = scmp.lt.s32.totalorder %s564, 3
      %s566 = scalar_select %p565, %s564, 3
      %s567 = smul.addr %s566, 8
      %s568 = scalar_lea.vmem %s4, %s567
      // Predicated region
      $region33: #{conv_encoder3_res_bn_forward.18} parent=31 // pred_check
        %p569 = pneg %p116
      $region34: #{conv_encoder3_res_bn_forward.18} parent=31 // pred_check_branch
        %571 = sbr.rel (%p569) target = $region36
      $region35: #{conv_encoder3_res_bn_forward.18} parent=31 // pred_region
        _
      $region36: #{conv_encoder3_res_bn_forward.18} parent=31 // pred_fallthru
        _
      // Predicated region
      $region37: #{conv_encoder3_res_bn_forward.18} parent=31 // pred_check
        %p572 = pneg %p146
      $region38: #{conv_encoder3_res_bn_forward.18} parent=31 // pred_check_branch
        %574 = sbr.rel (%p572) target = $region40
      $region39: #{conv_encoder3_res_bn_forward.18} parent=31 // pred_region
        %s575 = smul.u32 %s20, 2
        %s576 = sadd.s32 %s575, %s21
      $region40: #{conv_encoder3_res_bn_forward.18} parent=31 // pred_fallthru
        _
    $region32: #{conv_encoder3_res_bn_forward.18} parent=5 // pred_fallthru
      _
    %p577 = scmp.le.s32.totalorder 2, %s11
    // Predicated region
    $region41: #{conv_encoder3_res_bn_forward.18} parent=5 // pred_check
      %p578 = pneg %p577
    $region42: #{conv_encoder3_res_bn_forward.18} parent=5 // pred_check_branch
      %580 = sbr.rel (%p578) target = $region44
    $region43: #{conv_encoder3_res_bn_forward.18} parent=5 // pred_region
      %s581 = ssub.s32 %s11, 2
      // Predicated region
      $region45: #{conv_encoder3_res_bn_forward.18} parent=43 // pred_check
        %p582 = pneg %p122
      $region46: #{conv_encoder3_res_bn_forward.18} parent=43 // pred_check_branch
        %584 = sbr.rel (%p582) target = $region48
      $region47: #{conv_encoder3_res_bn_forward.18} parent=43 // pred_region
        %p585 = scmp.lt.s32.totalorder %s22, 1
        %s586 = scalar_select %p585, %s22, 1
        %p587 = scmp.lt.s32.totalorder %s23, 1
        %s588 = scalar_select %p587, %s23, 1
        %s589 = smul.addr %s586, 2
        %s590 = sadd.s32 %s588, %s589
        %s591 = smul.addr %s590, 4
        %s592 = scalar_lea.vmem %s3, %s591
      $region48: #{conv_encoder3_res_bn_forward.18} parent=43 // pred_fallthru
        _
      // Predicated region
      $region49: #{conv_encoder3_res_bn_forward.18} parent=43 // pred_check
        %p593 = pneg %p152
      $region50: #{conv_encoder3_res_bn_forward.18} parent=43 // pred_check_branch
        %595 = sbr.rel (%p593) target = $region52
      $region51: #{conv_encoder3_res_bn_forward.18} parent=43 // pred_region
        %s596 = smul.u32 %s22, 2
        %s597 = sadd.s32 %s596, %s23
        %p598 = scmp.lt.s32.totalorder %s597, 3
        %s599 = scalar_select %p598, %s597, 3
        %s600 = smul.addr %s599, 8
        %s601 = scalar_lea.vmem %s4, %s600
      $region52: #{conv_encoder3_res_bn_forward.18} parent=43 // pred_fallthru
        _
    $region44: #{conv_encoder3_res_bn_forward.18} parent=5 // pred_fallthru
      _
  $region6: #{conv_encoder3_res_bn_forward.18} parent=0 // loop_footer
    %s15 = sadd.s32 1, %s11
  $region7: #{conv_encoder3_res_bn_forward.18} parent=0 // loop_footer_branch
    %10 = sbr.rel target = $region3
  $region8: #{conv_encoder3_res_bn_forward.18} parent=0 // loop_exit
    _

</llo_original>
